<compile_context>
chip_gen: v6e
topology: v6e:2x2x1
jax: 0.10.0
libtpu: 0.0.40
codegen_flags: <defaults>
</compile_context>

<pallas_src>
import functools

import jax
import jax.numpy as jnp
from jax.experimental import pallas as pl
from jax.experimental.pallas import tpu as pltpu

EPS = 1e-6
COMPUTE_DTYPE = jnp.bfloat16   # MXU operand dtype (accumulation is fp32)


# ------------------------------ small helpers ---------------------------------

def _pick_tile(n, target):
    """Largest divisor of n that is <= target."""
    t = max(1, min(n, target))
    while n % t:
        t -= 1
    return t


def _pick_row_tile(n, target):
    """Largest divisor of n <= target that is a multiple of 8, else full n."""
    if n <= target:
        return n
    t = (min(n, target) // 8) * 8
    while t >= 8:
        if n % t == 0:
            return t
        t -= 8
    return n


def _pick_ch_chunk(ch, target=512):
    """Channel-MLP hidden chunk: lane-aligned divisor of ch (<= target)."""
    for c in (target, 256, 128):
        if ch % c == 0:
            return c
    return ch


def _vmem_limit_bytes(frac=0.75, default=48 * 1024 * 1024):
    """Generation-aware VMEM limit (v5e/v6e: 128 MiB, v7x: 64 MiB physical)."""
    try:
        info = pltpu.get_tpu_info()
        cap = getattr(info, "vmem_capacity_bytes", None)
        if cap:
            return int(cap * frac)
    except Exception:
        pass
    return default


def _mixer_vmem_estimate(bt, S, D, ch, tok, ch_chunk):
    """Rough VMEM bytes needed by the fused mixer kernel for a batch tile."""
    f32, bf16 = 4, 2
    # per-block params, double-buffered by the pipeline
    w = (tok * S + S * tok + D * ch + ch * D) * bf16
    w += (4 * D + tok + S + ch + D) * f32
    # x input block + output (residual) block, each double-buffered, fp32
    act = 2 * 2 * bt * S * D * f32
    # in-flight per-sample intermediates (upper bound)
    tmp = (S * D * 3 + S * max(tok, ch_chunk) * 2) * f32
    return 2 * w + act + tmp


# ----------------------------- in-kernel helpers -------------------------------

def _layernorm(x, gamma, beta):
    # x: (..., D) fp32, gamma/beta: (1, D) fp32 (broadcast over leading dims)
    mu = jnp.mean(x, axis=-1, keepdims=True)
    var = jnp.mean(jnp.square(x - mu), axis=-1, keepdims=True)
    return (x - mu) * jax.lax.rsqrt(var + EPS) * gamma + beta


def _gelu(x):
    # tanh-approximate GELU: routes through the EUP slot (free under MXU work).
    # The pure-JAX reference keeps the exact erf form; the difference is far
    # below the bf16 matmul noise at these activation magnitudes.
    return jax.nn.gelu(x, approximate=True)


# ---------------------------------- kernels ------------------------------------

def patch_embed_kernel(xp_ref, w_ref, b_ref, o_ref):
    # xp: (rows_tile, C*p*p) bf16, w: (C*p*p, D) bf16, b: (1, D) f32
    acc = jnp.dot(xp_ref[...], w_ref[...], preferred_element_type=jnp.float32)
    o_ref[...] = (acc + b_ref[...]).astype(o_ref.dtype)


def fused_mixer_kernel(x_ref,
                       g1_ref, b1_ref, wt1_ref, bt1_ref, wt2_ref, bt2_ref,
                       g2_ref, b2_ref, wc1_ref, bc1_ref, wc2_ref, bc2_ref,
                       o_ref, *, ch_chunk):
    """One grid step = (one batch tile, one mixer block).

    The fp32 residual stream lives in o_ref, which is VMEM-resident across the
    depth axis (constant output block index) and only written back to HBM when
    the batch tile changes."""
    d = pl.program_id(1)
    bt, seq, dim = o_ref.shape
    ch = wc1_ref.shape[-1]
    n_ch = ch // ch_chunk

    # Load the batch tile into the residual stream once per batch tile.
    @pl.when(d == 0)
    def _():
        o_ref[...] = x_ref[...]

    # Ref views of the big channel-MLP weights (sliced per hidden-dim chunk
    # inside the loop -- never loaded whole).
    wc1_v = wc1_ref.at[0]          # (D, ch)   bf16
    wc2_v = wc2_ref.at[0]          # (ch, D)   bf16
    bc1_v = bc1_ref.at[0]          # (1, ch)   f32

    def block_body(b, carry):
        xb = o_ref[b]                                              # (S, D) f32

        # ---- token mixing:  x = x + mlp_tokens(norm1(x)^T)^T ----------------
        # Weights are stored (out, in): both matmuls are standard 2D MXU calls,
        # no transposes or relayout-inducing reshapes in-kernel.
        y = _layernorm(xb, g1_ref[0], b1_ref[0]).astype(COMPUTE_DTYPE)
        h = jnp.dot(wt1_ref[0], y,
                    preferred_element_type=jnp.float32)            # (tok, D)
        h = _gelu(h + bt1_ref[0])
        xb = xb + jnp.dot(wt2_ref[0], h.astype(COMPUTE_DTYPE),
                          preferred_element_type=jnp.float32) + bt2_ref[0]

        # ---- channel mixing:  x = x + mlp_channels(norm2(x)) ----------------
        # Hidden dim chunked so the fp32 intermediate is bounded to (S, chunk).
        z = _layernorm(xb, g2_ref[0], b2_ref[0]).astype(COMPUTE_DTYPE)

        def ch_body(k, acc):
            k0 = pl.multiple_of(k * ch_chunk, ch_chunk)
            w1 = wc1_v[:, pl.ds(k0, ch_chunk)]                     # (D, chk)
            w2 = wc2_v[pl.ds(k0, ch_chunk), :]                     # (chk, D)
            bb = bc1_v[:, pl.ds(k0, ch_chunk)]                     # (1, chk)
            c = _gelu(jnp.dot(z, w1, preferred_element_type=jnp.float32) + bb)
            return acc + jnp.dot(c.astype(COMPUTE_DTYPE), w2,
                                 preferred_element_type=jnp.float32)

        acc = jax.lax.fori_loop(0, n_ch, ch_body,
                                jnp.zeros((seq, dim), jnp.float32))
        o_ref[b] = xb + acc + bc2_ref[0]
        return carry

    jax.lax.fori_loop(0, bt, block_body, 0, unroll=True)


def norm_mean_kernel(x_ref, g_ref, b_ref, o_ref):
    # x block: (rb, S, D) -> out block: (rb, D)
    x = x_ref[...].astype(jnp.float32)
    y = _layernorm(x, g_ref[...], b_ref[...])
    o_ref[...] = jnp.mean(y, axis=1).astype(o_ref.dtype)


# ---------------------------------- wrappers ------------------------------------

def patch_embed(x_nchw, w_conv, b_conv, patch, *, row_tile=1024):
    """Conv2d(C, D, k=patch, stride=patch) + flatten(2).transpose(1,2),
    expressed as host-side patch extraction + a row-tiled Pallas matmul."""
    B, C, H, W = x_nchw.shape
    D = w_conv.shape[0]
    Hp, Wp = H // patch, W // patch
    S = Hp * Wp
    P = C * patch * patch

    # Extract patches, flattened in (c, kh, kw) order to match conv weights.
    xp = x_nchw.reshape(B, C, Hp, patch, Wp, patch)
    xp = xp.transpose(0, 2, 4, 1, 3, 5).reshape(B * S, P).astype(COMPUTE_DTYPE)
    w = w_conv.reshape(D, P).T.astype(COMPUTE_DTYPE)            # (P, D)
    b = b_conv.reshape(1, D).astype(jnp.float32)

    rows = B * S
    rt = _pick_row_tile(rows, row_tile)    # multiple of 8 (or full rows)

    out = pl.pallas_call(
        patch_embed_kernel,
        out_shape=jax.ShapeDtypeStruct((rows, D), jnp.float32),
        grid=(rows // rt,),
        in_specs=[
            pl.BlockSpec((rt, P), lambda i: (i, 0)),
            pl.BlockSpec((P, D), lambda i: (0, 0)),    # weight stays resident
            pl.BlockSpec((1, D), lambda i: (0, 0)),
        ],
        out_specs=pl.BlockSpec((rt, D), lambda i: (i, 0)),
        compiler_params=pltpu.CompilerParams(
            dimension_semantics=("parallel",)),
    )(xp, w, b)
    return out.reshape(B, S, D)


_BLOCK_PARAM_ORDER = ("g1", "b1", "wt1", "bt1", "wt2", "bt2",
                      "g2", "b2", "wc1", "bc1", "wc2", "bc2")


def mixer_blocks(x, bp, *, batch_tile=None):
    """All depth blocks in a single pallas_call; grid = (batch_tiles, depth)."""
    B, S, D = x.shape
    depth, tok = bp["wt1"].shape[0], bp["wt1"].shape[1]
    ch = bp["wc1"].shape[2]
    ch_chunk = _pick_ch_chunk(ch)
    vmem_limit = _vmem_limit_bytes()

    # Batch tile: amortizes per-block weight streaming.  Default keeps
    # nb = B / bt >= 2 so the "parallel" batch axis can shard across v7x's
    # two TensorCores; shrink if the rough VMEM budget is exceeded.
    if batch_tile is None:
        target = max(1, min(8, B // 2))
    else:
        target = max(1, min(batch_tile, B))
    bt = _pick_tile(B, target)
    while bt > 1 and _mixer_vmem_estimate(bt, S, D, ch, tok, ch_chunk) > int(
            0.8 * vmem_limit):
        bt = _pick_tile(B, bt - 1)
    nb = B // bt

    weights = [bp[k] for k in _BLOCK_PARAM_ORDER]

    in_specs = [pl.BlockSpec((bt, S, D), lambda i, d: (i, 0, 0))]
    in_specs += [
        pl.BlockSpec((1,) + w.shape[1:], lambda i, d: (d, 0, 0))
        for w in weights
    ]
    # TODO(synk): on v5e, pipeline_mode=pl.Buffered(3) on the wc1/wc2 specs can
    # further hide the per-block weight DMA if it is still exposed.

    kernel = functools.partial(fused_mixer_kernel, ch_chunk=ch_chunk)

    return pl.pallas_call(
        kernel,
        out_shape=jax.ShapeDtypeStruct((B, S, D), x.dtype),
        grid=(nb, depth),
        in_specs=in_specs,
        out_specs=pl.BlockSpec((bt, S, D), lambda i, d: (i, 0, 0)),
        input_output_aliases={0: 0},       # residual stream updates x in place
        compiler_params=pltpu.CompilerParams(
            dimension_semantics=("parallel", "arbitrary"),
            vmem_limit_bytes=vmem_limit),
    )(x, *weights)


def final_norm_mean(x, gamma, beta, *, row_tile=8):
    B, S, D = x.shape
    rb = _pick_row_tile(B, row_tile)
    g = gamma.reshape(1, D).astype(jnp.float32)
    b = beta.reshape(1, D).astype(jnp.float32)
    return pl.pallas_call(
        norm_mean_kernel,
        out_shape=jax.ShapeDtypeStruct((B, D), jnp.float32),
        grid=(B // rb,),
        in_specs=[
            pl.BlockSpec((rb, S, D), lambda i: (i, 0, 0)),
            pl.BlockSpec((1, D), lambda i: (0, 0)),
            pl.BlockSpec((1, D), lambda i: (0, 0)),
        ],
        out_specs=pl.BlockSpec((rb, D), lambda i: (i, 0)),
        compiler_params=pltpu.CompilerParams(
            dimension_semantics=("parallel",)),
    )(x, g, b)


# ------------------------------ model definition --------------------------------

def init_params(key, *, in_chans, dim, patch, depth, tokens_dim, channels_dim,
                seq_len):
    """Deterministic synthetic parameters (same structure as mixer_b16_224 at
    reduced sizes).  Matmul weights are bf16, stacked along a leading depth
    axis.  Token-mixing weights keep PyTorch's (out, in) layout; channel
    weights are stored pre-transposed (in, out)."""
    k = jax.random.split(key, 5)
    scale = 0.02
    f32, cdt = jnp.float32, COMPUTE_DTYPE

    params = {
        "stem_w": scale * jax.random.normal(
            k[0], (dim, in_chans, patch, patch), f32),
        "stem_b": jnp.zeros((dim,), f32),
        "norm_g": jnp.ones((dim,), f32),
        "norm_b": jnp.zeros((dim,), f32),
    }
    params["blocks"] = {
        "g1": jnp.ones((depth, 1, dim), f32),
        "b1": jnp.zeros((depth, 1, dim), f32),
        "wt1": (scale * jax.random.normal(
            k[1], (depth, tokens_dim, seq_len), f32)).astype(cdt),   # (out,in)
        "bt1": jnp.zeros((depth, tokens_dim, 1), f32),
        "wt2": (scale * jax.random.normal(
            k[2], (depth, seq_len, tokens_dim), f32)).astype(cdt),   # (out,in)
        "bt2": jnp.zeros((depth, seq_len, 1), f32),
        "g2": jnp.ones((depth, 1, dim), f32),
        "b2": jnp.zeros((depth, 1, dim), f32),
        "wc1": (scale * jax.random.normal(
            k[3], (depth, dim, channels_dim), f32)).astype(cdt),     # (in,out)
        "bc1": jnp.zeros((depth, 1, channels_dim), f32),
        "wc2": (scale * jax.random.normal(
            k[4], (depth, channels_dim, dim), f32)).astype(cdt),     # (in,out)
        "bc2": jnp.zeros((depth, 1, dim), f32),
    }
    return params


def mymlp_mixer_forward(x_nchw, params, *, patch, batch_tile=None):
    """Equivalent of Mymlp_mixer.forward (== forward_features):
       stem -> blocks -> norm -> mean over tokens."""
    x = patch_embed(x_nchw, params["stem_w"], params["stem_b"], patch)
    x = mixer_blocks(x, params["blocks"], batch_tile=batch_tile)
    x = final_norm_mean(x, params["norm_g"], params["norm_b"])
    return x


# --------------------------- pure-JAX reference (check) --------------------------

def reference_forward(x_nchw, params, *, patch):
    B, C, H, W = x_nchw.shape
    D = params["stem_w"].shape[0]
    Hp, Wp = H // patch, W // patch
    S = Hp * Wp
    xp = x_nchw.reshape(B, C, Hp, patch, Wp, patch)
    xp = xp.transpose(0, 2, 4, 1, 3, 5).reshape(B * S, C * patch * patch)
    w = params["stem_w"].reshape(D, -1).T
    x = (xp @ w + params["stem_b"][None, :]).reshape(B, S, D)

    def ln(v, g, b):
        mu = v.mean(-1, keepdims=True)
        var = ((v - mu) ** 2).mean(-1, keepdims=True)
        return (v - mu) / jnp.sqrt(var + EPS) * g + b

    bp = params["blocks"]
    depth = bp["wt1"].shape[0]
    for i in range(depth):
        g1, be1 = bp["g1"][i], bp["b1"][i]
        g2, be2 = bp["g2"][i], bp["b2"][i]
        wt1 = bp["wt1"][i].astype(jnp.float32)        # (tok, S)
        wt2 = bp["wt2"][i].astype(jnp.float32)        # (S, tok)
        bt1 = bp["bt1"][i][:, 0]                      # (tok,)
        bt2 = bp["bt2"][i][:, 0]                      # (S,)
        wc1 = bp["wc1"][i].astype(jnp.float32)        # (D, ch)
        wc2 = bp["wc2"][i].astype(jnp.float32)        # (ch, D)
        bc1, bc2 = bp["bc1"][i], bp["bc2"][i]

        y = ln(x, g1, be1)
        h = jnp.einsum("bsd,ts->btd", y, wt1) + bt1[None, :, None]
        h = jax.nn.gelu(h, approximate=False)          # exact erf (PyTorch)
        x = x + jnp.einsum("btd,st->bsd", h, wt2) + bt2[None, :, None]

        z = ln(x, g2, be2)
        c = jax.nn.gelu(z @ wc1 + bc1, approximate=False) @ wc2 + bc2
        x = x + c

    x = ln(x, params["norm_g"], params["norm_b"])
    return x.mean(axis=1)


# -------------------------------------- main -------------------------------------

if __name__ == "__main__":
    # Small shapes consistent with the module's structure (mixer_b16_224 is
    # 224x224 / patch16 / dim768 / depth12; shrunk here but lane-friendly).
    B, C, H, W = 4, 3, 32, 32
    PATCH = 8
    DIM = 128
    DEPTH = 2
    TOKENS_DIM = 64        # 0.5 * dim  (token-mixing hidden)
    CHANNELS_DIM = 256     # 2.0 * dim  (channel-mixing hidden)
    SEQ = (H // PATCH) * (W // PATCH)   # 16 tokens

    key = jax.random.PRNGKey(0)
    kx, kp = jax.random.split(key)
    x = jax.random.normal(kx, (B, C, H, W), jnp.float32)

    params = init_params(kp, in_chans=C, dim=DIM, patch=PATCH, depth=DEPTH,
                         tokens_dim=TOKENS_DIM, channels_dim=CHANNELS_DIM,
                         seq_len=SEQ)

    fwd = jax.jit(functools.partial(mymlp_mixer_forward, patch=PATCH))
    out = fwd(x, params)
    out = jax.block_until_ready(out)
    assert out.shape == (B, DIM), out.shape

    # Numerical sanity check against a pure-JAX fp32 reference (loose tolerance:
    # kernel uses bf16 matmul operands and tanh-approximate GELU).
    ref = reference_forward(x, params, patch=PATCH)
    max_err = float(jnp.max(jnp.abs(out - ref)))
    assert max_err < 1e-1, f"numerical mismatch vs reference: {max_err}"

    print("KERNEL_OK")
</pallas_src>

<mosaic_0001>
module attributes {stable_mosaic.version = 11 : i64} {
  func.func @patch_embed_kernel(%arg0: i32, %arg1: memref<64x192xbf16, #tpu.memory_space<vmem>>, %arg2: memref<192x128xbf16, #tpu.memory_space<vmem>>, %arg3: memref<1x128xf32, #tpu.memory_space<vmem>>, %arg4: memref<64x128xf32, #tpu.memory_space<vmem>>) attributes {dimension_semantics = [#tpu.dimension_semantics<parallel>], iteration_bounds = array<i64: 1>, scalar_prefetch = 0 : i64, scratch_operands = 0 : i64, tpu.core_type = #tpu.core_type<tc>, window_params = [{transform_indices = @transform_0, window_bounds = array<i64: 64, 192>}, {pipeline_mode = #tpu.pipeline_mode<synchronous>, transform_indices = @transform_1, window_bounds = array<i64: 192, 128>}, {pipeline_mode = #tpu.pipeline_mode<synchronous>, transform_indices = @transform_2, window_bounds = array<i64: 1, 128>}, {transform_indices = @transform_3, window_bounds = array<i64: 64, 128>}]} {
    %c0 = arith.constant 0 : index
    %c0_0 = arith.constant 0 : index
    %0 = vector.load %arg1[%c0, %c0_0] : memref<64x192xbf16, #tpu.memory_space<vmem>>, vector<64x192xbf16>
    %c0_1 = arith.constant 0 : index
    %c0_2 = arith.constant 0 : index
    %1 = vector.load %arg2[%c0_1, %c0_2] : memref<192x128xbf16, #tpu.memory_space<vmem>>, vector<192x128xbf16>
    %cst = arith.constant dense<0.000000e+00> : vector<64x128xf32>
    %2 = tpu.matmul %0, %1, %cst {dimension_numbers = #tpu.dot_dimension_numbers<[1], [0], [0], [1], [0, 0, 1, 1], [], []>} : vector<64x192xbf16>, vector<192x128xbf16>, vector<64x128xf32> -> vector<64x128xf32>
    %c0_3 = arith.constant 0 : index
    %c0_4 = arith.constant 0 : index
    %3 = vector.load %arg3[%c0_3, %c0_4] : memref<1x128xf32, #tpu.memory_space<vmem>>, vector<1x128xf32>
    %4 = vector.broadcast %3 : vector<1x128xf32> to vector<64x128xf32>
    %5 = arith.addf %2, %4 : vector<64x128xf32>
    %c0_5 = arith.constant 0 : index
    %c0_6 = arith.constant 0 : index
    %6 = vector.load %arg4[%c0_5, %c0_6] : memref<64x128xf32, #tpu.memory_space<vmem>>, vector<64x128xf32>
    tpu.vector_store %arg4[%c0_5, %c0_6], %5 {strides = array<i32>} : memref<64x128xf32, #tpu.memory_space<vmem>>, vector<64x128xf32>,
    return
  }
  func.func @transform_0(%arg0: i32) -> (i32, i32) {
    %c0_i32 = arith.constant 0 : i32
    %c0_i32_0 = arith.constant 0 : i32
    return %arg0, %c0_i32 : i32, i32
  }
  func.func @transform_1(%arg0: i32) -> (i32, i32) {
    %c0_i32 = arith.constant 0 : i32
    %c0_i32_0 = arith.constant 0 : i32
    %c0_i32_1 = arith.constant 0 : i32
    return %c0_i32, %c0_i32_0 : i32, i32
  }
  func.func @transform_2(%arg0: i32) -> (i32, i32) {
    %c0_i32 = arith.constant 0 : i32
    %c0_i32_0 = arith.constant 0 : i32
    %c0_i32_1 = arith.constant 0 : i32
    return %c0_i32, %c0_i32_0 : i32, i32
  }
  func.func @transform_3(%arg0: i32) -> (i32, i32) {
    %c0_i32 = arith.constant 0 : i32
    %c0_i32_0 = arith.constant 0 : i32
    return %arg0, %c0_i32 : i32, i32
  }
}

module attributes {stable_mosaic.version = 11 : i64} {
  func.func @fused_mixer_kernel(%arg0: i32, %arg1: i32, %arg2: memref<2x16x128xf32, #tpu.memory_space<vmem>>, %arg3: memref<1x1x128xf32, #tpu.memory_space<vmem>>, %arg4: memref<1x1x128xf32, #tpu.memory_space<vmem>>, %arg5: memref<1x64x16xbf16, #tpu.memory_space<vmem>>, %arg6: memref<1x64x1xf32, #tpu.memory_space<vmem>>, %arg7: memref<1x16x64xbf16, #tpu.memory_space<vmem>>, %arg8: memref<1x16x1xf32, #tpu.memory_space<vmem>>, %arg9: memref<1x1x128xf32, #tpu.memory_space<vmem>>, %arg10: memref<1x1x128xf32, #tpu.memory_space<vmem>>, %arg11: memref<1x128x256xbf16, #tpu.memory_space<vmem>>, %arg12: memref<1x1x256xf32, #tpu.memory_space<vmem>>, %arg13: memref<1x256x128xbf16, #tpu.memory_space<vmem>>, %arg14: memref<1x1x128xf32, #tpu.memory_space<vmem>>, %arg15: memref<2x16x128xf32, #tpu.memory_space<vmem>>) attributes {dimension_semantics = [#tpu.dimension_semantics<parallel>, #tpu.dimension_semantics<arbitrary>], iteration_bounds = array<i64: 2, 2>, scalar_prefetch = 0 : i64, scratch_operands = 0 : i64, tpu.core_type = #tpu.core_type<tc>, window_params = [{transform_indices = @transform_0, window_bounds = array<i64: 2, 16, 128>}, {transform_indices = @transform_1, window_bounds = array<i64: 1, 1, 128>}, {transform_indices = @transform_2, window_bounds = array<i64: 1, 1, 128>}, {transform_indices = @transform_3, window_bounds = array<i64: 1, 64, 16>}, {transform_indices = @transform_4, window_bounds = array<i64: 1, 64, 1>}, {transform_indices = @transform_5, window_bounds = array<i64: 1, 16, 64>}, {transform_indices = @transform_6, window_bounds = array<i64: 1, 16, 1>}, {transform_indices = @transform_7, window_bounds = array<i64: 1, 1, 128>}, {transform_indices = @transform_8, window_bounds = array<i64: 1, 1, 128>}, {transform_indices = @transform_9, window_bounds = array<i64: 1, 128, 256>}, {transform_indices = @transform_10, window_bounds = array<i64: 1, 1, 256>}, {transform_indices = @transform_11, window_bounds = array<i64: 1, 256, 128>}, {transform_indices = @transform_12, window_bounds = array<i64: 1, 1, 128>}, {transform_indices = @transform_13, window_bounds = array<i64: 2, 16, 128>}]} {
    %c0_i32 = arith.constant 0 : i32
    %0 = arith.cmpi eq, %arg1, %c0_i32 : i32
    %1 = arith.extui %0 : i1 to i32
    %c0_i32_0 = arith.constant 0 : i32
    %2 = arith.cmpi ne, %1, %c0_i32_0 : i32
    scf.if %2 {
      %c0_134 = arith.constant 0 : index
      %c0_135 = arith.constant 0 : index
      %c0_136 = arith.constant 0 : index
      %261 = vector.load %arg2[%c0_134, %c0_135, %c0_136] : memref<2x16x128xf32, #tpu.memory_space<vmem>>, vector<2x16x128xf32>
      %c0_137 = arith.constant 0 : index
      %c0_138 = arith.constant 0 : index
      %c0_139 = arith.constant 0 : index
      %262 = vector.load %arg15[%c0_137, %c0_138, %c0_139] : memref<2x16x128xf32, #tpu.memory_space<vmem>>, vector<2x16x128xf32>
      tpu.vector_store %arg15[%c0_137, %c0_138, %c0_139], %261 {strides = array<i32>} : memref<2x16x128xf32, #tpu.memory_space<vmem>>, vector<2x16x128xf32>,
    } else {
    }
    %c0_i32_1 = arith.constant 0 : i32
    %c0_i32_2 = arith.constant 0 : i32
    %c0_i32_3 = arith.constant 0 : i32
    %c0_i32_4 = arith.constant 0 : i32
    %3 = arith.index_cast %c0_i32_4 : i32 to index
    %c0 = arith.constant 0 : index
    %c0_5 = arith.constant 0 : index
    %4 = vector.load %arg15[%3, %c0, %c0_5] : memref<2x16x128xf32, #tpu.memory_space<vmem>>, vector<1x16x128xf32>
    %5 = vector.shape_cast %4 : vector<1x16x128xf32> to vector<16x128xf32>
    %c0_6 = arith.constant 0 : index
    %c0_7 = arith.constant 0 : index
    %c0_8 = arith.constant 0 : index
    %6 = vector.load %arg3[%c0_6, %c0_7, %c0_8] : memref<1x1x128xf32, #tpu.memory_space<vmem>>, vector<1x1x128xf32>
    %7 = vector.shape_cast %6 : vector<1x1x128xf32> to vector<1x128xf32>
    %c0_9 = arith.constant 0 : index
    %c0_10 = arith.constant 0 : index
    %c0_11 = arith.constant 0 : index
    %8 = vector.load %arg4[%c0_9, %c0_10, %c0_11] : memref<1x1x128xf32, #tpu.memory_space<vmem>>, vector<1x1x128xf32>
    %9 = vector.shape_cast %8 : vector<1x1x128xf32> to vector<1x128xf32>
    %cst = arith.constant dense<0.000000e+00> : vector<16xf32>
    %10 = vector.multi_reduction <add>, %5, %cst [1] : vector<16x128xf32> to vector<16xf32>
    %11 = vector.shape_cast %10 : vector<16xf32> to vector<16x1xf32>
    %cst_12 = arith.constant 1.280000e+02 : f32
    %12 = vector.broadcast %cst_12 : f32 to vector<16x1xf32>
    %13 = arith.divf %11, %12 : vector<16x1xf32>
    %14 = vector.broadcast %13 : vector<16x1xf32> to vector<16x128xf32>
    %15 = arith.subf %5, %14 : vector<16x128xf32>
    %16 = arith.mulf %15, %15 : vector<16x128xf32>
    %cst_13 = arith.constant dense<0.000000e+00> : vector<16xf32>
    %17 = vector.multi_reduction <add>, %16, %cst_13 [1] : vector<16x128xf32> to vector<16xf32>
    %18 = vector.shape_cast %17 : vector<16xf32> to vector<16x1xf32>
    %cst_14 = arith.constant 1.280000e+02 : f32
    %19 = vector.broadcast %cst_14 : f32 to vector<16x1xf32>
    %20 = arith.divf %18, %19 : vector<16x1xf32>
    %21 = vector.broadcast %13 : vector<16x1xf32> to vector<16x128xf32>
    %22 = arith.subf %5, %21 : vector<16x128xf32>
    %cst_15 = arith.constant 9.99999997E-7 : f32
    %23 = vector.broadcast %cst_15 : f32 to vector<16x1xf32>
    %24 = arith.addf %20, %23 : vector<16x1xf32>
    %25 = math.rsqrt %24 : vector<16x1xf32>
    %26 = vector.broadcast %25 : vector<16x1xf32> to vector<16x128xf32>
    %27 = arith.mulf %22, %26 : vector<16x128xf32>
    %28 = vector.broadcast %7 : vector<1x128xf32> to vector<16x128xf32>
    %29 = arith.mulf %27, %28 : vector<16x128xf32>
    %30 = vector.broadcast %9 : vector<1x128xf32> to vector<16x128xf32>
    %31 = arith.addf %29, %30 : vector<16x128xf32>
    %32 = arith.truncf %31 : vector<16x128xf32> to vector<16x128xbf16>
    %c0_16 = arith.constant 0 : index
    %c0_17 = arith.constant 0 : index
    %c0_18 = arith.constant 0 : index
    %33 = vector.load %arg5[%c0_16, %c0_17, %c0_18] : memref<1x64x16xbf16, #tpu.memory_space<vmem>>, vector<1x64x16xbf16>
    %34 = vector.shape_cast %33 : vector<1x64x16xbf16> to vector<64x16xbf16>
    %cst_19 = arith.constant dense<0.000000e+00> : vector<64x128xf32>
    %35 = tpu.matmul %34, %32, %cst_19 {dimension_numbers = #tpu.dot_dimension_numbers<[1], [0], [0], [1], [0, 0, 1, 1], [], []>} : vector<64x16xbf16>, vector<16x128xbf16>, vector<64x128xf32> -> vector<64x128xf32>
    %c0_20 = arith.constant 0 : index
    %c0_21 = arith.constant 0 : index
    %c0_22 = arith.constant 0 : index
    %36 = vector.load %arg6[%c0_20, %c0_21, %c0_22] : memref<1x64x1xf32, #tpu.memory_space<vmem>>, vector<1x64x1xf32>
    %37 = vector.shape_cast %36 : vector<1x64x1xf32> to vector<64x1xf32>
    %38 = vector.broadcast %37 : vector<64x1xf32> to vector<64x128xf32>
    %39 = arith.addf %35, %38 : vector<64x128xf32>
    %40 = arith.mulf %39, %39 : vector<64x128xf32>
    %41 = arith.mulf %39, %40 : vector<64x128xf32>
    %cst_23 = arith.constant 4.471500e-02 : f32
    %42 = vector.broadcast %cst_23 : f32 to vector<64x128xf32>
    %43 = arith.mulf %42, %41 : vector<64x128xf32>
    %44 = arith.addf %39, %43 : vector<64x128xf32>
    %cst_24 = arith.constant 0.797884583 : f32
    %45 = vector.broadcast %cst_24 : f32 to vector<64x128xf32>
    %46 = arith.mulf %45, %44 : vector<64x128xf32>
    %47 = math.tanh %46 : vector<64x128xf32>
    %cst_25 = arith.constant 1.000000e+00 : f32
    %48 = vector.broadcast %cst_25 : f32 to vector<64x128xf32>
    %49 = arith.addf %48, %47 : vector<64x128xf32>
    %cst_26 = arith.constant 5.000000e-01 : f32
    %50 = vector.broadcast %cst_26 : f32 to vector<64x128xf32>
    %51 = arith.mulf %50, %49 : vector<64x128xf32>
    %52 = arith.mulf %39, %51 : vector<64x128xf32>
    %c0_27 = arith.constant 0 : index
    %c0_28 = arith.constant 0 : index
    %c0_29 = arith.constant 0 : index
    %53 = vector.load %arg7[%c0_27, %c0_28, %c0_29] : memref<1x16x64xbf16, #tpu.memory_space<vmem>>, vector<1x16x64xbf16>
    %54 = vector.shape_cast %53 : vector<1x16x64xbf16> to vector<16x64xbf16>
    %55 = arith.truncf %52 : vector<64x128xf32> to vector<64x128xbf16>
    %cst_30 = arith.constant dense<0.000000e+00> : vector<16x128xf32>
    %56 = tpu.matmul %54, %55, %cst_30 {dimension_numbers = #tpu.dot_dimension_numbers<[1], [0], [0], [1], [0, 0, 1, 1], [], []>} : vector<16x64xbf16>, vector<64x128xbf16>, vector<16x128xf32> -> vector<16x128xf32>
    %57 = arith.addf %5, %56 : vector<16x128xf32>
    %c0_31 = arith.constant 0 : index
    %c0_32 = arith.constant 0 : index
    %c0_33 = arith.constant 0 : index
    %58 = vector.load %arg8[%c0_31, %c0_32, %c0_33] : memref<1x16x1xf32, #tpu.memory_space<vmem>>, vector<1x16x1xf32>
    %59 = vector.shape_cast %58 : vector<1x16x1xf32> to vector<16x1xf32>
    %60 = vector.broadcast %59 : vector<16x1xf32> to vector<16x128xf32>
    %61 = arith.addf %57, %60 : vector<16x128xf32>
    %c0_34 = arith.constant 0 : index
    %c0_35 = arith.constant 0 : index
    %c0_36 = arith.constant 0 : index
    %62 = vector.load %arg9[%c0_34, %c0_35, %c0_36] : memref<1x1x128xf32, #tpu.memory_space<vmem>>, vector<1x1x128xf32>
    %63 = vector.shape_cast %62 : vector<1x1x128xf32> to vector<1x128xf32>
    %c0_37 = arith.constant 0 : index
    %c0_38 = arith.constant 0 : index
    %c0_39 = arith.constant 0 : index
    %64 = vector.load %arg10[%c0_37, %c0_38, %c0_39] : memref<1x1x128xf32, #tpu.memory_space<vmem>>, vector<1x1x128xf32>
    %65 = vector.shape_cast %64 : vector<1x1x128xf32> to vector<1x128xf32>
    %cst_40 = arith.constant dense<0.000000e+00> : vector<16xf32>
    %66 = vector.multi_reduction <add>, %61, %cst_40 [1] : vector<16x128xf32> to vector<16xf32>
    %67 = vector.shape_cast %66 : vector<16xf32> to vector<16x1xf32>
    %cst_41 = arith.constant 1.280000e+02 : f32
    %68 = vector.broadcast %cst_41 : f32 to vector<16x1xf32>
    %69 = arith.divf %67, %68 : vector<16x1xf32>
    %70 = vector.broadcast %69 : vector<16x1xf32> to vector<16x128xf32>
    %71 = arith.subf %61, %70 : vector<16x128xf32>
    %72 = arith.mulf %71, %71 : vector<16x128xf32>
    %cst_42 = arith.constant dense<0.000000e+00> : vector<16xf32>
    %73 = vector.multi_reduction <add>, %72, %cst_42 [1] : vector<16x128xf32> to vector<16xf32>
    %74 = vector.shape_cast %73 : vector<16xf32> to vector<16x1xf32>
    %cst_43 = arith.constant 1.280000e+02 : f32
    %75 = vector.broadcast %cst_43 : f32 to vector<16x1xf32>
    %76 = arith.divf %74, %75 : vector<16x1xf32>
    %77 = vector.broadcast %69 : vector<16x1xf32> to vector<16x128xf32>
    %78 = arith.subf %61, %77 : vector<16x128xf32>
    %cst_44 = arith.constant 9.99999997E-7 : f32
    %79 = vector.broadcast %cst_44 : f32 to vector<16x1xf32>
    %80 = arith.addf %76, %79 : vector<16x1xf32>
    %81 = math.rsqrt %80 : vector<16x1xf32>
    %82 = vector.broadcast %81 : vector<16x1xf32> to vector<16x128xf32>
    %83 = arith.mulf %78, %82 : vector<16x128xf32>
    %84 = vector.broadcast %63 : vector<1x128xf32> to vector<16x128xf32>
    %85 = arith.mulf %83, %84 : vector<16x128xf32>
    %86 = vector.broadcast %65 : vector<1x128xf32> to vector<16x128xf32>
    %87 = arith.addf %85, %86 : vector<16x128xf32>
    %88 = arith.truncf %87 : vector<16x128xf32> to vector<16x128xbf16>
    %cst_45 = arith.constant 0.000000e+00 : f32
    %89 = vector.broadcast %cst_45 : f32 to vector<16x128xf32>
    %c0_i32_46 = arith.constant 0 : i32
    %c256_i32 = arith.constant 256 : i32
    %90 = arith.muli %c0_i32_46, %c256_i32 : i32
    %91 = tpu.assume_multiple %90, 256 : i32
    %c0_i32_47 = arith.constant 0 : i32
    %c0_i32_48 = arith.constant 0 : i32
    %92 = tpu.memref_slice %arg11[%c0_i32_1, %c0_i32_47, %c0_i32_48] : memref<1x128x256xbf16, #tpu.memory_space<vmem>> -> memref<1x128x256xbf16, #tpu.memory_space<vmem>>
    %93 = tpu.memref_squeeze %92 : memref<1x128x256xbf16, #tpu.memory_space<vmem>> -> memref<128x256xbf16, #tpu.memory_space<vmem>>
    %c0_49 = arith.constant 0 : index
    %94 = arith.index_cast %91 : i32 to index
    %95 = vector.load %93[%c0_49, %94] : memref<128x256xbf16, #tpu.memory_space<vmem>>, vector<128x256xbf16>
    %c0_i32_50 = arith.constant 0 : i32
    %c0_i32_51 = arith.constant 0 : i32
    %96 = tpu.memref_slice %arg13[%c0_i32_2, %c0_i32_50, %c0_i32_51] : memref<1x256x128xbf16, #tpu.memory_space<vmem>> -> memref<1x256x128xbf16, #tpu.memory_space<vmem>>
    %97 = tpu.memref_squeeze %96 : memref<1x256x128xbf16, #tpu.memory_space<vmem>> -> memref<256x128xbf16, #tpu.memory_space<vmem>>
    %98 = arith.index_cast %91 : i32 to index
    %c0_52 = arith.constant 0 : index
    %99 = vector.load %97[%98, %c0_52] : memref<256x128xbf16, #tpu.memory_space<vmem>>, vector<256x128xbf16>
    %c0_i32_53 = arith.constant 0 : i32
    %c0_i32_54 = arith.constant 0 : i32
    %100 = tpu.memref_slice %arg12[%c0_i32_3, %c0_i32_53, %c0_i32_54] : memref<1x1x256xf32, #tpu.memory_space<vmem>> -> memref<1x1x256xf32, #tpu.memory_space<vmem>>
    %101 = tpu.memref_squeeze %100 : memref<1x1x256xf32, #tpu.memory_space<vmem>> -> memref<1x256xf32, #tpu.memory_space<vmem>>
    %c0_55 = arith.constant 0 : index
    %102 = arith.index_cast %91 : i32 to index
    %103 = vector.load %101[%c0_55, %102] : memref<1x256xf32, #tpu.memory_space<vmem>>, vector<1x256xf32>
    %cst_56 = arith.constant dense<0.000000e+00> : vector<16x256xf32>
    %104 = tpu.matmul %88, %95, %cst_56 {dimension_numbers = #tpu.dot_dimension_numbers<[1], [0], [0], [1], [0, 0, 1, 1], [], []>} : vector<16x128xbf16>, vector<128x256xbf16>, vector<16x256xf32> -> vector<16x256xf32>
    %105 = vector.broadcast %103 : vector<1x256xf32> to vector<16x256xf32>
    %106 = arith.addf %104, %105 : vector<16x256xf32>
    %107 = arith.mulf %106, %106 : vector<16x256xf32>
    %108 = arith.mulf %106, %107 : vector<16x256xf32>
    %cst_57 = arith.constant 4.471500e-02 : f32
    %109 = vector.broadcast %cst_57 : f32 to vector<16x256xf32>
    %110 = arith.mulf %109, %108 : vector<16x256xf32>
    %111 = arith.addf %106, %110 : vector<16x256xf32>
    %cst_58 = arith.constant 0.797884583 : f32
    %112 = vector.broadcast %cst_58 : f32 to vector<16x256xf32>
    %113 = arith.mulf %112, %111 : vector<16x256xf32>
    %114 = math.tanh %113 : vector<16x256xf32>
    %cst_59 = arith.constant 1.000000e+00 : f32
    %115 = vector.broadcast %cst_59 : f32 to vector<16x256xf32>
    %116 = arith.addf %115, %114 : vector<16x256xf32>
    %cst_60 = arith.constant 5.000000e-01 : f32
    %117 = vector.broadcast %cst_60 : f32 to vector<16x256xf32>
    %118 = arith.mulf %117, %116 : vector<16x256xf32>
    %119 = arith.mulf %106, %118 : vector<16x256xf32>
    %120 = arith.truncf %119 : vector<16x256xf32> to vector<16x256xbf16>
    %cst_61 = arith.constant dense<0.000000e+00> : vector<16x128xf32>
    %121 = tpu.matmul %120, %99, %cst_61 {dimension_numbers = #tpu.dot_dimension_numbers<[1], [0], [0], [1], [0, 0, 1, 1], [], []>} : vector<16x256xbf16>, vector<256x128xbf16>, vector<16x128xf32> -> vector<16x128xf32>
    %122 = arith.addf %89, %121 : vector<16x128xf32>
    %c1_i32 = arith.constant 1 : i32
    %123 = arith.addf %61, %122 : vector<16x128xf32>
    %c0_62 = arith.constant 0 : index
    %c0_63 = arith.constant 0 : index
    %c0_64 = arith.constant 0 : index
    %124 = vector.load %arg14[%c0_62, %c0_63, %c0_64] : memref<1x1x128xf32, #tpu.memory_space<vmem>>, vector<1x1x128xf32>
    %125 = vector.shape_cast %124 : vector<1x1x128xf32> to vector<1x128xf32>
    %126 = vector.broadcast %125 : vector<1x128xf32> to vector<16x128xf32>
    %127 = arith.addf %123, %126 : vector<16x128xf32>
    %128 = arith.index_cast %c0_i32_4 : i32 to index
    %c0_65 = arith.constant 0 : index
    %c0_66 = arith.constant 0 : index
    %129 = vector.load %arg15[%128, %c0_65, %c0_66] : memref<2x16x128xf32, #tpu.memory_space<vmem>>, vector<1x16x128xf32>
    %130 = vector.shape_cast %129 : vector<1x16x128xf32> to vector<16x128xf32>
    %131 = vector.shape_cast %127 : vector<16x128xf32> to vector<1x16x128xf32>
    tpu.vector_store %arg15[%128, %c0_65, %c0_66], %131 {strides = array<i32>} : memref<2x16x128xf32, #tpu.memory_space<vmem>>, vector<1x16x128xf32>,
    %c1_i32_67 = arith.constant 1 : i32
    %132 = arith.index_cast %c1_i32_67 : i32 to index
    %c0_68 = arith.constant 0 : index
    %c0_69 = arith.constant 0 : index
    %133 = vector.load %arg15[%132, %c0_68, %c0_69] : memref<2x16x128xf32, #tpu.memory_space<vmem>>, vector<1x16x128xf32>
    %134 = vector.shape_cast %133 : vector<1x16x128xf32> to vector<16x128xf32>
    %c0_70 = arith.constant 0 : index
    %c0_71 = arith.constant 0 : index
    %c0_72 = arith.constant 0 : index
    %135 = vector.load %arg3[%c0_70, %c0_71, %c0_72] : memref<1x1x128xf32, #tpu.memory_space<vmem>>, vector<1x1x128xf32>
    %136 = vector.shape_cast %135 : vector<1x1x128xf32> to vector<1x128xf32>
    %c0_73 = arith.constant 0 : index
    %c0_74 = arith.constant 0 : index
    %c0_75 = arith.constant 0 : index
    %137 = vector.load %arg4[%c0_73, %c0_74, %c0_75] : memref<1x1x128xf32, #tpu.memory_space<vmem>>, vector<1x1x128xf32>
    %138 = vector.shape_cast %137 : vector<1x1x128xf32> to vector<1x128xf32>
    %cst_76 = arith.constant dense<0.000000e+00> : vector<16xf32>
    %139 = vector.multi_reduction <add>, %134, %cst_76 [1] : vector<16x128xf32> to vector<16xf32>
    %140 = vector.shape_cast %139 : vector<16xf32> to vector<16x1xf32>
    %cst_77 = arith.constant 1.280000e+02 : f32
    %141 = vector.broadcast %cst_77 : f32 to vector<16x1xf32>
    %142 = arith.divf %140, %141 : vector<16x1xf32>
    %143 = vector.broadcast %142 : vector<16x1xf32> to vector<16x128xf32>
    %144 = arith.subf %134, %143 : vector<16x128xf32>
    %145 = arith.mulf %144, %144 : vector<16x128xf32>
    %cst_78 = arith.constant dense<0.000000e+00> : vector<16xf32>
    %146 = vector.multi_reduction <add>, %145, %cst_78 [1] : vector<16x128xf32> to vector<16xf32>
    %147 = vector.shape_cast %146 : vector<16xf32> to vector<16x1xf32>
    %cst_79 = arith.constant 1.280000e+02 : f32
    %148 = vector.broadcast %cst_79 : f32 to vector<16x1xf32>
    %149 = arith.divf %147, %148 : vector<16x1xf32>
    %150 = vector.broadcast %142 : vector<16x1xf32> to vector<16x128xf32>
    %151 = arith.subf %134, %150 : vector<16x128xf32>
    %cst_80 = arith.constant 9.99999997E-7 : f32
    %152 = vector.broadcast %cst_80 : f32 to vector<16x1xf32>
    %153 = arith.addf %149, %152 : vector<16x1xf32>
    %154 = math.rsqrt %153 : vector<16x1xf32>
    %155 = vector.broadcast %154 : vector<16x1xf32> to vector<16x128xf32>
    %156 = arith.mulf %151, %155 : vector<16x128xf32>
    %157 = vector.broadcast %136 : vector<1x128xf32> to vector<16x128xf32>
    %158 = arith.mulf %156, %157 : vector<16x128xf32>
    %159 = vector.broadcast %138 : vector<1x128xf32> to vector<16x128xf32>
    %160 = arith.addf %158, %159 : vector<16x128xf32>
    %161 = arith.truncf %160 : vector<16x128xf32> to vector<16x128xbf16>
    %c0_81 = arith.constant 0 : index
    %c0_82 = arith.constant 0 : index
    %c0_83 = arith.constant 0 : index
    %162 = vector.load %arg5[%c0_81, %c0_82, %c0_83] : memref<1x64x16xbf16, #tpu.memory_space<vmem>>, vector<1x64x16xbf16>
    %163 = vector.shape_cast %162 : vector<1x64x16xbf16> to vector<64x16xbf16>
    %cst_84 = arith.constant dense<0.000000e+00> : vector<64x128xf32>
    %164 = tpu.matmul %163, %161, %cst_84 {dimension_numbers = #tpu.dot_dimension_numbers<[1], [0], [0], [1], [0, 0, 1, 1], [], []>} : vector<64x16xbf16>, vector<16x128xbf16>, vector<64x128xf32> -> vector<64x128xf32>
    %c0_85 = arith.constant 0 : index
    %c0_86 = arith.constant 0 : index
    %c0_87 = arith.constant 0 : index
    %165 = vector.load %arg6[%c0_85, %c0_86, %c0_87] : memref<1x64x1xf32, #tpu.memory_space<vmem>>, vector<1x64x1xf32>
    %166 = vector.shape_cast %165 : vector<1x64x1xf32> to vector<64x1xf32>
    %167 = vector.broadcast %166 : vector<64x1xf32> to vector<64x128xf32>
    %168 = arith.addf %164, %167 : vector<64x128xf32>
    %169 = arith.mulf %168, %168 : vector<64x128xf32>
    %170 = arith.mulf %168, %169 : vector<64x128xf32>
    %cst_88 = arith.constant 4.471500e-02 : f32
    %171 = vector.broadcast %cst_88 : f32 to vector<64x128xf32>
    %172 = arith.mulf %171, %170 : vector<64x128xf32>
    %173 = arith.addf %168, %172 : vector<64x128xf32>
    %cst_89 = arith.constant 0.797884583 : f32
    %174 = vector.broadcast %cst_89 : f32 to vector<64x128xf32>
    %175 = arith.mulf %174, %173 : vector<64x128xf32>
    %176 = math.tanh %175 : vector<64x128xf32>
    %cst_90 = arith.constant 1.000000e+00 : f32
    %177 = vector.broadcast %cst_90 : f32 to vector<64x128xf32>
    %178 = arith.addf %177, %176 : vector<64x128xf32>
    %cst_91 = arith.constant 5.000000e-01 : f32
    %179 = vector.broadcast %cst_91 : f32 to vector<64x128xf32>
    %180 = arith.mulf %179, %178 : vector<64x128xf32>
    %181 = arith.mulf %168, %180 : vector<64x128xf32>
    %c0_92 = arith.constant 0 : index
    %c0_93 = arith.constant 0 : index
    %c0_94 = arith.constant 0 : index
    %182 = vector.load %arg7[%c0_92, %c0_93, %c0_94] : memref<1x16x64xbf16, #tpu.memory_space<vmem>>, vector<1x16x64xbf16>
    %183 = vector.shape_cast %182 : vector<1x16x64xbf16> to vector<16x64xbf16>
    %184 = arith.truncf %181 : vector<64x128xf32> to vector<64x128xbf16>
    %cst_95 = arith.constant dense<0.000000e+00> : vector<16x128xf32>
    %185 = tpu.matmul %183, %184, %cst_95 {dimension_numbers = #tpu.dot_dimension_numbers<[1], [0], [0], [1], [0, 0, 1, 1], [], []>} : vector<16x64xbf16>, vector<64x128xbf16>, vector<16x128xf32> -> vector<16x128xf32>
    %186 = arith.addf %134, %185 : vector<16x128xf32>
    %c0_96 = arith.constant 0 : index
    %c0_97 = arith.constant 0 : index
    %c0_98 = arith.constant 0 : index
    %187 = vector.load %arg8[%c0_96, %c0_97, %c0_98] : memref<1x16x1xf32, #tpu.memory_space<vmem>>, vector<1x16x1xf32>
    %188 = vector.shape_cast %187 : vector<1x16x1xf32> to vector<16x1xf32>
    %189 = vector.broadcast %188 : vector<16x1xf32> to vector<16x128xf32>
    %190 = arith.addf %186, %189 : vector<16x128xf32>
    %c0_99 = arith.constant 0 : index
    %c0_100 = arith.constant 0 : index
    %c0_101 = arith.constant 0 : index
    %191 = vector.load %arg9[%c0_99, %c0_100, %c0_101] : memref<1x1x128xf32, #tpu.memory_space<vmem>>, vector<1x1x128xf32>
    %192 = vector.shape_cast %191 : vector<1x1x128xf32> to vector<1x128xf32>
    %c0_102 = arith.constant 0 : index
    %c0_103 = arith.constant 0 : index
    %c0_104 = arith.constant 0 : index
    %193 = vector.load %arg10[%c0_102, %c0_103, %c0_104] : memref<1x1x128xf32, #tpu.memory_space<vmem>>, vector<1x1x128xf32>
    %194 = vector.shape_cast %193 : vector<1x1x128xf32> to vector<1x128xf32>
    %cst_105 = arith.constant dense<0.000000e+00> : vector<16xf32>
    %195 = vector.multi_reduction <add>, %190, %cst_105 [1] : vector<16x128xf32> to vector<16xf32>
    %196 = vector.shape_cast %195 : vector<16xf32> to vector<16x1xf32>
    %cst_106 = arith.constant 1.280000e+02 : f32
    %197 = vector.broadcast %cst_106 : f32 to vector<16x1xf32>
    %198 = arith.divf %196, %197 : vector<16x1xf32>
    %199 = vector.broadcast %198 : vector<16x1xf32> to vector<16x128xf32>
    %200 = arith.subf %190, %199 : vector<16x128xf32>
    %201 = arith.mulf %200, %200 : vector<16x128xf32>
    %cst_107 = arith.constant dense<0.000000e+00> : vector<16xf32>
    %202 = vector.multi_reduction <add>, %201, %cst_107 [1] : vector<16x128xf32> to vector<16xf32>
    %203 = vector.shape_cast %202 : vector<16xf32> to vector<16x1xf32>
    %cst_108 = arith.constant 1.280000e+02 : f32
    %204 = vector.broadcast %cst_108 : f32 to vector<16x1xf32>
    %205 = arith.divf %203, %204 : vector<16x1xf32>
    %206 = vector.broadcast %198 : vector<16x1xf32> to vector<16x128xf32>
    %207 = arith.subf %190, %206 : vector<16x128xf32>
    %cst_109 = arith.constant 9.99999997E-7 : f32
    %208 = vector.broadcast %cst_109 : f32 to vector<16x1xf32>
    %209 = arith.addf %205, %208 : vector<16x1xf32>
    %210 = math.rsqrt %209 : vector<16x1xf32>
    %211 = vector.broadcast %210 : vector<16x1xf32> to vector<16x128xf32>
    %212 = arith.mulf %207, %211 : vector<16x128xf32>
    %213 = vector.broadcast %192 : vector<1x128xf32> to vector<16x128xf32>
    %214 = arith.mulf %212, %213 : vector<16x128xf32>
    %215 = vector.broadcast %194 : vector<1x128xf32> to vector<16x128xf32>
    %216 = arith.addf %214, %215 : vector<16x128xf32>
    %217 = arith.truncf %216 : vector<16x128xf32> to vector<16x128xbf16>
    %cst_110 = arith.constant 0.000000e+00 : f32
    %218 = vector.broadcast %cst_110 : f32 to vector<16x128xf32>
    %c0_i32_111 = arith.constant 0 : i32
    %c256_i32_112 = arith.constant 256 : i32
    %219 = arith.muli %c0_i32_111, %c256_i32_112 : i32
    %220 = tpu.assume_multiple %219, 256 : i32
    %c0_i32_113 = arith.constant 0 : i32
    %c0_i32_114 = arith.constant 0 : i32
    %221 = tpu.memref_slice %arg11[%c0_i32_1, %c0_i32_113, %c0_i32_114] : memref<1x128x256xbf16, #tpu.memory_space<vmem>> -> memref<1x128x256xbf16, #tpu.memory_space<vmem>>
    %222 = tpu.memref_squeeze %221 : memref<1x128x256xbf16, #tpu.memory_space<vmem>> -> memref<128x256xbf16, #tpu.memory_space<vmem>>
    %c0_115 = arith.constant 0 : index
    %223 = arith.index_cast %220 : i32 to index
    %224 = vector.load %222[%c0_115, %223] : memref<128x256xbf16, #tpu.memory_space<vmem>>, vector<128x256xbf16>
    %c0_i32_116 = arith.constant 0 : i32
    %c0_i32_117 = arith.constant 0 : i32
    %225 = tpu.memref_slice %arg13[%c0_i32_2, %c0_i32_116, %c0_i32_117] : memref<1x256x128xbf16, #tpu.memory_space<vmem>> -> memref<1x256x128xbf16, #tpu.memory_space<vmem>>
    %226 = tpu.memref_squeeze %225 : memref<1x256x128xbf16, #tpu.memory_space<vmem>> -> memref<256x128xbf16, #tpu.memory_space<vmem>>
    %227 = arith.index_cast %220 : i32 to index
    %c0_118 = arith.constant 0 : index
    %228 = vector.load %226[%227, %c0_118] : memref<256x128xbf16, #tpu.memory_space<vmem>>, vector<256x128xbf16>
    %c0_i32_119 = arith.constant 0 : i32
    %c0_i32_120 = arith.constant 0 : i32
    %229 = tpu.memref_slice %arg12[%c0_i32_3, %c0_i32_119, %c0_i32_120] : memref<1x1x256xf32, #tpu.memory_space<vmem>> -> memref<1x1x256xf32, #tpu.memory_space<vmem>>
    %230 = tpu.memref_squeeze %229 : memref<1x1x256xf32, #tpu.memory_space<vmem>> -> memref<1x256xf32, #tpu.memory_space<vmem>>
    %c0_121 = arith.constant 0 : index
    %231 = arith.index_cast %220 : i32 to index
    %232 = vector.load %230[%c0_121, %231] : memref<1x256xf32, #tpu.memory_space<vmem>>, vector<1x256xf32>
    %cst_122 = arith.constant dense<0.000000e+00> : vector<16x256xf32>
    %233 = tpu.matmul %217, %224, %cst_122 {dimension_numbers = #tpu.dot_dimension_numbers<[1], [0], [0], [1], [0, 0, 1, 1], [], []>} : vector<16x128xbf16>, vector<128x256xbf16>, vector<16x256xf32> -> vector<16x256xf32>
    %234 = vector.broadcast %232 : vector<1x256xf32> to vector<16x256xf32>
    %235 = arith.addf %233, %234 : vector<16x256xf32>
    %236 = arith.mulf %235, %235 : vector<16x256xf32>
    %237 = arith.mulf %235, %236 : vector<16x256xf32>
    %cst_123 = arith.constant 4.471500e-02 : f32
    %238 = vector.broadcast %cst_123 : f32 to vector<16x256xf32>
    %239 = arith.mulf %238, %237 : vector<16x256xf32>
    %240 = arith.addf %235, %239 : vector<16x256xf32>
    %cst_124 = arith.constant 0.797884583 : f32
    %241 = vector.broadcast %cst_124 : f32 to vector<16x256xf32>
    %242 = arith.mulf %241, %240 : vector<16x256xf32>
    %243 = math.tanh %242 : vector<16x256xf32>
    %cst_125 = arith.constant 1.000000e+00 : f32
    %244 = vector.broadcast %cst_125 : f32 to vector<16x256xf32>
    %245 = arith.addf %244, %243 : vector<16x256xf32>
    %cst_126 = arith.constant 5.000000e-01 : f32
    %246 = vector.broadcast %cst_126 : f32 to vector<16x256xf32>
    %247 = arith.mulf %246, %245 : vector<16x256xf32>
    %248 = arith.mulf %235, %247 : vector<16x256xf32>
    %249 = arith.truncf %248 : vector<16x256xf32> to vector<16x256xbf16>
    %cst_127 = arith.constant dense<0.000000e+00> : vector<16x128xf32>
    %250 = tpu.matmul %249, %228, %cst_127 {dimension_numbers = #tpu.dot_dimension_numbers<[1], [0], [0], [1], [0, 0, 1, 1], [], []>} : vector<16x256xbf16>, vector<256x128xbf16>, vector<16x128xf32> -> vector<16x128xf32>
    %251 = arith.addf %218, %250 : vector<16x128xf32>
    %c1_i32_128 = arith.constant 1 : i32
    %252 = arith.addf %190, %251 : vector<16x128xf32>
    %c0_129 = arith.constant 0 : index
    %c0_130 = arith.constant 0 : index
    %c0_131 = arith.constant 0 : index
    %253 = vector.load %arg14[%c0_129, %c0_130, %c0_131] : memref<1x1x128xf32, #tpu.memory_space<vmem>>, vector<1x1x128xf32>
    %254 = vector.shape_cast %253 : vector<1x1x128xf32> to vector<1x128xf32>
    %255 = vector.broadcast %254 : vector<1x128xf32> to vector<16x128xf32>
    %256 = arith.addf %252, %255 : vector<16x128xf32>
    %257 = arith.index_cast %c1_i32_67 : i32 to index
    %c0_132 = arith.constant 0 : index
    %c0_133 = arith.constant 0 : index
    %258 = vector.load %arg15[%257, %c0_132, %c0_133] : memref<2x16x128xf32, #tpu.memory_space<vmem>>, vector<1x16x128xf32>
    %259 = vector.shape_cast %258 : vector<1x16x128xf32> to vector<16x128xf32>
    %260 = vector.shape_cast %256 : vector<16x128xf32> to vector<1x16x128xf32>
    tpu.vector_store %arg15[%257, %c0_132, %c0_133], %260 {strides = array<i32>} : memref<2x16x128xf32, #tpu.memory_space<vmem>>, vector<1x16x128xf32>,
    %c2_i32 = arith.constant 2 : i32
    return
  }
  func.func @transform_0(%arg0: i32, %arg1: i32) -> (i32, i32, i32) {
    %c0_i32 = arith.constant 0 : i32
    %c0_i32_0 = arith.constant 0 : i32
    %c0_i32_1 = arith.constant 0 : i32
    return %arg0, %c0_i32, %c0_i32_0 : i32, i32, i32
  }
  func.func @transform_1(%arg0: i32, %arg1: i32) -> (i32, i32, i32) {
    %c0_i32 = arith.constant 0 : i32
    %c0_i32_0 = arith.constant 0 : i32
    %c0_i32_1 = arith.constant 0 : i32
    return %arg1, %c0_i32, %c0_i32_0 : i32, i32, i32
  }
  func.func @transform_2(%arg0: i32, %arg1: i32) -> (i32, i32, i32) {
    %c0_i32 = arith.constant 0 : i32
    %c0_i32_0 = arith.constant 0 : i32
    %c0_i32_1 = arith.constant 0 : i32
    return %arg1, %c0_i32, %c0_i32_0 : i32, i32, i32
  }
  func.func @transform_3(%arg0: i32, %arg1: i32) -> (i32, i32, i32) {
    %c0_i32 = arith.constant 0 : i32
    %c0_i32_0 = arith.constant 0 : i32
    %c0_i32_1 = arith.constant 0 : i32
    return %arg1, %c0_i32, %c0_i32_0 : i32, i32, i32
  }
  func.func @transform_4(%arg0: i32, %arg1: i32) -> (i32, i32, i32) {
    %c0_i32 = arith.constant 0 : i32
    %c0_i32_0 = arith.constant 0 : i32
    %c0_i32_1 = arith.constant 0 : i32
    return %arg1, %c0_i32, %c0_i32_0 : i32, i32, i32
  }
  func.func @transform_5(%arg0: i32, %arg1: i32) -> (i32, i32, i32) {
    %c0_i32 = arith.constant 0 : i32
    %c0_i32_0 = arith.constant 0 : i32
    %c0_i32_1 = arith.constant 0 : i32
    return %arg1, %c0_i32, %c0_i32_0 : i32, i32, i32
  }
  func.func @transform_6(%arg0: i32, %arg1: i32) -> (i32, i32, i32) {
    %c0_i32 = arith.constant 0 : i32
    %c0_i32_0 = arith.constant 0 : i32
    %c0_i32_1 = arith.constant 0 : i32
    return %arg1, %c0_i32, %c0_i32_0 : i32, i32, i32
  }
  func.func @transform_7(%arg0: i32, %arg1: i32) -> (i32, i32, i32) {
    %c0_i32 = arith.constant 0 : i32
    %c0_i32_0 = arith.constant 0 : i32
    %c0_i32_1 = arith.constant 0 : i32
    return %arg1, %c0_i32, %c0_i32_0 : i32, i32, i32
  }
  func.func @transform_8(%arg0: i32, %arg1: i32) -> (i32, i32, i32) {
    %c0_i32 = arith.constant 0 : i32
    %c0_i32_0 = arith.constant 0 : i32
    %c0_i32_1 = arith.constant 0 : i32
    return %arg1, %c0_i32, %c0_i32_0 : i32, i32, i32
  }
  func.func @transform_9(%arg0: i32, %arg1: i32) -> (i32, i32, i32) {
    %c0_i32 = arith.constant 0 : i32
    %c0_i32_0 = arith.constant 0 : i32
    %c0_i32_1 = arith.constant 0 : i32
    return %arg1, %c0_i32, %c0_i32_0 : i32, i32, i32
  }
  func.func @transform_10(%arg0: i32, %arg1: i32) -> (i32, i32, i32) {
    %c0_i32 = arith.constant 0 : i32
    %c0_i32_0 = arith.constant 0 : i32
    %c0_i32_1 = arith.constant 0 : i32
    return %arg1, %c0_i32, %c0_i32_0 : i32, i32, i32
  }
  func.func @transform_11(%arg0: i32, %arg1: i32) -> (i32, i32, i32) {
    %c0_i32 = arith.constant 0 : i32
    %c0_i32_0 = arith.constant 0 : i32
    %c0_i32_1 = arith.constant 0 : i32
    return %arg1, %c0_i32, %c0_i32_0 : i32, i32, i32
  }
  func.func @transform_12(%arg0: i32, %arg1: i32) -> (i32, i32, i32) {
    %c0_i32 = arith.constant 0 : i32
    %c0_i32_0 = arith.constant 0 : i32
    %c0_i32_1 = arith.constant 0 : i32
    return %arg1, %c0_i32, %c0_i32_0 : i32, i32, i32
  }
  func.func @transform_13(%arg0: i32, %arg1: i32) -> (i32, i32, i32) {
    %c0_i32 = arith.constant 0 : i32
    %c0_i32_0 = arith.constant 0 : i32
    %c0_i32_1 = arith.constant 0 : i32
    return %arg0, %c0_i32, %c0_i32_0 : i32, i32, i32
  }
}

module attributes {stable_mosaic.version = 11 : i64} {
  func.func @norm_mean_kernel(%arg0: i32, %arg1: memref<4x16x128xf32, #tpu.memory_space<vmem>>, %arg2: memref<1x128xf32, #tpu.memory_space<vmem>>, %arg3: memref<1x128xf32, #tpu.memory_space<vmem>>, %arg4: memref<4x128xf32, #tpu.memory_space<vmem>>) attributes {dimension_semantics = [#tpu.dimension_semantics<parallel>], iteration_bounds = array<i64: 1>, scalar_prefetch = 0 : i64, scratch_operands = 0 : i64, tpu.core_type = #tpu.core_type<tc>, window_params = [{transform_indices = @transform_0, window_bounds = array<i64: 4, 16, 128>}, {pipeline_mode = #tpu.pipeline_mode<synchronous>, transform_indices = @transform_1, window_bounds = array<i64: 1, 128>}, {pipeline_mode = #tpu.pipeline_mode<synchronous>, transform_indices = @transform_2, window_bounds = array<i64: 1, 128>}, {transform_indices = @transform_3, window_bounds = array<i64: 4, 128>}]} {
    %c0 = arith.constant 0 : index
    %c0_0 = arith.constant 0 : index
    %c0_1 = arith.constant 0 : index
    %0 = vector.load %arg1[%c0, %c0_0, %c0_1] : memref<4x16x128xf32, #tpu.memory_space<vmem>>, vector<4x16x128xf32>
    %c0_2 = arith.constant 0 : index
    %c0_3 = arith.constant 0 : index
    %1 = vector.load %arg2[%c0_2, %c0_3] : memref<1x128xf32, #tpu.memory_space<vmem>>, vector<1x128xf32>
    %c0_4 = arith.constant 0 : index
    %c0_5 = arith.constant 0 : index
    %2 = vector.load %arg3[%c0_4, %c0_5] : memref<1x128xf32, #tpu.memory_space<vmem>>, vector<1x128xf32>
    %cst = arith.constant dense<0.000000e+00> : vector<4x16xf32>
    %3 = vector.multi_reduction <add>, %0, %cst [2] : vector<4x16x128xf32> to vector<4x16xf32>
    %4 = vector.shape_cast %3 : vector<4x16xf32> to vector<4x16x1xf32>
    %cst_6 = arith.constant 1.280000e+02 : f32
    %5 = vector.broadcast %cst_6 : f32 to vector<4x16x1xf32>
    %6 = arith.divf %4, %5 : vector<4x16x1xf32>
    %7 = vector.broadcast %6 : vector<4x16x1xf32> to vector<4x16x128xf32>
    %8 = arith.subf %0, %7 : vector<4x16x128xf32>
    %9 = arith.mulf %8, %8 : vector<4x16x128xf32>
    %cst_7 = arith.constant dense<0.000000e+00> : vector<4x16xf32>
    %10 = vector.multi_reduction <add>, %9, %cst_7 [2] : vector<4x16x128xf32> to vector<4x16xf32>
    %11 = vector.shape_cast %10 : vector<4x16xf32> to vector<4x16x1xf32>
    %cst_8 = arith.constant 1.280000e+02 : f32
    %12 = vector.broadcast %cst_8 : f32 to vector<4x16x1xf32>
    %13 = arith.divf %11, %12 : vector<4x16x1xf32>
    %14 = vector.broadcast %6 : vector<4x16x1xf32> to vector<4x16x128xf32>
    %15 = arith.subf %0, %14 : vector<4x16x128xf32>
    %cst_9 = arith.constant 9.99999997E-7 : f32
    %16 = vector.broadcast %cst_9 : f32 to vector<4x16x1xf32>
    %17 = arith.addf %13, %16 : vector<4x16x1xf32>
    %18 = math.rsqrt %17 : vector<4x16x1xf32>
    %19 = vector.broadcast %18 : vector<4x16x1xf32> to vector<4x16x128xf32>
    %20 = arith.mulf %15, %19 : vector<4x16x128xf32>
    %21 = vector.shape_cast %1 : vector<1x128xf32> to vector<1x1x128xf32>
    %22 = vector.broadcast %21 : vector<1x1x128xf32> to vector<4x16x128xf32>
    %23 = arith.mulf %20, %22 : vector<4x16x128xf32>
    %24 = vector.shape_cast %2 : vector<1x128xf32> to vector<1x1x128xf32>
    %25 = vector.broadcast %24 : vector<1x1x128xf32> to vector<4x16x128xf32>
    %26 = arith.addf %23, %25 : vector<4x16x128xf32>
    %cst_10 = arith.constant dense<0.000000e+00> : vector<4x128xf32>
    %27 = vector.multi_reduction <add>, %26, %cst_10 [1] : vector<4x16x128xf32> to vector<4x128xf32>
    %cst_11 = arith.constant 1.600000e+01 : f32
    %28 = vector.broadcast %cst_11 : f32 to vector<4x128xf32>
    %29 = arith.divf %27, %28 : vector<4x128xf32>
    %c0_12 = arith.constant 0 : index
    %c0_13 = arith.constant 0 : index
    %30 = vector.load %arg4[%c0_12, %c0_13] : memref<4x128xf32, #tpu.memory_space<vmem>>, vector<4x128xf32>
    tpu.vector_store %arg4[%c0_12, %c0_13], %29 {strides = array<i32>} : memref<4x128xf32, #tpu.memory_space<vmem>>, vector<4x128xf32>,
    return
  }
  func.func @transform_0(%arg0: i32) -> (i32, i32, i32) {
    %c0_i32 = arith.constant 0 : i32
    %c0_i32_0 = arith.constant 0 : i32
    %c0_i32_1 = arith.constant 0 : i32
    return %arg0, %c0_i32, %c0_i32_0 : i32, i32, i32
  }
  func.func @transform_1(%arg0: i32) -> (i32, i32) {
    %c0_i32 = arith.constant 0 : i32
    %c0_i32_0 = arith.constant 0 : i32
    %c0_i32_1 = arith.constant 0 : i32
    return %c0_i32, %c0_i32_0 : i32, i32
  }
  func.func @transform_2(%arg0: i32) -> (i32, i32) {
    %c0_i32 = arith.constant 0 : i32
    %c0_i32_0 = arith.constant 0 : i32
    %c0_i32_1 = arith.constant 0 : i32
    return %c0_i32, %c0_i32_0 : i32, i32
  }
  func.func @transform_3(%arg0: i32) -> (i32, i32) {
    %c0_i32 = arith.constant 0 : i32
    %c0_i32_0 = arith.constant 0 : i32
    return %arg0, %c0_i32 : i32, i32
  }
}

</mosaic_0001>

<llo_original>
// kernel: mymlp_mixer_forward.3
$region0: #{mymlp_mixer_forward.3}
  #allocation0 [shape = 'u32[]', space=smem, size = 0x4, offset = 0x4, fixed_abs, tag = 'smem constant byte address 0x4 - core index']
  #allocation1 [shape = 'u32[144,128]{1,0:T(1,128)}', space=vmem, size = 0x12000, scoped, tag = 'internal scratch']
  %s0 = inlined_call_operand.vmem [shape: bf16[64,192], index: 0, kind: input, shape index: {}]
  %s1 = inlined_call_operand.vmem [shape: bf16[192,128], index: 1, kind: input, shape index: {}]
  %s2 = inlined_call_operand.vmem [shape: f32[1,128], index: 2, kind: input, shape index: {}]
  %s3 = inlined_call_operand.vmem [shape: f32[64,128], index: 3, kind: output, shape index: {}]
  %s4 = sld [smem:[#allocation0]]
  $region22: #{mymlp_mixer_forward.3} parent=0
    _
  %s6 = ssub.s32 1, %s4
  %s7 = scalar_select 0, %s6, %s4
  // Predicated region
  $region2: #{mymlp_mixer_forward.3} parent=0 // pred_check
    _
  $region3: #{mymlp_mixer_forward.3} parent=0 // pred_check_branch
    %9 = sbr.rel (0) target = $region5
  $region4: #{mymlp_mixer_forward.3} parent=0 // pred_region
    _
  $region5: #{mymlp_mixer_forward.3} parent=0 // pred_fallthru
    _
  // Predicated region
  $region6: #{mymlp_mixer_forward.3} parent=0 // pred_check
    _
  $region7: #{mymlp_mixer_forward.3} parent=0 // pred_check_branch
    %11 = sbr.rel (0) target = $region9
  $region8: #{mymlp_mixer_forward.3} parent=0 // pred_region
    _
  $region9: #{mymlp_mixer_forward.3} parent=0 // pred_fallthru
    _
  // Predicated region
  $region10: #{mymlp_mixer_forward.3} parent=0 // pred_check
    _
  $region11: #{mymlp_mixer_forward.3} parent=0 // pred_check_branch
    %13 = sbr.rel (0) target = $region13
  $region12: #{mymlp_mixer_forward.3} parent=0 // pred_region
    _
  $region13: #{mymlp_mixer_forward.3} parent=0 // pred_fallthru
    _
  %v15 = vld [vmem:[%s0] sm:$0xff]
  %v16 = vld [vmem:[%s0 + $0x8] sm:$0xff]
  %v17 = vld [vmem:[%s0 + $0x10] sm:$0xff]
  %v18 = vld [vmem:[%s0 + $0x18] sm:$0xff]
  %v19 = vld [vmem:[%s0 + $0x20] sm:$0xff]
  %v20 = vld [vmem:[%s0 + $0x28] sm:$0xff]
  %v21 = vld [vmem:[%s0 + $0x30] sm:$0xff]
  %v22 = vld [vmem:[%s0 + $0x38] sm:$0xff]
  %v23 = vld [vmem:[%s1] sm:$0xf]
  %v24 = vld [vmem:[%s1 + $0x4] sm:$0xf]
  %v25 = vld [vmem:[%s1 + $0x8] sm:$0xf]
  %v26 = vld [vmem:[%s1 + $0xc] sm:$0xf]
  %v27 = vld [vmem:[%s1 + $0x10] sm:$0xf]
  %v28 = vld [vmem:[%s1 + $0x14] sm:$0xf]
  %v29 = vld [vmem:[%s1 + $0x18] sm:$0xf]
  %v30 = vld [vmem:[%s1 + $0x1c] sm:$0xf]
  %v31 = vld [vmem:[%s1 + $0x20] sm:$0xf]
  %v32 = vld [vmem:[%s1 + $0x24] sm:$0xf]
  %v33 = vld [vmem:[%s1 + $0x28] sm:$0xf]
  %v34 = vld [vmem:[%s1 + $0x2c] sm:$0xf]
  %v35 = vld [vmem:[%s1 + $0x30] sm:$0xf]
  %v36 = vld [vmem:[%s1 + $0x34] sm:$0xf]
  %v37 = vld [vmem:[%s1 + $0x38] sm:$0xf]
  %v38 = vld [vmem:[%s1 + $0x3c] sm:$0xf]
  %v39 = vld [vmem:[%s1 + $0x40] sm:$0xf]
  %v40 = vld [vmem:[%s1 + $0x44] sm:$0xf]
  %v41 = vld [vmem:[%s1 + $0x48] sm:$0xf]
  %v42 = vld [vmem:[%s1 + $0x4c] sm:$0xf]
  %v43 = vld [vmem:[%s1 + $0x50] sm:$0xf]
  %v44 = vld [vmem:[%s1 + $0x54] sm:$0xf]
  %v45 = vld [vmem:[%s1 + $0x58] sm:$0xf]
  %v46 = vld [vmem:[%s1 + $0x5c] sm:$0xf]
  %v47 = vld [vmem:[%s2] sm:$0x1]
  %v49 = vlaneseq
  %v50 = vshrl.u32 %v49, 7
  %v51 = vsub.s32 0, %v50
  %v52 = vrot.slane %v47, %v51
  %v62 = vunpack.c.l.b16 %v15
  %v63 = vunpack.c.h.b16 %v15
  %v64 = vunpack.c.l.b16 %v16
  %v65 = vunpack.c.h.b16 %v16
  %v66 = vunpack.c.l.b16 %v17
  %v67 = vunpack.c.h.b16 %v17
  %v68 = vunpack.c.l.b16 %v18
  %v69 = vunpack.c.h.b16 %v18
  %v70 = vunpack.c.l.b16 %v19
  %v71 = vunpack.c.h.b16 %v19
  %v72 = vunpack.c.l.b16 %v20
  %v73 = vunpack.c.h.b16 %v20
  %v74 = vunpack.c.l.b16 %v21
  %v75 = vunpack.c.h.b16 %v21
  %v76 = vunpack.c.l.b16 %v22
  %v77 = vunpack.c.h.b16 %v22
  %v78 = vpack.c.b16 %v64, %v62
  %v79 = vpack.c.b16 %v65, %v63
  %v80 = vpack.c.b16 %v68, %v66
  %v81 = vpack.c.b16 %v69, %v67
  %v82 = vpack.c.b16 %v72, %v70
  %v83 = vpack.c.b16 %v73, %v71
  %v84 = vpack.c.b16 %v76, %v74
  %v85 = vpack.c.b16 %v77, %v75
  %v114 = vunpack.c.l.b16 %v23
  %v115 = vunpack.c.l.b16 %v24
  %v116 = vunpack.c.l.b16 %v25
  %v117 = vunpack.c.l.b16 %v26
  %v118 = vunpack.c.l.b16 %v27
  %v119 = vunpack.c.l.b16 %v28
  %v120 = vunpack.c.l.b16 %v29
  %v121 = vunpack.c.l.b16 %v30
  %v122 = vunpack.c.l.b16 %v31
  %v123 = vunpack.c.l.b16 %v32
  %v124 = vunpack.c.l.b16 %v33
  %v125 = vunpack.c.l.b16 %v34
  %v126 = vunpack.c.l.b16 %v35
  %v127 = vunpack.c.l.b16 %v36
  %v128 = vunpack.c.l.b16 %v37
  %v129 = vunpack.c.l.b16 %v38
  %v130 = vunpack.c.l.b16 %v39
  %v131 = vunpack.c.l.b16 %v40
  %v132 = vunpack.c.l.b16 %v41
  %v133 = vunpack.c.l.b16 %v42
  %v134 = vunpack.c.l.b16 %v43
  %v135 = vunpack.c.l.b16 %v44
  %v136 = vunpack.c.l.b16 %v45
  %v137 = vunpack.c.l.b16 %v46
  %v138 = vpack.c.b16 %v115, %v114
  %v139 = vpack.c.b16 %v117, %v116
  %v140 = vpack.c.b16 %v119, %v118
  %v141 = vpack.c.b16 %v121, %v120
  %v142 = vpack.c.b16 %v123, %v122
  %v143 = vpack.c.b16 %v125, %v124
  %v144 = vpack.c.b16 %v127, %v126
  %v145 = vpack.c.b16 %v129, %v128
  %v146 = vpack.c.b16 %v131, %v130
  %v147 = vpack.c.b16 %v133, %v132
  %v148 = vpack.c.b16 %v135, %v134
  %v149 = vpack.c.b16 %v137, %v136
  %vm162 = vcmask 523264
  %v164 = vsel %vm162, %v79, 0
  %v167 = vsel %vm162, %v81, 0
  %v170 = vsel %vm162, %v83, 0
  %v173 = vsel %vm162, %v85, 0
  %175 = vmatprep.subr.bf16.mxu0 0
  %176 = vmatpush1.bf16.msra.mxu0 %v145
  %177 = vmatprep.subr.bf16.mxu0 0
  %178 = vmatpush1.bf16.msra.mxu0 %v144
  %179 = vmatprep.subr.bf16.mxu0 0
  %180 = vmatpush1.bf16.msra.mxu0 %v143
  %181 = vmatprep.subr.bf16.mxu0 0
  %182 = vmatpush1.bf16.msra.mxu0 %v142
  %183 = vmatprep.subr.bf16.mxu0 0
  %184 = vmatpush1.bf16.msra.mxu0 %v141
  %185 = vmatprep.subr.bf16.mxu0 0
  %186 = vmatpush1.bf16.msra.mxu0 %v140
  %187 = vmatprep.subr.bf16.mxu0 0
  %188 = vmatpush1.bf16.msra.mxu0 %v139
  %189 = vmatprep.subr.bf16.mxu0 0
  %190 = vmatpush1.bf16.msra.mxu0 %v138
  %191 = vmatprep.subr.bf16.mxu0 0
  %192 = vmatpush2.bf16.msra.mxu0 0
  %193 = vmatprep.subr.bf16.mxu0 0
  %194 = vmatpush2.bf16.msra.mxu0 0
  %195 = vmatprep.subr.bf16.mxu0 0
  %196 = vmatpush2.bf16.msra.mxu0 0
  %197 = vmatprep.subr.bf16.mxu0 0
  %198 = vmatpush2.bf16.msra.mxu0 0
  %199 = vmatprep.subr.bf16.mxu0 0
  %200 = vmatpush2.bf16.msra.mxu0 %v149
  %201 = vmatprep.subr.bf16.mxu0 0
  %202 = vmatpush2.bf16.msra.mxu0 %v148
  %203 = vmatprep.subr.bf16.mxu0 0
  %204 = vmatpush2.bf16.msra.mxu0 %v147
  %205 = vmatprep.subr.bf16.mxu0 0
  %206 = vmatpush2.bf16.msra.mxu0 %v146
  %207 = vmatprep.mubr.bf16.mxu0 %v164
  %208 = vmatmul.mubr.bf16.gmra.mxu0 %v78
  %v209 = vpop.f32.mrf.mxu0
  %v210 = vadd.f32 %v52, %v209
  %v211 = vpop.f32.mrf.mxu0
  %v212 = vpop.f32.mrf.mxu0
  %v213 = vadd.f32 %v52, %v212
  %v214 = vpop.f32.mrf.mxu0
  %215 = vmatprep.mubr.bf16.mxu0 %v167
  %216 = vmatmul.mubr.bf16.gmra.mxu0 %v80
  %v217 = vpop.f32.mrf.mxu0
  %v218 = vadd.f32 %v52, %v217
  %v219 = vpop.f32.mrf.mxu0
  %v220 = vpop.f32.mrf.mxu0
  %v221 = vadd.f32 %v52, %v220
  %v222 = vpop.f32.mrf.mxu0
  %223 = vmatprep.mubr.bf16.mxu0 %v170
  %224 = vmatmul.mubr.bf16.gmra.mxu0 %v82
  %v225 = vpop.f32.mrf.mxu0
  %v226 = vadd.f32 %v52, %v225
  %v227 = vpop.f32.mrf.mxu0
  %v228 = vpop.f32.mrf.mxu0
  %v229 = vadd.f32 %v52, %v228
  %v230 = vpop.f32.mrf.mxu0
  %231 = vmatprep.mubr.bf16.mxu0 %v173
  %232 = vmatmul.mubr.bf16.gmra.mxu0 %v84
  %v233 = vpop.f32.mrf.mxu0
  %v234 = vadd.f32 %v52, %v233
  %v235 = vpop.f32.mrf.mxu0
  %v236 = vpop.f32.mrf.mxu0
  %v237 = vadd.f32 %v52, %v236
  %v238 = vpop.f32.mrf.mxu0
  %239 = vdwg.mxu0
  %240 = vst [vmem:[%s3] sm:$0xff] %v210
  %241 = vst [vmem:[%s3 + $0x8] sm:$0xff] %v213
  %242 = vst [vmem:[%s3 + $0x10] sm:$0xff] %v218
  %243 = vst [vmem:[%s3 + $0x18] sm:$0xff] %v221
  %244 = vst [vmem:[%s3 + $0x20] sm:$0xff] %v226
  %245 = vst [vmem:[%s3 + $0x28] sm:$0xff] %v229
  %246 = vst [vmem:[%s3 + $0x30] sm:$0xff] %v234
  %247 = vst [vmem:[%s3 + $0x38] sm:$0xff] %v237
  // Predicated region
  $region14: #{mymlp_mixer_forward.3} parent=0 // pred_check
    _
  $region15: #{mymlp_mixer_forward.3} parent=0 // pred_check_branch
    %249 = sbr.rel (0) target = $region17
  $region16: #{mymlp_mixer_forward.3} parent=0 // pred_region
    _
  $region17: #{mymlp_mixer_forward.3} parent=0 // pred_fallthru
    _
  // Predicated region
  $region18: #{mymlp_mixer_forward.3} parent=0 // pred_check
    _
  $region19: #{mymlp_mixer_forward.3} parent=0 // pred_check_branch
    %251 = sbr.rel (0) target = $region21
  $region20: #{mymlp_mixer_forward.3} parent=0 // pred_region
    _
  $region21: #{mymlp_mixer_forward.3} parent=0 // pred_fallthru
    _

// kernel: mymlp_mixer_forward.5
$region0: #{mymlp_mixer_forward.5}
  #allocation0 [shape = 'u32[]', space=smem, size = 0x4, offset = 0x4, fixed_abs, tag = 'smem constant byte address 0x4 - core index']
  #allocation1 [shape = 'u32[144,128]{1,0:T(1,128)}', space=vmem, size = 0x12000, scoped, tag = 'internal scratch']
  %s0 = inlined_call_operand.vmem [shape: f32[4,16,128], index: 0, kind: input, shape index: {}]
  %s1 = inlined_call_operand.vmem [shape: f32[1,128], index: 1, kind: input, shape index: {}]
  %s2 = inlined_call_operand.vmem [shape: f32[1,128], index: 2, kind: input, shape index: {}]
  %s3 = inlined_call_operand.hbm [shape: f32[4,128], index: 3, kind: output, shape index: {}]
  %s4 = sld [smem:[#allocation0]]
  $region22: #{mymlp_mixer_forward.5} parent=0
    _
  %s6 = ssub.s32 1, %s4
  %s7 = scalar_select 0, %s6, %s4
  $region1: #{mymlp_mixer_forward.5} parent=0
    #allocation2 [shape = 'u8[2048]{0}', space=vmem, size = 0x800, scoped, tag = 'output window, operand 0, single buffered']
    #allocation3 [shape = 's32[1]{0}', space=sflag, size = 0x4, scoped, tag = 'scoped memory for mymlp_mixer_forward.5']
    %8 = vsyncpa [#allocation3], 0
    // Predicated region
    $region2: #{mymlp_mixer_forward.5} parent=1 // pred_check
      _
    $region3: #{mymlp_mixer_forward.5} parent=1 // pred_check_branch
      %10 = sbr.rel (0) target = $region5
    $region4: #{mymlp_mixer_forward.5} parent=1 // pred_region
      _
    $region5: #{mymlp_mixer_forward.5} parent=1 // pred_fallthru
      _
    // Predicated region
    $region6: #{mymlp_mixer_forward.5} parent=1 // pred_check
      _
    $region7: #{mymlp_mixer_forward.5} parent=1 // pred_check_branch
      %12 = sbr.rel (0) target = $region9
    $region8: #{mymlp_mixer_forward.5} parent=1 // pred_region
      _
    $region9: #{mymlp_mixer_forward.5} parent=1 // pred_fallthru
      _
    // Predicated region
    $region10: #{mymlp_mixer_forward.5} parent=1 // pred_check
      _
    $region11: #{mymlp_mixer_forward.5} parent=1 // pred_check_branch
      %14 = sbr.rel (0) target = $region13
    $region12: #{mymlp_mixer_forward.5} parent=1 // pred_region
      _
    $region13: #{mymlp_mixer_forward.5} parent=1 // pred_fallthru
      _
    %v15 = vld [vmem:[%s0] sm:$0xff]
    %v16 = vld [vmem:[%s0 + $0x8] sm:$0xff]
    %v17 = vld [vmem:[%s0 + $0x10] sm:$0xff]
    %v18 = vld [vmem:[%s0 + $0x18] sm:$0xff]
    %v19 = vld [vmem:[%s0 + $0x20] sm:$0xff]
    %v20 = vld [vmem:[%s0 + $0x28] sm:$0xff]
    %v21 = vld [vmem:[%s0 + $0x30] sm:$0xff]
    %v22 = vld [vmem:[%s0 + $0x38] sm:$0xff]
    %v23 = vld [vmem:[%s1] sm:$0x1]
    %v24 = vld [vmem:[%s2] sm:$0x1]
    %25 = vadd.xlane.f32.xlu0 %v15
    %v26 = vpop.xlane.xlu0 %25
    %27 = vadd.xlane.f32.xlu0 %v16
    %v28 = vpop.xlane.xlu0 %27
    %29 = vadd.xlane.f32.xlu0 %v17
    %v30 = vpop.xlane.xlu0 %29
    %31 = vadd.xlane.f32.xlu0 %v18
    %v32 = vpop.xlane.xlu0 %31
    %33 = vadd.xlane.f32.xlu0 %v19
    %v34 = vpop.xlane.xlu0 %33
    %35 = vadd.xlane.f32.xlu0 %v20
    %v36 = vpop.xlane.xlu0 %35
    %37 = vadd.xlane.f32.xlu0 %v21
    %v38 = vpop.xlane.xlu0 %37
    %39 = vadd.xlane.f32.xlu0 %v22
    %v40 = vpop.xlane.xlu0 %39
    %v41 = vrcp.pop 128.0
    %v42 = vmul.f32 %v26, %v41
    %v43 = vmul.f32 %v28, %v41
    %v44 = vmul.f32 %v30, %v41
    %v45 = vmul.f32 %v32, %v41
    %v46 = vmul.f32 %v34, %v41
    %v47 = vmul.f32 %v36, %v41
    %v48 = vmul.f32 %v38, %v41
    %v49 = vmul.f32 %v40, %v41
    %v50 = vsub.f32 %v15, %v42
    %v51 = vsub.f32 %v16, %v43
    %v52 = vsub.f32 %v17, %v44
    %v53 = vsub.f32 %v18, %v45
    %v54 = vsub.f32 %v19, %v46
    %v55 = vsub.f32 %v20, %v47
    %v56 = vsub.f32 %v21, %v48
    %v57 = vsub.f32 %v22, %v49
    %v58 = vmul.f32 %v50, %v50
    %v59 = vmul.f32 %v51, %v51
    %v60 = vmul.f32 %v52, %v52
    %v61 = vmul.f32 %v53, %v53
    %v62 = vmul.f32 %v54, %v54
    %v63 = vmul.f32 %v55, %v55
    %v64 = vmul.f32 %v56, %v56
    %v65 = vmul.f32 %v57, %v57
    %66 = vadd.xlane.f32.xlu0 %v58
    %v67 = vpop.xlane.xlu0 %66
    %68 = vadd.xlane.f32.xlu0 %v59
    %v69 = vpop.xlane.xlu0 %68
    %70 = vadd.xlane.f32.xlu0 %v60
    %v71 = vpop.xlane.xlu0 %70
    %72 = vadd.xlane.f32.xlu0 %v61
    %v73 = vpop.xlane.xlu0 %72
    %74 = vadd.xlane.f32.xlu0 %v62
    %v75 = vpop.xlane.xlu0 %74
    %76 = vadd.xlane.f32.xlu0 %v63
    %v77 = vpop.xlane.xlu0 %76
    %78 = vadd.xlane.f32.xlu0 %v64
    %v79 = vpop.xlane.xlu0 %78
    %80 = vadd.xlane.f32.xlu0 %v65
    %v81 = vpop.xlane.xlu0 %80
    %v82 = vmul.f32 %v67, %v41
    %v83 = vmul.f32 %v69, %v41
    %v84 = vmul.f32 %v71, %v41
    %v85 = vmul.f32 %v73, %v41
    %v86 = vmul.f32 %v75, %v41
    %v87 = vmul.f32 %v77, %v41
    %v88 = vmul.f32 %v79, %v41
    %v89 = vmul.f32 %v81, %v41
    %v90 = vadd.f32 %v82, 1e-06
    %v91 = vadd.f32 %v83, 1e-06
    %v92 = vadd.f32 %v84, 1e-06
    %v93 = vadd.f32 %v85, 1e-06
    %v94 = vadd.f32 %v86, 1e-06
    %v95 = vadd.f32 %v87, 1e-06
    %v96 = vadd.f32 %v88, 1e-06
    %v97 = vadd.f32 %v89, 1e-06
    %v98 = vrsqrt.pop %v90
    %v99 = vrsqrt.pop %v91
    %v100 = vrsqrt.pop %v92
    %v101 = vrsqrt.pop %v93
    %v102 = vrsqrt.pop %v94
    %v103 = vrsqrt.pop %v95
    %v104 = vrsqrt.pop %v96
    %v105 = vrsqrt.pop %v97
    %v106 = vmul.f32 %v50, %v98
    %v107 = vmul.f32 %v51, %v99
    %v108 = vmul.f32 %v52, %v100
    %v109 = vmul.f32 %v53, %v101
    %v110 = vmul.f32 %v54, %v102
    %v111 = vmul.f32 %v55, %v103
    %v112 = vmul.f32 %v56, %v104
    %v113 = vmul.f32 %v57, %v105
    %v115 = vlaneseq
    %v116 = vshrl.u32 %v115, 7
    %v117 = vsub.s32 0, %v116
    %v118 = vrot.slane %v23, %v117
    %v120 = vmul.f32 %v106, %v118
    %v121 = vmul.f32 %v107, %v118
    %v122 = vmul.f32 %v108, %v118
    %v123 = vmul.f32 %v109, %v118
    %v124 = vmul.f32 %v110, %v118
    %v125 = vmul.f32 %v111, %v118
    %v126 = vmul.f32 %v112, %v118
    %v127 = vmul.f32 %v113, %v118
    %v129 = vlaneseq
    %v130 = vshrl.u32 %v129, 7
    %v131 = vsub.s32 0, %v130
    %v132 = vrot.slane %v24, %v131
    %v134 = vadd.f32 %v120, %v132
    %v135 = vadd.f32 %v121, %v132
    %v136 = vadd.f32 %v122, %v132
    %v137 = vadd.f32 %v123, %v132
    %v138 = vadd.f32 %v124, %v132
    %v139 = vadd.f32 %v125, %v132
    %v140 = vadd.f32 %v126, %v132
    %v141 = vadd.f32 %v127, %v132
    %v142 = vadd.f32 %v134, %v135
    %v143 = vrot.slane %v142, 4
    %v144 = vadd.f32 %v142, %v143
    %v145 = vrot.slane %v144, 2
    %v146 = vadd.f32 %v144, %v145
    %v147 = vrot.slane %v146, 1
    %v148 = vadd.f32 %v146, %v147
    %v149 = vadd.f32 %v136, %v137
    %v150 = vrot.slane %v149, 4
    %v151 = vadd.f32 %v149, %v150
    %v152 = vrot.slane %v151, 2
    %v153 = vadd.f32 %v151, %v152
    %v154 = vrot.slane %v153, 1
    %v155 = vadd.f32 %v153, %v154
    %v156 = vadd.f32 %v138, %v139
    %v157 = vrot.slane %v156, 4
    %v158 = vadd.f32 %v156, %v157
    %v159 = vrot.slane %v158, 2
    %v160 = vadd.f32 %v158, %v159
    %v161 = vrot.slane %v160, 1
    %v162 = vadd.f32 %v160, %v161
    %v163 = vadd.f32 %v140, %v141
    %v164 = vrot.slane %v163, 4
    %v165 = vadd.f32 %v163, %v164
    %v166 = vrot.slane %v165, 2
    %v167 = vadd.f32 %v165, %v166
    %v168 = vrot.slane %v167, 1
    %v169 = vadd.f32 %v167, %v168
    %v170 = vrcp.pop 16.0
    %v171 = vmul.f32 %v148, %v170
    %v172 = vmul.f32 %v155, %v170
    %v173 = vmul.f32 %v162, %v170
    %v174 = vmul.f32 %v169, %v170
    %vm179 = vcmask 1041409
    %v180 = vsel %vm179, %v172, %v171
    %vm181 = vcmask 1042434
    %v182 = vsel %vm181, %v173, %v180
    %vm183 = vcmask 1043459
    %v184 = vsel %vm183, %v174, %v182
    %186 = vst [vmem:[#allocation2] sm:$0xf] %v184
    // Predicated region
    $region14: #{mymlp_mixer_forward.5} parent=1 // pred_check
      _
    $region15: #{mymlp_mixer_forward.5} parent=1 // pred_check_branch
      %188 = sbr.rel (0) target = $region17
    $region16: #{mymlp_mixer_forward.5} parent=1 // pred_region
      %s190 = ssub.s32 64, 64
      %191 = vsyncadd [#allocation3], %s190
      %s193 = sshll.u32 [#allocation2], 4
      %s194 = int_to_ptr.vmem [resolvable:$true] %s193
      %196 = dma.vmem_to_hbm [thread:$0]  %s194, 64, %s3, [#allocation3]
    $region17: #{mymlp_mixer_forward.5} parent=1 // pred_fallthru
      _
    // Predicated region
    $region18: #{mymlp_mixer_forward.5} parent=1 // pred_check
      _
    $region19: #{mymlp_mixer_forward.5} parent=1 // pred_check_branch
      %198 = sbr.rel (0) target = $region21
    $region20: #{mymlp_mixer_forward.5} parent=1 // pred_region
      %199 = dma.done [#allocation3], 64
    $region21: #{mymlp_mixer_forward.5} parent=1 // pred_fallthru
      _
    %200 = vsyncpa [#allocation3], 1

// kernel: mymlp_mixer_forward.4
$region0: #{mymlp_mixer_forward.4}
  #allocation0 [shape = 'u32[]', space=smem, size = 0x4, offset = 0x4, fixed_abs, tag = 'smem constant byte address 0x4 - core index']
  #allocation1 [shape = 'u32[144,128]{1,0:T(1,128)}', space=vmem, size = 0x12000, scoped, tag = 'internal scratch']
  %s0 = inlined_call_operand.vmem [shape: f32[4,16,128], index: 0, kind: input, shape index: {}, may-alias: {0,13}]
  %s1 = inlined_call_operand.vmem [shape: f32[2,1,128], index: 1, kind: input, shape index: {}]
  %s2 = inlined_call_operand.vmem [shape: f32[2,1,128], index: 2, kind: input, shape index: {}]
  %s3 = inlined_call_operand.vmem [shape: bf16[2,64,16], index: 3, kind: input, shape index: {}]
  %s4 = inlined_call_operand.vmem [shape: f32[2,64,1], index: 4, kind: input, shape index: {}]
  %s5 = inlined_call_operand.vmem [shape: bf16[2,16,64], index: 5, kind: input, shape index: {}]
  %s6 = inlined_call_operand.vmem [shape: f32[2,16,1], index: 6, kind: input, shape index: {}]
  %s7 = inlined_call_operand.vmem [shape: f32[2,1,128], index: 7, kind: input, shape index: {}]
  %s8 = inlined_call_operand.vmem [shape: f32[2,1,128], index: 8, kind: input, shape index: {}]
  %s9 = inlined_call_operand.vmem [shape: bf16[2,128,256], index: 9, kind: input, shape index: {}]
  %s10 = inlined_call_operand.vmem [shape: f32[2,1,256], index: 10, kind: input, shape index: {}]
  %s11 = inlined_call_operand.vmem [shape: bf16[2,256,128], index: 11, kind: input, shape index: {}]
  %s12 = inlined_call_operand.vmem [shape: f32[2,1,128], index: 12, kind: input, shape index: {}]
  %s13 = inlined_call_operand.vmem [shape: f32[4,16,128], index: 13, kind: output, shape index: {}, may-alias: {0,13}]
  %s14 = sld [smem:[#allocation0]]
  $region89: #{mymlp_mixer_forward.4} parent=0
    _
  %s16 = ssub.s32 1, %s14
  %s17 = scalar_select 0, %s16, %s14
  loop: start=0, step=1, limit=6
  $region2: #{mymlp_mixer_forward.4} parent=0 // loop_pre_header
    _
  $region3: #{mymlp_mixer_forward.4} parent=0 // loop_header
    %s19 = sphi 0, %s23
    %p20 = scmp.ge.s32.totalorder %s19, 6
    %s26 = sphi 0, %s38
    %s27 = sphi 0, %s34
    %s28 = sphi 0, %s26
    %s29 = sphi 0, %s27
    %s30 = sphi 0, %s28
    %s31 = sphi 0, %s29
    %s41 = sphi 0, %s43
    %s44 = sphi 0, %s41
    %s45 = sphi 0, %s44
    %s61 = sphi 0, %s45
    %s67 = sphi 0, %s69
    %s70 = sphi 0, %s67
    %s71 = sphi 0, %s70
    %s87 = sphi 0, %s71
    %s93 = sphi 0, %s95
    %s96 = sphi 0, %s93
    %s97 = sphi 0, %s96
    %s113 = sphi 0, %s97
    %s119 = sphi 0, %s121
    %s122 = sphi 0, %s119
    %s123 = sphi 0, %s122
    %s139 = sphi 0, %s123
    %s145 = sphi 0, %s147
    %s148 = sphi 0, %s145
    %s149 = sphi 0, %s148
    %s165 = sphi 0, %s149
    %s171 = sphi 0, %s173
    %s174 = sphi 0, %s171
    %s175 = sphi 0, %s174
    %s191 = sphi 0, %s175
    %s197 = sphi 0, %s199
    %s200 = sphi 0, %s197
    %s201 = sphi 0, %s200
    %s217 = sphi 0, %s201
    %s223 = sphi 0, %s225
    %s226 = sphi 0, %s223
    %s227 = sphi 0, %s226
    %s243 = sphi 0, %s227
    %s249 = sphi 0, %s251
    %s252 = sphi 0, %s249
    %s253 = sphi 0, %s252
    %s269 = sphi 0, %s253
    %s275 = sphi 0, %s277
    %s278 = sphi 0, %s275
    %s279 = sphi 0, %s278
    %s295 = sphi 0, %s279
    %s301 = sphi 0, %s303
    %s304 = sphi 0, %s301
    %s305 = sphi 0, %s304
    %s321 = sphi 0, %s305
    %s327 = sphi 0, %s329
    %s330 = sphi 0, %s327
    %s331 = sphi 0, %s330
    %s347 = sphi 0, %s331
    %s353 = sphi 0, %s355
    %s356 = sphi 0, %s353
    %s357 = sphi 0, %s356
    %s373 = sphi 0, %s357
    %s379 = sphi 0, %s381
    %s382 = sphi 0, %s379
    %s383 = sphi 0, %s382
    %s399 = sphi 0, %s383
  $region4: #{mymlp_mixer_forward.4} parent=0 // loop_header_branch
    %22 = sbr.rel (%p20) target = $region8
  $region5: #{mymlp_mixer_forward.4} parent=0 // loop_body
    %s24 = ssub.s32 %s19, 1
    %s25 = ssub.s32 %s19, 2
    %s32 = sadd.s32 1, %s27
    %p33 = scmp.ge.s32.totalorder %s32, 2
    %s34 = scalar_select %p33, 0, %s32
    %s35 = sadd.s32 1, %s26
    %s36 = scalar_select %p33, %s35, %s26
    %p37 = scmp.ge.s32.totalorder %s36, 2
    %s38 = scalar_select %p37, 0, %s36
    %s39 = ssub.s32 %s26, %s38
    %p40 = scmp.eq.s32.totalorder %s39, 0
    %s42 = sadd.s32 %s41, 1
    %s43 = scalar_select %p40, %s41, %s42
    %p46 = pneg %p40
    %p47 = scmp.eq.s32.totalorder %s19, 3
    %p48 = por %p46, %p47
    %p49 = scmp.ne.s32.totalorder %s41, %s44
    %p50 = scmp.eq.s32.totalorder %s19, 0
    %p51 = por %p49, %p50
    %p52 = scmp.ne.s32.totalorder %s41, %s44
    %p53 = scmp.eq.s32.totalorder %s24, 3
    %p54 = por %p52, %p53
    %p55 = scmp.ne.s32.totalorder %s44, %s45
    %p56 = scmp.eq.s32.totalorder %s24, 0
    %p57 = por %p55, %p56
    %p58 = scmp.ne.s32.totalorder %s44, %s45
    %p59 = scmp.eq.s32.totalorder %s25, 3
    %p60 = por %p58, %p59
    %p62 = scmp.ne.s32.totalorder %s45, %s61
    %p63 = scmp.eq.s32.totalorder %s25, 0
    %p64 = por %p62, %p63
    %s65 = ssub.s32 %s27, %s34
    %p66 = scmp.eq.s32.totalorder %s65, 0
    %s68 = sadd.s32 %s67, 1
    %s69 = scalar_select %p66, %s67, %s68
    %p72 = pneg %p66
    %p73 = scmp.eq.s32.totalorder %s19, 3
    %p74 = por %p72, %p73
    %p75 = scmp.ne.s32.totalorder %s67, %s70
    %p76 = scmp.eq.s32.totalorder %s19, 0
    %p77 = por %p75, %p76
    %p78 = scmp.ne.s32.totalorder %s67, %s70
    %p79 = scmp.eq.s32.totalorder %s24, 3
    %p80 = por %p78, %p79
    %p81 = scmp.ne.s32.totalorder %s70, %s71
    %p82 = scmp.eq.s32.totalorder %s24, 0
    %p83 = por %p81, %p82
    %p84 = scmp.ne.s32.totalorder %s70, %s71
    %p85 = scmp.eq.s32.totalorder %s25, 3
    %p86 = por %p84, %p85
    %p88 = scmp.ne.s32.totalorder %s71, %s87
    %p89 = scmp.eq.s32.totalorder %s25, 0
    %p90 = por %p88, %p89
    %s91 = ssub.s32 %s27, %s34
    %p92 = scmp.eq.s32.totalorder %s91, 0
    %s94 = sadd.s32 %s93, 1
    %s95 = scalar_select %p92, %s93, %s94
    %p98 = pneg %p92
    %p99 = scmp.eq.s32.totalorder %s19, 3
    %p100 = por %p98, %p99
    %p101 = scmp.ne.s32.totalorder %s93, %s96
    %p102 = scmp.eq.s32.totalorder %s19, 0
    %p103 = por %p101, %p102
    %p104 = scmp.ne.s32.totalorder %s93, %s96
    %p105 = scmp.eq.s32.totalorder %s24, 3
    %p106 = por %p104, %p105
    %p107 = scmp.ne.s32.totalorder %s96, %s97
    %p108 = scmp.eq.s32.totalorder %s24, 0
    %p109 = por %p107, %p108
    %p110 = scmp.ne.s32.totalorder %s96, %s97
    %p111 = scmp.eq.s32.totalorder %s25, 3
    %p112 = por %p110, %p111
    %p114 = scmp.ne.s32.totalorder %s97, %s113
    %p115 = scmp.eq.s32.totalorder %s25, 0
    %p116 = por %p114, %p115
    %s117 = ssub.s32 %s27, %s34
    %p118 = scmp.eq.s32.totalorder %s117, 0
    %s120 = sadd.s32 %s119, 1
    %s121 = scalar_select %p118, %s119, %s120
    %p124 = pneg %p118
    %p125 = scmp.eq.s32.totalorder %s19, 3
    %p126 = por %p124, %p125
    %p127 = scmp.ne.s32.totalorder %s119, %s122
    %p128 = scmp.eq.s32.totalorder %s19, 0
    %p129 = por %p127, %p128
    %p130 = scmp.ne.s32.totalorder %s119, %s122
    %p131 = scmp.eq.s32.totalorder %s24, 3
    %p132 = por %p130, %p131
    %p133 = scmp.ne.s32.totalorder %s122, %s123
    %p134 = scmp.eq.s32.totalorder %s24, 0
    %p135 = por %p133, %p134
    %p136 = scmp.ne.s32.totalorder %s122, %s123
    %p137 = scmp.eq.s32.totalorder %s25, 3
    %p138 = por %p136, %p137
    %p140 = scmp.ne.s32.totalorder %s123, %s139
    %p141 = scmp.eq.s32.totalorder %s25, 0
    %p142 = por %p140, %p141
    %s143 = ssub.s32 %s27, %s34
    %p144 = scmp.eq.s32.totalorder %s143, 0
    %s146 = sadd.s32 %s145, 1
    %s147 = scalar_select %p144, %s145, %s146
    %p150 = pneg %p144
    %p151 = scmp.eq.s32.totalorder %s19, 3
    %p152 = por %p150, %p151
    %p153 = scmp.ne.s32.totalorder %s145, %s148
    %p154 = scmp.eq.s32.totalorder %s19, 0
    %p155 = por %p153, %p154
    %p156 = scmp.ne.s32.totalorder %s145, %s148
    %p157 = scmp.eq.s32.totalorder %s24, 3
    %p158 = por %p156, %p157
    %p159 = scmp.ne.s32.totalorder %s148, %s149
    %p160 = scmp.eq.s32.totalorder %s24, 0
    %p161 = por %p159, %p160
    %p162 = scmp.ne.s32.totalorder %s148, %s149
    %p163 = scmp.eq.s32.totalorder %s25, 3
    %p164 = por %p162, %p163
    %p166 = scmp.ne.s32.totalorder %s149, %s165
    %p167 = scmp.eq.s32.totalorder %s25, 0
    %p168 = por %p166, %p167
    %s169 = ssub.s32 %s27, %s34
    %p170 = scmp.eq.s32.totalorder %s169, 0
    %s172 = sadd.s32 %s171, 1
    %s173 = scalar_select %p170, %s171, %s172
    %p176 = pneg %p170
    %p177 = scmp.eq.s32.totalorder %s19, 3
    %p178 = por %p176, %p177
    %p179 = scmp.ne.s32.totalorder %s171, %s174
    %p180 = scmp.eq.s32.totalorder %s19, 0
    %p181 = por %p179, %p180
    %p182 = scmp.ne.s32.totalorder %s171, %s174
    %p183 = scmp.eq.s32.totalorder %s24, 3
    %p184 = por %p182, %p183
    %p185 = scmp.ne.s32.totalorder %s174, %s175
    %p186 = scmp.eq.s32.totalorder %s24, 0
    %p187 = por %p185, %p186
    %p188 = scmp.ne.s32.totalorder %s174, %s175
    %p189 = scmp.eq.s32.totalorder %s25, 3
    %p190 = por %p188, %p189
    %p192 = scmp.ne.s32.totalorder %s175, %s191
    %p193 = scmp.eq.s32.totalorder %s25, 0
    %p194 = por %p192, %p193
    %s195 = ssub.s32 %s27, %s34
    %p196 = scmp.eq.s32.totalorder %s195, 0
    %s198 = sadd.s32 %s197, 1
    %s199 = scalar_select %p196, %s197, %s198
    %p202 = pneg %p196
    %p203 = scmp.eq.s32.totalorder %s19, 3
    %p204 = por %p202, %p203
    %p205 = scmp.ne.s32.totalorder %s197, %s200
    %p206 = scmp.eq.s32.totalorder %s19, 0
    %p207 = por %p205, %p206
    %p208 = scmp.ne.s32.totalorder %s197, %s200
    %p209 = scmp.eq.s32.totalorder %s24, 3
    %p210 = por %p208, %p209
    %p211 = scmp.ne.s32.totalorder %s200, %s201
    %p212 = scmp.eq.s32.totalorder %s24, 0
    %p213 = por %p211, %p212
    %p214 = scmp.ne.s32.totalorder %s200, %s201
    %p215 = scmp.eq.s32.totalorder %s25, 3
    %p216 = por %p214, %p215
    %p218 = scmp.ne.s32.totalorder %s201, %s217
    %p219 = scmp.eq.s32.totalorder %s25, 0
    %p220 = por %p218, %p219
    %s221 = ssub.s32 %s27, %s34
    %p222 = scmp.eq.s32.totalorder %s221, 0
    %s224 = sadd.s32 %s223, 1
    %s225 = scalar_select %p222, %s223, %s224
    %p228 = pneg %p222
    %p229 = scmp.eq.s32.totalorder %s19, 3
    %p230 = por %p228, %p229
    %p231 = scmp.ne.s32.totalorder %s223, %s226
    %p232 = scmp.eq.s32.totalorder %s19, 0
    %p233 = por %p231, %p232
    %p234 = scmp.ne.s32.totalorder %s223, %s226
    %p235 = scmp.eq.s32.totalorder %s24, 3
    %p236 = por %p234, %p235
    %p237 = scmp.ne.s32.totalorder %s226, %s227
    %p238 = scmp.eq.s32.totalorder %s24, 0
    %p239 = por %p237, %p238
    %p240 = scmp.ne.s32.totalorder %s226, %s227
    %p241 = scmp.eq.s32.totalorder %s25, 3
    %p242 = por %p240, %p241
    %p244 = scmp.ne.s32.totalorder %s227, %s243
    %p245 = scmp.eq.s32.totalorder %s25, 0
    %p246 = por %p244, %p245
    %s247 = ssub.s32 %s27, %s34
    %p248 = scmp.eq.s32.totalorder %s247, 0
    %s250 = sadd.s32 %s249, 1
    %s251 = scalar_select %p248, %s249, %s250
    %p254 = pneg %p248
    %p255 = scmp.eq.s32.totalorder %s19, 3
    %p256 = por %p254, %p255
    %p257 = scmp.ne.s32.totalorder %s249, %s252
    %p258 = scmp.eq.s32.totalorder %s19, 0
    %p259 = por %p257, %p258
    %p260 = scmp.ne.s32.totalorder %s249, %s252
    %p261 = scmp.eq.s32.totalorder %s24, 3
    %p262 = por %p260, %p261
    %p263 = scmp.ne.s32.totalorder %s252, %s253
    %p264 = scmp.eq.s32.totalorder %s24, 0
    %p265 = por %p263, %p264
    %p266 = scmp.ne.s32.totalorder %s252, %s253
    %p267 = scmp.eq.s32.totalorder %s25, 3
    %p268 = por %p266, %p267
    %p270 = scmp.ne.s32.totalorder %s253, %s269
    %p271 = scmp.eq.s32.totalorder %s25, 0
    %p272 = por %p270, %p271
    %s273 = ssub.s32 %s27, %s34
    %p274 = scmp.eq.s32.totalorder %s273, 0
    %s276 = sadd.s32 %s275, 1
    %s277 = scalar_select %p274, %s275, %s276
    %p280 = pneg %p274
    %p281 = scmp.eq.s32.totalorder %s19, 3
    %p282 = por %p280, %p281
    %p283 = scmp.ne.s32.totalorder %s275, %s278
    %p284 = scmp.eq.s32.totalorder %s19, 0
    %p285 = por %p283, %p284
    %p286 = scmp.ne.s32.totalorder %s275, %s278
    %p287 = scmp.eq.s32.totalorder %s24, 3
    %p288 = por %p286, %p287
    %p289 = scmp.ne.s32.totalorder %s278, %s279
    %p290 = scmp.eq.s32.totalorder %s24, 0
    %p291 = por %p289, %p290
    %p292 = scmp.ne.s32.totalorder %s278, %s279
    %p293 = scmp.eq.s32.totalorder %s25, 3
    %p294 = por %p292, %p293
    %p296 = scmp.ne.s32.totalorder %s279, %s295
    %p297 = scmp.eq.s32.totalorder %s25, 0
    %p298 = por %p296, %p297
    %s299 = ssub.s32 %s27, %s34
    %p300 = scmp.eq.s32.totalorder %s299, 0
    %s302 = sadd.s32 %s301, 1
    %s303 = scalar_select %p300, %s301, %s302
    %p306 = pneg %p300
    %p307 = scmp.eq.s32.totalorder %s19, 3
    %p308 = por %p306, %p307
    %p309 = scmp.ne.s32.totalorder %s301, %s304
    %p310 = scmp.eq.s32.totalorder %s19, 0
    %p311 = por %p309, %p310
    %p312 = scmp.ne.s32.totalorder %s301, %s304
    %p313 = scmp.eq.s32.totalorder %s24, 3
    %p314 = por %p312, %p313
    %p315 = scmp.ne.s32.totalorder %s304, %s305
    %p316 = scmp.eq.s32.totalorder %s24, 0
    %p317 = por %p315, %p316
    %p318 = scmp.ne.s32.totalorder %s304, %s305
    %p319 = scmp.eq.s32.totalorder %s25, 3
    %p320 = por %p318, %p319
    %p322 = scmp.ne.s32.totalorder %s305, %s321
    %p323 = scmp.eq.s32.totalorder %s25, 0
    %p324 = por %p322, %p323
    %s325 = ssub.s32 %s27, %s34
    %p326 = scmp.eq.s32.totalorder %s325, 0
    %s328 = sadd.s32 %s327, 1
    %s329 = scalar_select %p326, %s327, %s328
    %p332 = pneg %p326
    %p333 = scmp.eq.s32.totalorder %s19, 3
    %p334 = por %p332, %p333
    %p335 = scmp.ne.s32.totalorder %s327, %s330
    %p336 = scmp.eq.s32.totalorder %s19, 0
    %p337 = por %p335, %p336
    %p338 = scmp.ne.s32.totalorder %s327, %s330
    %p339 = scmp.eq.s32.totalorder %s24, 3
    %p340 = por %p338, %p339
    %p341 = scmp.ne.s32.totalorder %s330, %s331
    %p342 = scmp.eq.s32.totalorder %s24, 0
    %p343 = por %p341, %p342
    %p344 = scmp.ne.s32.totalorder %s330, %s331
    %p345 = scmp.eq.s32.totalorder %s25, 3
    %p346 = por %p344, %p345
    %p348 = scmp.ne.s32.totalorder %s331, %s347
    %p349 = scmp.eq.s32.totalorder %s25, 0
    %p350 = por %p348, %p349
    %s351 = ssub.s32 %s27, %s34
    %p352 = scmp.eq.s32.totalorder %s351, 0
    %s354 = sadd.s32 %s353, 1
    %s355 = scalar_select %p352, %s353, %s354
    %p358 = pneg %p352
    %p359 = scmp.eq.s32.totalorder %s19, 3
    %p360 = por %p358, %p359
    %p361 = scmp.ne.s32.totalorder %s353, %s356
    %p362 = scmp.eq.s32.totalorder %s19, 0
    %p363 = por %p361, %p362
    %p364 = scmp.ne.s32.totalorder %s353, %s356
    %p365 = scmp.eq.s32.totalorder %s24, 3
    %p366 = por %p364, %p365
    %p367 = scmp.ne.s32.totalorder %s356, %s357
    %p368 = scmp.eq.s32.totalorder %s24, 0
    %p369 = por %p367, %p368
    %p370 = scmp.ne.s32.totalorder %s356, %s357
    %p371 = scmp.eq.s32.totalorder %s25, 3
    %p372 = por %p370, %p371
    %p374 = scmp.ne.s32.totalorder %s357, %s373
    %p375 = scmp.eq.s32.totalorder %s25, 0
    %p376 = por %p374, %p375
    %s377 = ssub.s32 %s26, %s38
    %p378 = scmp.eq.s32.totalorder %s377, 0
    %s380 = sadd.s32 %s379, 1
    %s381 = scalar_select %p378, %s379, %s380
    %p384 = pneg %p378
    %p385 = scmp.eq.s32.totalorder %s19, 3
    %p386 = por %p384, %p385
    %p387 = scmp.ne.s32.totalorder %s379, %s382
    %p388 = scmp.eq.s32.totalorder %s19, 0
    %p389 = por %p387, %p388
    %p390 = scmp.ne.s32.totalorder %s379, %s382
    %p391 = scmp.eq.s32.totalorder %s24, 3
    %p392 = por %p390, %p391
    %p393 = scmp.ne.s32.totalorder %s382, %s383
    %p394 = scmp.eq.s32.totalorder %s24, 0
    %p395 = por %p393, %p394
    %p396 = scmp.ne.s32.totalorder %s382, %s383
    %p397 = scmp.eq.s32.totalorder %s25, 3
    %p398 = por %p396, %p397
    %p400 = scmp.ne.s32.totalorder %s383, %s399
    %p401 = scmp.eq.s32.totalorder %s25, 0
    %p402 = por %p400, %p401
    %p403 = scmp.le.s32.totalorder 1, %s19
    %p404 = scmp.lt.s32.totalorder %s19, 5
    %p405 = pnand %p403, %p404
    %p406 = pneg %p405
    // Predicated region
    $region9: #{mymlp_mixer_forward.4} parent=5 // pred_check
      _
    $region10: #{mymlp_mixer_forward.4} parent=5 // pred_check_branch
      %408 = sbr.rel (%p405) target = $region12
    $region11: #{mymlp_mixer_forward.4} parent=5 // pred_region
      %s409 = ssub.s32 %s19, 1
    $region12: #{mymlp_mixer_forward.4} parent=5 // pred_fallthru
      _
    %p410 = scmp.lt.s32.totalorder %s19, 4
    // Predicated region
    $region13: #{mymlp_mixer_forward.4} parent=5 // pred_check
      %p411 = pneg %p410
    $region14: #{mymlp_mixer_forward.4} parent=5 // pred_check_branch
      %413 = sbr.rel (%p411) target = $region16
    $region15: #{mymlp_mixer_forward.4} parent=5 // pred_region
      // Predicated region
      $region17: #{mymlp_mixer_forward.4} parent=15 // pred_check
        %p414 = pneg %p51
      $region18: #{mymlp_mixer_forward.4} parent=15 // pred_check_branch
        %416 = sbr.rel (%p414) target = $region20
      $region19: #{mymlp_mixer_forward.4} parent=15 // pred_region
        %s417 = smul.u32 2, %s26
        %p418 = scmp.lt.s32.totalorder %s417, 3
        %s419 = scalar_select %p418, %s417, 3
        %s420 = smul.addr %s419, 2
        %s421 = smul.addr %s420, 8
        %s422 = scalar_lea.vmem %s0, %s421
        %s423 = smul.u32 2, %s26
      $region20: #{mymlp_mixer_forward.4} parent=15 // pred_fallthru
        _
      // Predicated region
      $region21: #{mymlp_mixer_forward.4} parent=15 // pred_check
        %p424 = pneg %p77
      $region22: #{mymlp_mixer_forward.4} parent=15 // pred_check_branch
        %426 = sbr.rel (%p424) target = $region24
      $region23: #{mymlp_mixer_forward.4} parent=15 // pred_region
        %p427 = scmp.lt.s32.totalorder %s27, 1
        %s428 = scalar_select %p427, %s27, 1
        %s429 = scalar_lea.vmem %s1, %s428
      $region24: #{mymlp_mixer_forward.4} parent=15 // pred_fallthru
        _
      // Predicated region
      $region25: #{mymlp_mixer_forward.4} parent=15 // pred_check
        %p430 = pneg %p103
      $region26: #{mymlp_mixer_forward.4} parent=15 // pred_check_branch
        %432 = sbr.rel (%p430) target = $region28
      $region27: #{mymlp_mixer_forward.4} parent=15 // pred_region
        %p433 = scmp.lt.s32.totalorder %s27, 1
        %s434 = scalar_select %p433, %s27, 1
        %s435 = scalar_lea.vmem %s2, %s434
      $region28: #{mymlp_mixer_forward.4} parent=15 // pred_fallthru
        _
      // Predicated region
      $region29: #{mymlp_mixer_forward.4} parent=15 // pred_check
        %p436 = pneg %p129
      $region30: #{mymlp_mixer_forward.4} parent=15 // pred_check_branch
        %438 = sbr.rel (%p436) target = $region32
      $region31: #{mymlp_mixer_forward.4} parent=15 // pred_region
        %p439 = scmp.lt.s32.totalorder %s27, 1
        %s440 = scalar_select %p439, %s27, 1
        %s441 = smul.addr %s440, 8
        %s442 = smul.addr %s441, 4
        %s443 = scalar_lea.vmem %s3, %s442
      $region32: #{mymlp_mixer_forward.4} parent=15 // pred_fallthru
        _
      // Predicated region
      $region33: #{mymlp_mixer_forward.4} parent=15 // pred_check
        %p444 = pneg %p155
      $region34: #{mymlp_mixer_forward.4} parent=15 // pred_check_branch
        %446 = sbr.rel (%p444) target = $region36
      $region35: #{mymlp_mixer_forward.4} parent=15 // pred_region
        %p447 = scmp.lt.s32.totalorder %s27, 1
        %s448 = scalar_select %p447, %s27, 1
        %s449 = smul.addr %s448, 8
        %s450 = smul.addr %s449, 8
        %s451 = scalar_lea.vmem %s4, %s450
      $region36: #{mymlp_mixer_forward.4} parent=15 // pred_fallthru
        _
      // Predicated region
      $region37: #{mymlp_mixer_forward.4} parent=15 // pred_check
        %p452 = pneg %p181
      $region38: #{mymlp_mixer_forward.4} parent=15 // pred_check_branch
        %454 = sbr.rel (%p452) target = $region40
      $region39: #{mymlp_mixer_forward.4} parent=15 // pred_region
        %p455 = scmp.lt.s32.totalorder %s27, 1
        %s456 = scalar_select %p455, %s27, 1
        %s457 = smul.addr %s456, 2
        %s458 = smul.addr %s457, 4
        %s459 = scalar_lea.vmem %s5, %s458
      $region40: #{mymlp_mixer_forward.4} parent=15 // pred_fallthru
        _
      // Predicated region
      $region41: #{mymlp_mixer_forward.4} parent=15 // pred_check
        %p460 = pneg %p207
      $region42: #{mymlp_mixer_forward.4} parent=15 // pred_check_branch
        %462 = sbr.rel (%p460) target = $region44
      $region43: #{mymlp_mixer_forward.4} parent=15 // pred_region
        %p463 = scmp.lt.s32.totalorder %s27, 1
        %s464 = scalar_select %p463, %s27, 1
        %s465 = smul.addr %s464, 2
        %s466 = smul.addr %s465, 8
        %s467 = scalar_lea.vmem %s6, %s466
      $region44: #{mymlp_mixer_forward.4} parent=15 // pred_fallthru
        _
      // Predicated region
      $region45: #{mymlp_mixer_forward.4} parent=15 // pred_check
        %p468 = pneg %p233
      $region46: #{mymlp_mixer_forward.4} parent=15 // pred_check_branch
        %470 = sbr.rel (%p468) target = $region48
      $region47: #{mymlp_mixer_forward.4} parent=15 // pred_region
        %p471 = scmp.lt.s32.totalorder %s27, 1
        %s472 = scalar_select %p471, %s27, 1
        %s473 = scalar_lea.vmem %s7, %s472
      $region48: #{mymlp_mixer_forward.4} parent=15 // pred_fallthru
        _
      // Predicated region
      $region49: #{mymlp_mixer_forward.4} parent=15 // pred_check
        %p474 = pneg %p259
      $region50: #{mymlp_mixer_forward.4} parent=15 // pred_check_branch
        %476 = sbr.rel (%p474) target = $region52
      $region51: #{mymlp_mixer_forward.4} parent=15 // pred_region
        %p477 = scmp.lt.s32.totalorder %s27, 1
        %s478 = scalar_select %p477, %s27, 1
        %s479 = scalar_lea.vmem %s8, %s478
      $region52: #{mymlp_mixer_forward.4} parent=15 // pred_fallthru
        _
      // Predicated region
      $region53: #{mymlp_mixer_forward.4} parent=15 // pred_check
        %p480 = pneg %p285
      $region54: #{mymlp_mixer_forward.4} parent=15 // pred_check_branch
        %482 = sbr.rel (%p480) target = $region56
      $region55: #{mymlp_mixer_forward.4} parent=15 // pred_region
        %p483 = scmp.lt.s32.totalorder %s27, 1
        %s484 = scalar_select %p483, %s27, 1
        %s485 = smul.addr %s484, 32
        %s486 = smul.addr %s485, 4
        %s487 = scalar_lea.vmem %s9, %s486
      $region56: #{mymlp_mixer_forward.4} parent=15 // pred_fallthru
        _
      // Predicated region
      $region57: #{mymlp_mixer_forward.4} parent=15 // pred_check
        %p488 = pneg %p311
      $region58: #{mymlp_mixer_forward.4} parent=15 // pred_check_branch
        %490 = sbr.rel (%p488) target = $region60
      $region59: #{mymlp_mixer_forward.4} parent=15 // pred_region
        %p491 = scmp.lt.s32.totalorder %s27, 1
        %s492 = scalar_select %p491, %s27, 1
        %s493 = smul.addr %s492, 2
        %s494 = scalar_lea.vmem %s10, %s493
      $region60: #{mymlp_mixer_forward.4} parent=15 // pred_fallthru
        _
      // Predicated region
      $region61: #{mymlp_mixer_forward.4} parent=15 // pred_check
        %p495 = pneg %p337
      $region62: #{mymlp_mixer_forward.4} parent=15 // pred_check_branch
        %497 = sbr.rel (%p495) target = $region64
      $region63: #{mymlp_mixer_forward.4} parent=15 // pred_region
        %p498 = scmp.lt.s32.totalorder %s27, 1
        %s499 = scalar_select %p498, %s27, 1
        %s500 = smul.addr %s499, 32
        %s501 = smul.addr %s500, 4
        %s502 = scalar_lea.vmem %s11, %s501
      $region64: #{mymlp_mixer_forward.4} parent=15 // pred_fallthru
        _
      // Predicated region
      $region65: #{mymlp_mixer_forward.4} parent=15 // pred_check
        %p503 = pneg %p363
      $region66: #{mymlp_mixer_forward.4} parent=15 // pred_check_branch
        %505 = sbr.rel (%p503) target = $region68
      $region67: #{mymlp_mixer_forward.4} parent=15 // pred_region
        %p506 = scmp.lt.s32.totalorder %s27, 1
        %s507 = scalar_select %p506, %s27, 1
        %s508 = scalar_lea.vmem %s12, %s507
      $region68: #{mymlp_mixer_forward.4} parent=15 // pred_fallthru
        _
    $region16: #{mymlp_mixer_forward.4} parent=5 // pred_fallthru
      _
    %p509 = scmp.le.s32.totalorder 1, %s19
    %p510 = scmp.lt.s32.totalorder %s19, 5
    %p511 = pnand %p509, %p510
    %p512 = pneg %p511
    // Predicated region
    $region69: #{mymlp_mixer_forward.4} parent=5 // pred_check
      _
    $region70: #{mymlp_mixer_forward.4} parent=5 // pred_check_branch
      %514 = sbr.rel (%p511) target = $region72
    $region71: #{mymlp_mixer_forward.4} parent=5 // pred_region
      %s515 = ssub.s32 %s19, 1
      %s516 = smul.u32 2, %s28
      %p517 = scmp.lt.s32.totalorder %s516, 3
      %s518 = scalar_select %p517, %s516, 3
      %s519 = smul.addr %s518, 2
      %s520 = smul.addr %s519, 8
      %s521 = scalar_lea.vmem %s0, %s520
      %p522 = pneg %p57
      %p523 = pneg %p54
      %p524 = scmp.lt.s32.totalorder %s29, 1
      %s525 = scalar_select %p524, %s29, 1
      %s526 = scalar_lea.vmem %s1, %s525
      %p527 = pneg %p83
      %p528 = pneg %p80
      %p529 = scmp.lt.s32.totalorder %s29, 1
      %s530 = scalar_select %p529, %s29, 1
      %s531 = scalar_lea.vmem %s2, %s530
      %p532 = pneg %p109
      %p533 = pneg %p106
      %p534 = scmp.lt.s32.totalorder %s29, 1
      %s535 = scalar_select %p534, %s29, 1
      %s536 = smul.addr %s535, 8
      %s537 = smul.addr %s536, 4
      %s538 = scalar_lea.vmem %s3, %s537
      %p539 = pneg %p135
      %p540 = pneg %p132
      %p541 = scmp.lt.s32.totalorder %s29, 1
      %s542 = scalar_select %p541, %s29, 1
      %s543 = smul.addr %s542, 8
      %s544 = smul.addr %s543, 8
      %s545 = scalar_lea.vmem %s4, %s544
      %p546 = pneg %p161
      %p547 = pneg %p158
      %p548 = scmp.lt.s32.totalorder %s29, 1
      %s549 = scalar_select %p548, %s29, 1
      %s550 = smul.addr %s549, 2
      %s551 = smul.addr %s550, 4
      %s552 = scalar_lea.vmem %s5, %s551
      %p553 = pneg %p187
      %p554 = pneg %p184
      %p555 = scmp.lt.s32.totalorder %s29, 1
      %s556 = scalar_select %p555, %s29, 1
      %s557 = smul.addr %s556, 2
      %s558 = smul.addr %s557, 8
      %s559 = scalar_lea.vmem %s6, %s558
      %p560 = pneg %p213
      %p561 = pneg %p210
      %p562 = scmp.lt.s32.totalorder %s29, 1
      %s563 = scalar_select %p562, %s29, 1
      %s564 = scalar_lea.vmem %s7, %s563
      %p565 = pneg %p239
      %p566 = pneg %p236
      %p567 = scmp.lt.s32.totalorder %s29, 1
      %s568 = scalar_select %p567, %s29, 1
      %s569 = scalar_lea.vmem %s8, %s568
      %p570 = pneg %p265
      %p571 = pneg %p262
      %p572 = scmp.lt.s32.totalorder %s29, 1
      %s573 = scalar_select %p572, %s29, 1
      %s574 = smul.addr %s573, 32
      %s575 = smul.addr %s574, 4
      %s576 = scalar_lea.vmem %s9, %s575
      %p577 = pneg %p291
      %p578 = pneg %p288
      %p579 = scmp.lt.s32.totalorder %s29, 1
      %s580 = scalar_select %p579, %s29, 1
      %s581 = smul.addr %s580, 2
      %s582 = scalar_lea.vmem %s10, %s581
      %p583 = pneg %p317
      %p584 = pneg %p314
      %p585 = scmp.lt.s32.totalorder %s29, 1
      %s586 = scalar_select %p585, %s29, 1
      %s587 = smul.addr %s586, 32
      %s588 = smul.addr %s587, 4
      %s589 = scalar_lea.vmem %s11, %s588
      %p590 = pneg %p343
      %p591 = pneg %p340
      %p592 = scmp.lt.s32.totalorder %s29, 1
      %s593 = scalar_select %p592, %s29, 1
      %s594 = scalar_lea.vmem %s12, %s593
      %p595 = pneg %p369
      %p596 = pneg %p366
      %p597 = pneg %p395
      %p598 = pneg %p392
      %s599 = smul.u32 2, %s28
      %p600 = scmp.lt.s32.totalorder %s599, 3
      %s601 = scalar_select %p600, %s599, 3
      %s602 = smul.addr %s601, 2
      %s603 = smul.addr %s602, 8
      %s604 = scalar_lea.vmem %s13, %s603
      %s605 = smul.u32 2, %s28
      %p606 = scmp.lt.s32.totalorder %s605, 3
      %s607 = scalar_select %p606, %s605, 3
      %s608 = smul.addr %s607, 2
      %s609 = smul.addr %s608, 8
      %s610 = scalar_lea.vmem %s0, %s609
      %s611 = smul.u32 2, %s28
      %p612 = scmp.lt.s32.totalorder %s29, 1
      %s613 = scalar_select %p612, %s29, 1
      %s614 = scalar_lea.vmem %s1, %s613
      %p615 = scmp.lt.s32.totalorder %s29, 1
      %s616 = scalar_select %p615, %s29, 1
      %s617 = scalar_lea.vmem %s2, %s616
      %p618 = scmp.lt.s32.totalorder %s29, 1
      %s619 = scalar_select %p618, %s29, 1
      %s620 = smul.addr %s619, 8
      %s621 = smul.addr %s620, 4
      %s622 = scalar_lea.vmem %s3, %s621
      %p623 = scmp.lt.s32.totalorder %s29, 1
      %s624 = scalar_select %p623, %s29, 1
      %s625 = smul.addr %s624, 8
      %s626 = smul.addr %s625, 8
      %s627 = scalar_lea.vmem %s4, %s626
      %p628 = scmp.lt.s32.totalorder %s29, 1
      %s629 = scalar_select %p628, %s29, 1
      %s630 = smul.addr %s629, 2
      %s631 = smul.addr %s630, 4
      %s632 = scalar_lea.vmem %s5, %s631
      %p633 = scmp.lt.s32.totalorder %s29, 1
      %s634 = scalar_select %p633, %s29, 1
      %s635 = smul.addr %s634, 2
      %s636 = smul.addr %s635, 8
      %s637 = scalar_lea.vmem %s6, %s636
      %p638 = scmp.lt.s32.totalorder %s29, 1
      %s639 = scalar_select %p638, %s29, 1
      %s640 = scalar_lea.vmem %s7, %s639
      %p641 = scmp.lt.s32.totalorder %s29, 1
      %s642 = scalar_select %p641, %s29, 1
      %s643 = scalar_lea.vmem %s8, %s642
      %p644 = scmp.lt.s32.totalorder %s29, 1
      %s645 = scalar_select %p644, %s29, 1
      %s646 = smul.addr %s645, 32
      %s647 = smul.addr %s646, 4
      %s648 = scalar_lea.vmem %s9, %s647
      %p649 = scmp.lt.s32.totalorder %s29, 1
      %s650 = scalar_select %p649, %s29, 1
      %s651 = smul.addr %s650, 2
      %s652 = scalar_lea.vmem %s10, %s651
      %p653 = scmp.lt.s32.totalorder %s29, 1
      %s654 = scalar_select %p653, %s29, 1
      %s655 = smul.addr %s654, 32
      %s656 = smul.addr %s655, 4
      %s657 = scalar_lea.vmem %s11, %s656
      %p658 = scmp.lt.s32.totalorder %s29, 1
      %s659 = scalar_select %p658, %s29, 1
      %s660 = scalar_lea.vmem %s12, %s659
      %s661 = smul.u32 2, %s28
      %p662 = scmp.lt.s32.totalorder %s661, 3
      %s663 = scalar_select %p662, %s661, 3
      %s664 = smul.addr %s663, 2
      %s665 = smul.addr %s664, 8
      %s666 = scalar_lea.vmem %s13, %s665
      %s667 = smul.u32 2, %s28
      %p669 = scmp.eq.s32.totalorder %s29, 0
      // Predicated region
      $region73: #{mymlp_mixer_forward.4} parent=71 // pred_check
        %p670 = pneg %p669
      $region74: #{mymlp_mixer_forward.4} parent=71 // pred_check_branch
        %672 = sbr.rel (%p670) target = $region76
      $region75: #{mymlp_mixer_forward.4} parent=71 // pred_region
        %v673 = vld [vmem:[%s610] sm:$0xff]
        %v674 = vld [vmem:[%s610 + $0x8] sm:$0xff]
        %v675 = vld [vmem:[%s610 + $0x10] sm:$0xff]
        %v676 = vld [vmem:[%s610 + $0x18] sm:$0xff]
        %677 = vst [vmem:[%s666] sm:$0xff] %v673
        %678 = vst [vmem:[%s666 + $0x8] sm:$0xff] %v674
        %679 = vst [vmem:[%s666 + $0x10] sm:$0xff] %v675
        %680 = vst [vmem:[%s666 + $0x18] sm:$0xff] %v676
      $region76: #{mymlp_mixer_forward.4} parent=71 // pred_fallthru
        _
      %v681 = vld [vmem:[%s666] sm:$0xff]
      %v682 = vld [vmem:[%s666 + $0x8] sm:$0xff]
      %v683 = vld [vmem:[%s614] sm:$0x1]
      %v684 = vld [vmem:[%s617] sm:$0x1]
      %685 = vadd.xlane.f32.xlu0 %v681
      %v686 = vpop.xlane.xlu0 %685
      %687 = vadd.xlane.f32.xlu0 %v682
      %v688 = vpop.xlane.xlu0 %687
      %v689 = vrcp.pop 128.0
      %v690 = vmul.f32 %v686, %v689
      %v691 = vmul.f32 %v688, %v689
      %v692 = vsub.f32 %v681, %v690
      %v693 = vsub.f32 %v682, %v691
      %v694 = vmul.f32 %v692, %v692
      %v695 = vmul.f32 %v693, %v693
      %696 = vadd.xlane.f32.xlu0 %v694
      %v697 = vpop.xlane.xlu0 %696
      %698 = vadd.xlane.f32.xlu0 %v695
      %v699 = vpop.xlane.xlu0 %698
      %v700 = vmul.f32 %v697, %v689
      %v701 = vmul.f32 %v699, %v689
      %v702 = vadd.f32 %v700, 1e-06
      %v703 = vadd.f32 %v701, 1e-06
      %v704 = vrsqrt.pop %v702
      %v705 = vrsqrt.pop %v703
      %v706 = vmul.f32 %v692, %v704
      %v707 = vmul.f32 %v693, %v705
      %v709 = vlaneseq
      %v710 = vshrl.u32 %v709, 7
      %v711 = vsub.s32 0, %v710
      %v712 = vrot.slane %v683, %v711
      %v714 = vmul.f32 %v706, %v712
      %v715 = vmul.f32 %v707, %v712
      %v717 = vlaneseq
      %v718 = vshrl.u32 %v717, 7
      %v719 = vsub.s32 0, %v718
      %v720 = vrot.slane %v684, %v719
      %v722 = vadd.f32 %v714, %v720
      %v723 = vadd.f32 %v715, %v720
      %v724 = vpack.c.bf16 %v723, %v722
      %v725 = vld [vmem:[%s622] sm:$0xf]
      %v726 = vld [vmem:[%s622 + $0x4] sm:$0xf]
      %v727 = vld [vmem:[%s622 + $0x8] sm:$0xf]
      %v728 = vld [vmem:[%s622 + $0xc] sm:$0xf]
      %v729 = vld [vmem:[%s622 + $0x10] sm:$0xf]
      %v730 = vld [vmem:[%s622 + $0x14] sm:$0xf]
      %v731 = vld [vmem:[%s622 + $0x18] sm:$0xf]
      %v732 = vld [vmem:[%s622 + $0x1c] sm:$0xf]
      %v733 = vld [vmem:[%s627] sm:$0xff]
      %v734 = vld [vmem:[%s627 + $0x8] sm:$0xff]
      %v735 = vld [vmem:[%s627 + $0x10] sm:$0xff]
      %v736 = vld [vmem:[%s627 + $0x18] sm:$0xff]
      %v737 = vld [vmem:[%s627 + $0x20] sm:$0xff]
      %v738 = vld [vmem:[%s627 + $0x28] sm:$0xff]
      %v739 = vld [vmem:[%s627 + $0x30] sm:$0xff]
      %v740 = vld [vmem:[%s627 + $0x38] sm:$0xff]
      %742 = vset.pattern.permute.xlu0 0
      %743 = vperm.xlu0 %742, %v733
      %v744 = vpop.permute.xlu0 %743
      %747 = vset.pattern.permute.xlu0 0
      %748 = vperm.xlu0 %747, %v734
      %v749 = vpop.permute.xlu0 %748
      %752 = vset.pattern.permute.xlu0 0
      %753 = vperm.xlu0 %752, %v735
      %v754 = vpop.permute.xlu0 %753
      %757 = vset.pattern.permute.xlu0 0
      %758 = vperm.xlu0 %757, %v736
      %v759 = vpop.permute.xlu0 %758
      %762 = vset.pattern.permute.xlu0 0
      %763 = vperm.xlu0 %762, %v737
      %v764 = vpop.permute.xlu0 %763
      %767 = vset.pattern.permute.xlu0 0
      %768 = vperm.xlu0 %767, %v738
      %v769 = vpop.permute.xlu0 %768
      %772 = vset.pattern.permute.xlu0 0
      %773 = vperm.xlu0 %772, %v739
      %v774 = vpop.permute.xlu0 %773
      %777 = vset.pattern.permute.xlu0 0
      %778 = vperm.xlu0 %777, %v740
      %v779 = vpop.permute.xlu0 %778
      %v789 = vunpack.c.l.b16 %v725
      %v790 = vunpack.c.l.b16 %v726
      %v791 = vunpack.c.l.b16 %v727
      %v792 = vunpack.c.l.b16 %v728
      %v793 = vunpack.c.l.b16 %v729
      %v794 = vunpack.c.l.b16 %v730
      %v795 = vunpack.c.l.b16 %v731
      %v796 = vunpack.c.l.b16 %v732
      %v797 = vpack.c.b16 %v790, %v789
      %v798 = vpack.c.b16 %v792, %v791
      %v799 = vpack.c.b16 %v794, %v793
      %v800 = vpack.c.b16 %v796, %v795
      %vm801 = vcmask 130048
      %v803 = vsel %vm801, %v797, 0
      %v806 = vsel %vm801, %v798, 0
      %v809 = vsel %vm801, %v799, 0
      %v812 = vsel %vm801, %v800, 0
      %814 = vmatprep.subr.bf16.mxu0 0
      %815 = vmatpush1.bf16.msra.mxu0 0
      %816 = vmatprep.subr.bf16.mxu0 0
      %817 = vmatpush1.bf16.msra.mxu0 0
      %818 = vmatprep.subr.bf16.mxu0 0
      %819 = vmatpush1.bf16.msra.mxu0 0
      %820 = vmatprep.subr.bf16.mxu0 0
      %821 = vmatpush1.bf16.msra.mxu0 0
      %822 = vmatprep.subr.bf16.mxu0 0
      %823 = vmatpush1.bf16.msra.mxu0 0
      %824 = vmatprep.subr.bf16.mxu0 0
      %825 = vmatpush1.bf16.msra.mxu0 0
      %826 = vmatprep.subr.bf16.mxu0 0
      %827 = vmatpush1.bf16.msra.mxu0 0
      %828 = vmatprep.subr.bf16.mxu0 0
      %829 = vmatpush1.bf16.msra.mxu0 %v724
      %830 = vmatprep.subr.bf16.mxu0 0
      %831 = vmatpush2.bf16.msra.mxu0 0
      %832 = vmatprep.subr.bf16.mxu0 0
      %833 = vmatpush2.bf16.msra.mxu0 0
      %834 = vmatprep.subr.bf16.mxu0 0
      %835 = vmatpush2.bf16.msra.mxu0 0
      %836 = vmatprep.subr.bf16.mxu0 0
      %837 = vmatpush2.bf16.msra.mxu0 0
      %838 = vmatprep.subr.bf16.mxu0 0
      %839 = vmatpush2.bf16.msra.mxu0 0
      %840 = vmatprep.subr.bf16.mxu0 0
      %841 = vmatpush2.bf16.msra.mxu0 0
      %842 = vmatprep.subr.bf16.mxu0 0
      %843 = vmatpush2.bf16.msra.mxu0 0
      %844 = vmatprep.subr.bf16.mxu0 0
      %845 = vmatpush2.bf16.msra.mxu0 0
      %846 = vmatprep.mubr.bf16.mxu0 0
      %847 = vmatmul.mubr.bf16.gmra.mxu0 %v803
      %v848 = vpop.f32.mrf.mxu0
      %v849 = vadd.f32 %v744, %v848
      %v850 = vpop.f32.mrf.mxu0
      %v851 = vpop.f32.mrf.mxu0
      %v852 = vadd.f32 %v749, %v851
      %v853 = vpop.f32.mrf.mxu0
      %854 = vmatprep.mubr.bf16.mxu0 0
      %855 = vmatmul.mubr.bf16.gmra.mxu0 %v806
      %v856 = vpop.f32.mrf.mxu0
      %v857 = vadd.f32 %v754, %v856
      %v858 = vpop.f32.mrf.mxu0
      %v859 = vpop.f32.mrf.mxu0
      %v860 = vadd.f32 %v759, %v859
      %v861 = vpop.f32.mrf.mxu0
      %862 = vmatprep.mubr.bf16.mxu0 0
      %863 = vmatmul.mubr.bf16.gmra.mxu0 %v809
      %v864 = vpop.f32.mrf.mxu0
      %v865 = vadd.f32 %v764, %v864
      %v866 = vpop.f32.mrf.mxu0
      %v867 = vpop.f32.mrf.mxu0
      %v868 = vadd.f32 %v769, %v867
      %v869 = vpop.f32.mrf.mxu0
      %870 = vmatprep.mubr.bf16.mxu0 0
      %871 = vmatmul.mubr.bf16.gmra.mxu0 %v812
      %v872 = vpop.f32.mrf.mxu0
      %v873 = vadd.f32 %v774, %v872
      %v874 = vpop.f32.mrf.mxu0
      %v875 = vpop.f32.mrf.mxu0
      %v876 = vadd.f32 %v779, %v875
      %v877 = vpop.f32.mrf.mxu0
      %878 = vdwg.mxu0
      %v879 = vmul.f32 %v849, %v849
      %v880 = vmul.f32 %v852, %v852
      %v881 = vmul.f32 %v857, %v857
      %v882 = vmul.f32 %v860, %v860
      %v883 = vmul.f32 %v865, %v865
      %v884 = vmul.f32 %v868, %v868
      %v885 = vmul.f32 %v873, %v873
      %v886 = vmul.f32 %v876, %v876
      %v887 = vmul.f32 %v849, %v879
      %v888 = vmul.f32 %v852, %v880
      %v889 = vmul.f32 %v857, %v881
      %v890 = vmul.f32 %v860, %v882
      %v891 = vmul.f32 %v865, %v883
      %v892 = vmul.f32 %v868, %v884
      %v893 = vmul.f32 %v873, %v885
      %v894 = vmul.f32 %v876, %v886
      %v895 = vmul.f32 %v887, 0.044715
      %v896 = vmul.f32 %v888, 0.044715
      %v897 = vmul.f32 %v889, 0.044715
      %v898 = vmul.f32 %v890, 0.044715
      %v899 = vmul.f32 %v891, 0.044715
      %v900 = vmul.f32 %v892, 0.044715
      %v901 = vmul.f32 %v893, 0.044715
      %v902 = vmul.f32 %v894, 0.044715
      %v903 = vadd.f32 %v849, %v895
      %v904 = vadd.f32 %v852, %v896
      %v905 = vadd.f32 %v857, %v897
      %v906 = vadd.f32 %v860, %v898
      %v907 = vadd.f32 %v865, %v899
      %v908 = vadd.f32 %v868, %v900
      %v909 = vadd.f32 %v873, %v901
      %v910 = vadd.f32 %v876, %v902
      %v911 = vmul.f32 %v903, 0.7978846
      %v912 = vmul.f32 %v904, 0.7978846
      %v913 = vmul.f32 %v905, 0.7978846
      %v914 = vmul.f32 %v906, 0.7978846
      %v915 = vmul.f32 %v907, 0.7978846
      %v916 = vmul.f32 %v908, 0.7978846
      %v917 = vmul.f32 %v909, 0.7978846
      %v918 = vmul.f32 %v910, 0.7978846
      %v919 = vtanh.pop %v911
      %v920 = vtanh.pop %v912
      %v921 = vtanh.pop %v913
      %v922 = vtanh.pop %v914
      %v923 = vtanh.pop %v915
      %v924 = vtanh.pop %v916
      %v925 = vtanh.pop %v917
      %v926 = vtanh.pop %v918
      %v927 = vadd.f32 %v919, 1.0
      %v928 = vadd.f32 %v920, 1.0
      %v929 = vadd.f32 %v921, 1.0
      %v930 = vadd.f32 %v922, 1.0
      %v931 = vadd.f32 %v923, 1.0
      %v932 = vadd.f32 %v924, 1.0
      %v933 = vadd.f32 %v925, 1.0
      %v934 = vadd.f32 %v926, 1.0
      %v935 = vmul.f32 %v927, 0.5
      %v936 = vmul.f32 %v928, 0.5
      %v937 = vmul.f32 %v929, 0.5
      %v938 = vmul.f32 %v930, 0.5
      %v939 = vmul.f32 %v931, 0.5
      %v940 = vmul.f32 %v932, 0.5
      %v941 = vmul.f32 %v933, 0.5
      %v942 = vmul.f32 %v934, 0.5
      %v943 = vmul.f32 %v849, %v935
      %v944 = vmul.f32 %v852, %v936
      %v945 = vmul.f32 %v857, %v937
      %v946 = vmul.f32 %v860, %v938
      %v947 = vmul.f32 %v865, %v939
      %v948 = vmul.f32 %v868, %v940
      %v949 = vmul.f32 %v873, %v941
      %v950 = vmul.f32 %v876, %v942
      %v951 = vld [vmem:[%s632] sm:$0xf]
      %v952 = vld [vmem:[%s632 + $0x4] sm:$0xf]
      %v953 = vpack.c.bf16 %v944, %v943
      %v954 = vpack.c.bf16 %v946, %v945
      %v955 = vpack.c.bf16 %v948, %v947
      %v956 = vpack.c.bf16 %v950, %v949
      %v959 = vunpack.c.l.b16 %v951
      %v960 = vunpack.c.l.b16 %v952
      %v961 = vpack.c.b16 %v960, %v959
      %vm962 = vcmask 523264
      %v964 = vsel %vm962, %v961, 0
      %966 = vmatprep.subr.bf16.mxu0 0
      %967 = vmatpush1.bf16.msra.mxu0 0
      %968 = vmatprep.subr.bf16.mxu0 0
      %969 = vmatpush1.bf16.msra.mxu0 0
      %970 = vmatprep.subr.bf16.mxu0 0
      %971 = vmatpush1.bf16.msra.mxu0 0
      %972 = vmatprep.subr.bf16.mxu0 0
      %973 = vmatpush1.bf16.msra.mxu0 0
      %974 = vmatprep.subr.bf16.mxu0 0
      %975 = vmatpush1.bf16.msra.mxu0 %v956
      %976 = vmatprep.subr.bf16.mxu0 0
      %977 = vmatpush1.bf16.msra.mxu0 %v955
      %978 = vmatprep.subr.bf16.mxu0 0
      %979 = vmatpush1.bf16.msra.mxu0 %v954
      %980 = vmatprep.subr.bf16.mxu0 0
      %981 = vmatpush1.bf16.msra.mxu0 %v953
      %982 = vmatprep.subr.bf16.mxu0 0
      %983 = vmatpush2.bf16.msra.mxu0 0
      %984 = vmatprep.subr.bf16.mxu0 0
      %985 = vmatpush2.bf16.msra.mxu0 0
      %986 = vmatprep.subr.bf16.mxu0 0
      %987 = vmatpush2.bf16.msra.mxu0 0
      %988 = vmatprep.subr.bf16.mxu0 0
      %989 = vmatpush2.bf16.msra.mxu0 0
      %990 = vmatprep.subr.bf16.mxu0 0
      %991 = vmatpush2.bf16.msra.mxu0 0
      %992 = vmatprep.subr.bf16.mxu0 0
      %993 = vmatpush2.bf16.msra.mxu0 0
      %994 = vmatprep.subr.bf16.mxu0 0
      %995 = vmatpush2.bf16.msra.mxu0 0
      %996 = vmatprep.subr.bf16.mxu0 0
      %997 = vmatpush2.bf16.msra.mxu0 0
      %998 = vmatprep.mubr.bf16.mxu0 0
      %999 = vmatmul.mubr.bf16.gmra.mxu0 %v964
      %v1000 = vpop.f32.mrf.mxu0
      %v1001 = vadd.f32 0.0, %v1000
      %v1002 = vpop.f32.mrf.mxu0
      %v1003 = vpop.f32.mrf.mxu0
      %v1004 = vadd.f32 0.0, %v1003
      %v1005 = vpop.f32.mrf.mxu0
      %1006 = vdwg.mxu0
      %v1007 = vadd.f32 %v681, %v1001
      %v1008 = vadd.f32 %v682, %v1004
      %v1009 = vld [vmem:[%s637] sm:$0xff]
      %v1010 = vld [vmem:[%s637 + $0x8] sm:$0xff]
      %1012 = vset.pattern.permute.xlu0 0
      %1013 = vperm.xlu0 %1012, %v1009
      %v1014 = vpop.permute.xlu0 %1013
      %1017 = vset.pattern.permute.xlu0 0
      %1018 = vperm.xlu0 %1017, %v1010
      %v1019 = vpop.permute.xlu0 %1018
      %v1021 = vadd.f32 %v1007, %v1014
      %v1022 = vadd.f32 %v1008, %v1019
      %v1023 = vld [vmem:[%s640] sm:$0x1]
      %v1024 = vld [vmem:[%s643] sm:$0x1]
      %1025 = vadd.xlane.f32.xlu0 %v1021
      %v1026 = vpop.xlane.xlu0 %1025
      %1027 = vadd.xlane.f32.xlu0 %v1022
      %v1028 = vpop.xlane.xlu0 %1027
      %v1029 = vmul.f32 %v1026, %v689
      %v1030 = vmul.f32 %v1028, %v689
      %v1031 = vsub.f32 %v1021, %v1029
      %v1032 = vsub.f32 %v1022, %v1030
      %v1033 = vmul.f32 %v1031, %v1031
      %v1034 = vmul.f32 %v1032, %v1032
      %1035 = vadd.xlane.f32.xlu0 %v1033
      %v1036 = vpop.xlane.xlu0 %1035
      %1037 = vadd.xlane.f32.xlu0 %v1034
      %v1038 = vpop.xlane.xlu0 %1037
      %v1039 = vmul.f32 %v1036, %v689
      %v1040 = vmul.f32 %v1038, %v689
      %v1041 = vadd.f32 %v1039, 1e-06
      %v1042 = vadd.f32 %v1040, 1e-06
      %v1043 = vrsqrt.pop %v1041
      %v1044 = vrsqrt.pop %v1042
      %v1045 = vmul.f32 %v1031, %v1043
      %v1046 = vmul.f32 %v1032, %v1044
      %v1048 = vlaneseq
      %v1049 = vshrl.u32 %v1048, 7
      %v1050 = vsub.s32 0, %v1049
      %v1051 = vrot.slane %v1023, %v1050
      %v1053 = vmul.f32 %v1045, %v1051
      %v1054 = vmul.f32 %v1046, %v1051
      %v1056 = vlaneseq
      %v1057 = vshrl.u32 %v1056, 7
      %v1058 = vsub.s32 0, %v1057
      %v1059 = vrot.slane %v1024, %v1058
      %v1061 = vadd.f32 %v1053, %v1059
      %v1062 = vadd.f32 %v1054, %v1059
      %v1063 = vpack.c.bf16 %v1062, %v1061
      %v1064 = vld [vmem:[%s648] sm:$0xff]
      %v1065 = vld [vmem:[%s648 + $0x8] sm:$0xff]
      %v1066 = vld [vmem:[%s648 + $0x10] sm:$0xff]
      %v1067 = vld [vmem:[%s648 + $0x18] sm:$0xff]
      %v1068 = vld [vmem:[%s648 + $0x20] sm:$0xff]
      %v1069 = vld [vmem:[%s648 + $0x28] sm:$0xff]
      %v1070 = vld [vmem:[%s648 + $0x30] sm:$0xff]
      %v1071 = vld [vmem:[%s648 + $0x38] sm:$0xff]
      %v1072 = vld [vmem:[%s648 + $0x40] sm:$0xff]
      %v1073 = vld [vmem:[%s648 + $0x48] sm:$0xff]
      %v1074 = vld [vmem:[%s648 + $0x50] sm:$0xff]
      %v1075 = vld [vmem:[%s648 + $0x58] sm:$0xff]
      %v1076 = vld [vmem:[%s648 + $0x60] sm:$0xff]
      %v1077 = vld [vmem:[%s648 + $0x68] sm:$0xff]
      %v1078 = vld [vmem:[%s648 + $0x70] sm:$0xff]
      %v1079 = vld [vmem:[%s648 + $0x78] sm:$0xff]
      %v1080 = vld [vmem:[%s657] sm:$0xf]
      %v1081 = vld [vmem:[%s657 + $0x4] sm:$0xf]
      %v1082 = vld [vmem:[%s657 + $0x8] sm:$0xf]
      %v1083 = vld [vmem:[%s657 + $0xc] sm:$0xf]
      %v1084 = vld [vmem:[%s657 + $0x10] sm:$0xf]
      %v1085 = vld [vmem:[%s657 + $0x14] sm:$0xf]
      %v1086 = vld [vmem:[%s657 + $0x18] sm:$0xf]
      %v1087 = vld [vmem:[%s657 + $0x1c] sm:$0xf]
      %v1088 = vld [vmem:[%s657 + $0x20] sm:$0xf]
      %v1089 = vld [vmem:[%s657 + $0x24] sm:$0xf]
      %v1090 = vld [vmem:[%s657 + $0x28] sm:$0xf]
      %v1091 = vld [vmem:[%s657 + $0x2c] sm:$0xf]
      %v1092 = vld [vmem:[%s657 + $0x30] sm:$0xf]
      %v1093 = vld [vmem:[%s657 + $0x34] sm:$0xf]
      %v1094 = vld [vmem:[%s657 + $0x38] sm:$0xf]
      %v1095 = vld [vmem:[%s657 + $0x3c] sm:$0xf]
      %v1096 = vld [vmem:[%s657 + $0x40] sm:$0xf]
      %v1097 = vld [vmem:[%s657 + $0x44] sm:$0xf]
      %v1098 = vld [vmem:[%s657 + $0x48] sm:$0xf]
      %v1099 = vld [vmem:[%s657 + $0x4c] sm:$0xf]
      %v1100 = vld [vmem:[%s657 + $0x50] sm:$0xf]
      %v1101 = vld [vmem:[%s657 + $0x54] sm:$0xf]
      %v1102 = vld [vmem:[%s657 + $0x58] sm:$0xf]
      %v1103 = vld [vmem:[%s657 + $0x5c] sm:$0xf]
      %v1104 = vld [vmem:[%s657 + $0x60] sm:$0xf]
      %v1105 = vld [vmem:[%s657 + $0x64] sm:$0xf]
      %v1106 = vld [vmem:[%s657 + $0x68] sm:$0xf]
      %v1107 = vld [vmem:[%s657 + $0x6c] sm:$0xf]
      %v1108 = vld [vmem:[%s657 + $0x70] sm:$0xf]
      %v1109 = vld [vmem:[%s657 + $0x74] sm:$0xf]
      %v1110 = vld [vmem:[%s657 + $0x78] sm:$0xf]
      %v1111 = vld [vmem:[%s657 + $0x7c] sm:$0xf]
      %v1112 = vld [vmem:[%s652] sm:$0x3]
      %v1114 = vlaneseq
      %v1115 = vshrl.u32 %v1114, 7
      %v1116 = vsub.s32 0, %v1115
      %v1117 = vrot.slane %v1112, %v1116
      %v1118 = vlaneseq
      %v1119 = vshrl.u32 %v1118, 7
      %v1120 = vsub.s32 1, %v1119
      %v1121 = vrot.slane %v1112, %v1120
      %v1140 = vunpack.c.l.b16 %v1064
      %v1141 = vunpack.c.h.b16 %v1064
      %v1142 = vunpack.c.l.b16 %v1065
      %v1143 = vunpack.c.h.b16 %v1065
      %v1144 = vunpack.c.l.b16 %v1066
      %v1145 = vunpack.c.h.b16 %v1066
      %v1146 = vunpack.c.l.b16 %v1067
      %v1147 = vunpack.c.h.b16 %v1067
      %v1148 = vunpack.c.l.b16 %v1068
      %v1149 = vunpack.c.h.b16 %v1068
      %v1150 = vunpack.c.l.b16 %v1069
      %v1151 = vunpack.c.h.b16 %v1069
      %v1152 = vunpack.c.l.b16 %v1070
      %v1153 = vunpack.c.h.b16 %v1070
      %v1154 = vunpack.c.l.b16 %v1071
      %v1155 = vunpack.c.h.b16 %v1071
      %v1156 = vunpack.c.l.b16 %v1072
      %v1157 = vunpack.c.h.b16 %v1072
      %v1158 = vunpack.c.l.b16 %v1073
      %v1159 = vunpack.c.h.b16 %v1073
      %v1160 = vunpack.c.l.b16 %v1074
      %v1161 = vunpack.c.h.b16 %v1074
      %v1162 = vunpack.c.l.b16 %v1075
      %v1163 = vunpack.c.h.b16 %v1075
      %v1164 = vunpack.c.l.b16 %v1076
      %v1165 = vunpack.c.h.b16 %v1076
      %v1166 = vunpack.c.l.b16 %v1077
      %v1167 = vunpack.c.h.b16 %v1077
      %v1168 = vunpack.c.l.b16 %v1078
      %v1169 = vunpack.c.h.b16 %v1078
      %v1170 = vunpack.c.l.b16 %v1079
      %v1171 = vunpack.c.h.b16 %v1079
      %v1172 = vpack.c.b16 %v1142, %v1140
      %v1173 = vpack.c.b16 %v1143, %v1141
      %v1174 = vpack.c.b16 %v1146, %v1144
      %v1175 = vpack.c.b16 %v1147, %v1145
      %v1176 = vpack.c.b16 %v1150, %v1148
      %v1177 = vpack.c.b16 %v1151, %v1149
      %v1178 = vpack.c.b16 %v1154, %v1152
      %v1179 = vpack.c.b16 %v1155, %v1153
      %v1180 = vpack.c.b16 %v1158, %v1156
      %v1181 = vpack.c.b16 %v1159, %v1157
      %v1182 = vpack.c.b16 %v1162, %v1160
      %v1183 = vpack.c.b16 %v1163, %v1161
      %v1184 = vpack.c.b16 %v1166, %v1164
      %v1185 = vpack.c.b16 %v1167, %v1165
      %v1186 = vpack.c.b16 %v1170, %v1168
      %v1187 = vpack.c.b16 %v1171, %v1169
      %1204 = vmatprep.subr.bf16.mxu0 %v1187
      %1205 = vmatpush1.bf16.msra.mxu0 %v1186
      %1206 = vmatprep.subr.bf16.mxu0 %v1185
      %1207 = vmatpush1.bf16.msra.mxu0 %v1184
      %1208 = vmatprep.subr.bf16.mxu0 %v1183
      %1209 = vmatpush1.bf16.msra.mxu0 %v1182
      %1210 = vmatprep.subr.bf16.mxu0 %v1181
      %1211 = vmatpush1.bf16.msra.mxu0 %v1180
      %1212 = vmatprep.subr.bf16.mxu0 %v1179
      %1213 = vmatpush1.bf16.msra.mxu0 %v1178
      %1214 = vmatprep.subr.bf16.mxu0 %v1177
      %1215 = vmatpush1.bf16.msra.mxu0 %v1176
      %1216 = vmatprep.subr.bf16.mxu0 %v1175
      %1217 = vmatpush1.bf16.msra.mxu0 %v1174
      %1218 = vmatprep.subr.bf16.mxu0 %v1173
      %1219 = vmatpush1.bf16.msra.mxu0 %v1172
      %1220 = vmatprep.subr.bf16.mxu0 0
      %1221 = vmatpush2.bf16.msra.mxu0 0
      %1222 = vmatprep.subr.bf16.mxu0 0
      %1223 = vmatpush2.bf16.msra.mxu0 0
      %1224 = vmatprep.subr.bf16.mxu0 0
      %1225 = vmatpush2.bf16.msra.mxu0 0
      %1226 = vmatprep.subr.bf16.mxu0 0
      %1227 = vmatpush2.bf16.msra.mxu0 0
      %1228 = vmatprep.subr.bf16.mxu0 0
      %1229 = vmatpush2.bf16.msra.mxu0 0
      %1230 = vmatprep.subr.bf16.mxu0 0
      %1231 = vmatpush2.bf16.msra.mxu0 0
      %1232 = vmatprep.subr.bf16.mxu0 0
      %1233 = vmatpush2.bf16.msra.mxu0 0
      %1234 = vmatprep.subr.bf16.mxu0 0
      %1235 = vmatpush2.bf16.msra.mxu0 0
      %1236 = vmatprep.mubr.bf16.mxu0 0
      %1237 = vmatmul.mubr.bf16.gmra.mxu0 %v1063
      %v1238 = vpop.f32.mrf.mxu0
      %v1239 = vadd.f32 %v1117, %v1238
      %v1240 = vpop.f32.mrf.mxu0
      %v1241 = vadd.f32 %v1121, %v1240
      %v1242 = vpop.f32.mrf.mxu0
      %v1243 = vadd.f32 %v1117, %v1242
      %v1244 = vpop.f32.mrf.mxu0
      %v1245 = vadd.f32 %v1121, %v1244
      %1246 = vdwg.mxu0
      %v1247 = vmul.f32 %v1239, %v1239
      %v1248 = vmul.f32 %v1241, %v1241
      %v1249 = vmul.f32 %v1243, %v1243
      %v1250 = vmul.f32 %v1245, %v1245
      %v1251 = vmul.f32 %v1239, %v1247
      %v1252 = vmul.f32 %v1241, %v1248
      %v1253 = vmul.f32 %v1243, %v1249
      %v1254 = vmul.f32 %v1245, %v1250
      %v1255 = vmul.f32 %v1251, 0.044715
      %v1256 = vmul.f32 %v1252, 0.044715
      %v1257 = vmul.f32 %v1253, 0.044715
      %v1258 = vmul.f32 %v1254, 0.044715
      %v1259 = vadd.f32 %v1239, %v1255
      %v1260 = vadd.f32 %v1241, %v1256
      %v1261 = vadd.f32 %v1243, %v1257
      %v1262 = vadd.f32 %v1245, %v1258
      %v1263 = vmul.f32 %v1259, 0.7978846
      %v1264 = vmul.f32 %v1260, 0.7978846
      %v1265 = vmul.f32 %v1261, 0.7978846
      %v1266 = vmul.f32 %v1262, 0.7978846
      %v1267 = vtanh.pop %v1263
      %v1268 = vtanh.pop %v1264
      %v1269 = vtanh.pop %v1265
      %v1270 = vtanh.pop %v1266
      %v1271 = vadd.f32 %v1267, 1.0
      %v1272 = vadd.f32 %v1268, 1.0
      %v1273 = vadd.f32 %v1269, 1.0
      %v1274 = vadd.f32 %v1270, 1.0
      %v1275 = vmul.f32 %v1271, 0.5
      %v1276 = vmul.f32 %v1272, 0.5
      %v1277 = vmul.f32 %v1273, 0.5
      %v1278 = vmul.f32 %v1274, 0.5
      %v1279 = vmul.f32 %v1239, %v1275
      %v1280 = vmul.f32 %v1241, %v1276
      %v1281 = vmul.f32 %v1243, %v1277
      %v1282 = vmul.f32 %v1245, %v1278
      %v1283 = vpack.c.bf16 %v1281, %v1279
      %v1284 = vpack.c.bf16 %v1282, %v1280
      %v1317 = vunpack.c.l.b16 %v1080
      %v1318 = vunpack.c.l.b16 %v1081
      %v1319 = vunpack.c.l.b16 %v1082
      %v1320 = vunpack.c.l.b16 %v1083
      %v1321 = vunpack.c.l.b16 %v1084
      %v1322 = vunpack.c.l.b16 %v1085
      %v1323 = vunpack.c.l.b16 %v1086
      %v1324 = vunpack.c.l.b16 %v1087
      %v1325 = vunpack.c.l.b16 %v1088
      %v1326 = vunpack.c.l.b16 %v1089
      %v1327 = vunpack.c.l.b16 %v1090
      %v1328 = vunpack.c.l.b16 %v1091
      %v1329 = vunpack.c.l.b16 %v1092
      %v1330 = vunpack.c.l.b16 %v1093
      %v1331 = vunpack.c.l.b16 %v1094
      %v1332 = vunpack.c.l.b16 %v1095
      %v1333 = vunpack.c.l.b16 %v1096
      %v1334 = vunpack.c.l.b16 %v1097
      %v1335 = vunpack.c.l.b16 %v1098
      %v1336 = vunpack.c.l.b16 %v1099
      %v1337 = vunpack.c.l.b16 %v1100
      %v1338 = vunpack.c.l.b16 %v1101
      %v1339 = vunpack.c.l.b16 %v1102
      %v1340 = vunpack.c.l.b16 %v1103
      %v1341 = vunpack.c.l.b16 %v1104
      %v1342 = vunpack.c.l.b16 %v1105
      %v1343 = vunpack.c.l.b16 %v1106
      %v1344 = vunpack.c.l.b16 %v1107
      %v1345 = vunpack.c.l.b16 %v1108
      %v1346 = vunpack.c.l.b16 %v1109
      %v1347 = vunpack.c.l.b16 %v1110
      %v1348 = vunpack.c.l.b16 %v1111
      %v1349 = vpack.c.b16 %v1318, %v1317
      %v1350 = vpack.c.b16 %v1320, %v1319
      %v1351 = vpack.c.b16 %v1322, %v1321
      %v1352 = vpack.c.b16 %v1324, %v1323
      %v1353 = vpack.c.b16 %v1326, %v1325
      %v1354 = vpack.c.b16 %v1328, %v1327
      %v1355 = vpack.c.b16 %v1330, %v1329
      %v1356 = vpack.c.b16 %v1332, %v1331
      %v1357 = vpack.c.b16 %v1334, %v1333
      %v1358 = vpack.c.b16 %v1336, %v1335
      %v1359 = vpack.c.b16 %v1338, %v1337
      %v1360 = vpack.c.b16 %v1340, %v1339
      %v1361 = vpack.c.b16 %v1342, %v1341
      %v1362 = vpack.c.b16 %v1344, %v1343
      %v1363 = vpack.c.b16 %v1346, %v1345
      %v1364 = vpack.c.b16 %v1348, %v1347
      %1381 = vmatprep.subr.bf16.mxu0 0
      %1382 = vmatpush1.bf16.msra.mxu0 %v1356
      %1383 = vmatprep.subr.bf16.mxu0 0
      %1384 = vmatpush1.bf16.msra.mxu0 %v1355
      %1385 = vmatprep.subr.bf16.mxu0 0
      %1386 = vmatpush1.bf16.msra.mxu0 %v1354
      %1387 = vmatprep.subr.bf16.mxu0 0
      %1388 = vmatpush1.bf16.msra.mxu0 %v1353
      %1389 = vmatprep.subr.bf16.mxu0 0
      %1390 = vmatpush1.bf16.msra.mxu0 %v1352
      %1391 = vmatprep.subr.bf16.mxu0 0
      %1392 = vmatpush1.bf16.msra.mxu0 %v1351
      %1393 = vmatprep.subr.bf16.mxu0 0
      %1394 = vmatpush1.bf16.msra.mxu0 %v1350
      %1395 = vmatprep.subr.bf16.mxu0 0
      %1396 = vmatpush1.bf16.msra.mxu0 %v1349
      %1397 = vmatprep.subr.bf16.mxu0 0
      %1398 = vmatpush2.bf16.msra.mxu0 %v1364
      %1399 = vmatprep.subr.bf16.mxu0 0
      %1400 = vmatpush2.bf16.msra.mxu0 %v1363
      %1401 = vmatprep.subr.bf16.mxu0 0
      %1402 = vmatpush2.bf16.msra.mxu0 %v1362
      %1403 = vmatprep.subr.bf16.mxu0 0
      %1404 = vmatpush2.bf16.msra.mxu0 %v1361
      %1405 = vmatprep.subr.bf16.mxu0 0
      %1406 = vmatpush2.bf16.msra.mxu0 %v1360
      %1407 = vmatprep.subr.bf16.mxu0 0
      %1408 = vmatpush2.bf16.msra.mxu0 %v1359
      %1409 = vmatprep.subr.bf16.mxu0 0
      %1410 = vmatpush2.bf16.msra.mxu0 %v1358
      %1411 = vmatprep.subr.bf16.mxu0 0
      %1412 = vmatpush2.bf16.msra.mxu0 %v1357
      %1413 = vmatprep.mubr.bf16.mxu0 %v1284
      %1414 = vmatmul.mubr.bf16.gmra.mxu0 %v1283
      %v1415 = vpop.f32.mrf.mxu0
      %v1416 = vadd.f32 0.0, %v1415
      %v1417 = vpop.f32.mrf.mxu0
      %v1418 = vpop.f32.mrf.mxu0
      %v1419 = vadd.f32 0.0, %v1418
      %v1420 = vpop.f32.mrf.mxu0
      %1421 = vdwg.mxu0
      %v1422 = vadd.f32 %v1021, %v1416
      %v1423 = vadd.f32 %v1022, %v1419
      %v1424 = vld [vmem:[%s660] sm:$0x1]
      %v1426 = vlaneseq
      %v1427 = vshrl.u32 %v1426, 7
      %v1428 = vsub.s32 0, %v1427
      %v1429 = vrot.slane %v1424, %v1428
      %v1431 = vadd.f32 %v1422, %v1429
      %v1432 = vadd.f32 %v1423, %v1429
      %1433 = vst [vmem:[%s666] sm:$0xff] %v1431
      %1434 = vst [vmem:[%s666 + $0x8] sm:$0xff] %v1432
      %s1435 = scalar_lea.vmem %s666, 16
      %v1436 = vld [vmem:[%s1435] sm:$0xff]
      %v1437 = vld [vmem:[%s1435 + $0x8] sm:$0xff]
      %v1438 = vld [vmem:[%s614] sm:$0x1]
      %v1439 = vld [vmem:[%s617] sm:$0x1]
      %1440 = vadd.xlane.f32.xlu0 %v1436
      %v1441 = vpop.xlane.xlu0 %1440
      %1442 = vadd.xlane.f32.xlu0 %v1437
      %v1443 = vpop.xlane.xlu0 %1442
      %v1444 = vmul.f32 %v1441, %v689
      %v1445 = vmul.f32 %v1443, %v689
      %v1446 = vsub.f32 %v1436, %v1444
      %v1447 = vsub.f32 %v1437, %v1445
      %v1448 = vmul.f32 %v1446, %v1446
      %v1449 = vmul.f32 %v1447, %v1447
      %1450 = vadd.xlane.f32.xlu0 %v1448
      %v1451 = vpop.xlane.xlu0 %1450
      %1452 = vadd.xlane.f32.xlu0 %v1449
      %v1453 = vpop.xlane.xlu0 %1452
      %v1454 = vmul.f32 %v1451, %v689
      %v1455 = vmul.f32 %v1453, %v689
      %v1456 = vadd.f32 %v1454, 1e-06
      %v1457 = vadd.f32 %v1455, 1e-06
      %v1458 = vrsqrt.pop %v1456
      %v1459 = vrsqrt.pop %v1457
      %v1460 = vmul.f32 %v1446, %v1458
      %v1461 = vmul.f32 %v1447, %v1459
      %v1463 = vlaneseq
      %v1464 = vshrl.u32 %v1463, 7
      %v1465 = vsub.s32 0, %v1464
      %v1466 = vrot.slane %v1438, %v1465
      %v1468 = vmul.f32 %v1460, %v1466
      %v1469 = vmul.f32 %v1461, %v1466
      %v1471 = vlaneseq
      %v1472 = vshrl.u32 %v1471, 7
      %v1473 = vsub.s32 0, %v1472
      %v1474 = vrot.slane %v1439, %v1473
      %v1476 = vadd.f32 %v1468, %v1474
      %v1477 = vadd.f32 %v1469, %v1474
      %v1478 = vpack.c.bf16 %v1477, %v1476
      %v1479 = vld [vmem:[%s622] sm:$0xf]
      %v1480 = vld [vmem:[%s622 + $0x4] sm:$0xf]
      %v1481 = vld [vmem:[%s622 + $0x8] sm:$0xf]
      %v1482 = vld [vmem:[%s622 + $0xc] sm:$0xf]
      %v1483 = vld [vmem:[%s622 + $0x10] sm:$0xf]
      %v1484 = vld [vmem:[%s622 + $0x14] sm:$0xf]
      %v1485 = vld [vmem:[%s622 + $0x18] sm:$0xf]
      %v1486 = vld [vmem:[%s622 + $0x1c] sm:$0xf]
      %v1487 = vld [vmem:[%s627] sm:$0xff]
      %v1488 = vld [vmem:[%s627 + $0x8] sm:$0xff]
      %v1489 = vld [vmem:[%s627 + $0x10] sm:$0xff]
      %v1490 = vld [vmem:[%s627 + $0x18] sm:$0xff]
      %v1491 = vld [vmem:[%s627 + $0x20] sm:$0xff]
      %v1492 = vld [vmem:[%s627 + $0x28] sm:$0xff]
      %v1493 = vld [vmem:[%s627 + $0x30] sm:$0xff]
      %v1494 = vld [vmem:[%s627 + $0x38] sm:$0xff]
      %1496 = vset.pattern.permute.xlu0 0
      %1497 = vperm.xlu0 %1496, %v1487
      %v1498 = vpop.permute.xlu0 %1497
      %1501 = vset.pattern.permute.xlu0 0
      %1502 = vperm.xlu0 %1501, %v1488
      %v1503 = vpop.permute.xlu0 %1502
      %1506 = vset.pattern.permute.xlu0 0
      %1507 = vperm.xlu0 %1506, %v1489
      %v1508 = vpop.permute.xlu0 %1507
      %1511 = vset.pattern.permute.xlu0 0
      %1512 = vperm.xlu0 %1511, %v1490
      %v1513 = vpop.permute.xlu0 %1512
      %1516 = vset.pattern.permute.xlu0 0
      %1517 = vperm.xlu0 %1516, %v1491
      %v1518 = vpop.permute.xlu0 %1517
      %1521 = vset.pattern.permute.xlu0 0
      %1522 = vperm.xlu0 %1521, %v1492
      %v1523 = vpop.permute.xlu0 %1522
      %1526 = vset.pattern.permute.xlu0 0
      %1527 = vperm.xlu0 %1526, %v1493
      %v1528 = vpop.permute.xlu0 %1527
      %1531 = vset.pattern.permute.xlu0 0
      %1532 = vperm.xlu0 %1531, %v1494
      %v1533 = vpop.permute.xlu0 %1532
      %v1543 = vunpack.c.l.b16 %v1479
      %v1544 = vunpack.c.l.b16 %v1480
      %v1545 = vunpack.c.l.b16 %v1481
      %v1546 = vunpack.c.l.b16 %v1482
      %v1547 = vunpack.c.l.b16 %v1483
      %v1548 = vunpack.c.l.b16 %v1484
      %v1549 = vunpack.c.l.b16 %v1485
      %v1550 = vunpack.c.l.b16 %v1486
      %v1551 = vpack.c.b16 %v1544, %v1543
      %v1552 = vpack.c.b16 %v1546, %v1545
      %v1553 = vpack.c.b16 %v1548, %v1547
      %v1554 = vpack.c.b16 %v1550, %v1549
      %v1556 = vsel %vm801, %v1551, 0
      %v1559 = vsel %vm801, %v1552, 0
      %v1562 = vsel %vm801, %v1553, 0
      %v1565 = vsel %vm801, %v1554, 0
      %1567 = vmatprep.subr.bf16.mxu0 0
      %1568 = vmatpush1.bf16.msra.mxu0 0
      %1569 = vmatprep.subr.bf16.mxu0 0
      %1570 = vmatpush1.bf16.msra.mxu0 0
      %1571 = vmatprep.subr.bf16.mxu0 0
      %1572 = vmatpush1.bf16.msra.mxu0 0
      %1573 = vmatprep.subr.bf16.mxu0 0
      %1574 = vmatpush1.bf16.msra.mxu0 0
      %1575 = vmatprep.subr.bf16.mxu0 0
      %1576 = vmatpush1.bf16.msra.mxu0 0
      %1577 = vmatprep.subr.bf16.mxu0 0
      %1578 = vmatpush1.bf16.msra.mxu0 0
      %1579 = vmatprep.subr.bf16.mxu0 0
      %1580 = vmatpush1.bf16.msra.mxu0 0
      %1581 = vmatprep.subr.bf16.mxu0 0
      %1582 = vmatpush1.bf16.msra.mxu0 %v1478
      %1583 = vmatprep.subr.bf16.mxu0 0
      %1584 = vmatpush2.bf16.msra.mxu0 0
      %1585 = vmatprep.subr.bf16.mxu0 0
      %1586 = vmatpush2.bf16.msra.mxu0 0
      %1587 = vmatprep.subr.bf16.mxu0 0
      %1588 = vmatpush2.bf16.msra.mxu0 0
      %1589 = vmatprep.subr.bf16.mxu0 0
      %1590 = vmatpush2.bf16.msra.mxu0 0
      %1591 = vmatprep.subr.bf16.mxu0 0
      %1592 = vmatpush2.bf16.msra.mxu0 0
      %1593 = vmatprep.subr.bf16.mxu0 0
      %1594 = vmatpush2.bf16.msra.mxu0 0
      %1595 = vmatprep.subr.bf16.mxu0 0
      %1596 = vmatpush2.bf16.msra.mxu0 0
      %1597 = vmatprep.subr.bf16.mxu0 0
      %1598 = vmatpush2.bf16.msra.mxu0 0
      %1599 = vmatprep.mubr.bf16.mxu0 0
      %1600 = vmatmul.mubr.bf16.gmra.mxu0 %v1556
      %v1601 = vpop.f32.mrf.mxu0
      %v1602 = vadd.f32 %v1498, %v1601
      %v1603 = vpop.f32.mrf.mxu0
      %v1604 = vpop.f32.mrf.mxu0
      %v1605 = vadd.f32 %v1503, %v1604
      %v1606 = vpop.f32.mrf.mxu0
      %1607 = vmatprep.mubr.bf16.mxu0 0
      %1608 = vmatmul.mubr.bf16.gmra.mxu0 %v1559
      %v1609 = vpop.f32.mrf.mxu0
      %v1610 = vadd.f32 %v1508, %v1609
      %v1611 = vpop.f32.mrf.mxu0
      %v1612 = vpop.f32.mrf.mxu0
      %v1613 = vadd.f32 %v1513, %v1612
      %v1614 = vpop.f32.mrf.mxu0
      %1615 = vmatprep.mubr.bf16.mxu0 0
      %1616 = vmatmul.mubr.bf16.gmra.mxu0 %v1562
      %v1617 = vpop.f32.mrf.mxu0
      %v1618 = vadd.f32 %v1518, %v1617
      %v1619 = vpop.f32.mrf.mxu0
      %v1620 = vpop.f32.mrf.mxu0
      %v1621 = vadd.f32 %v1523, %v1620
      %v1622 = vpop.f32.mrf.mxu0
      %1623 = vmatprep.mubr.bf16.mxu0 0
      %1624 = vmatmul.mubr.bf16.gmra.mxu0 %v1565
      %v1625 = vpop.f32.mrf.mxu0
      %v1626 = vadd.f32 %v1528, %v1625
      %v1627 = vpop.f32.mrf.mxu0
      %v1628 = vpop.f32.mrf.mxu0
      %v1629 = vadd.f32 %v1533, %v1628
      %v1630 = vpop.f32.mrf.mxu0
      %1631 = vdwg.mxu0
      %v1632 = vmul.f32 %v1602, %v1602
      %v1633 = vmul.f32 %v1605, %v1605
      %v1634 = vmul.f32 %v1610, %v1610
      %v1635 = vmul.f32 %v1613, %v1613
      %v1636 = vmul.f32 %v1618, %v1618
      %v1637 = vmul.f32 %v1621, %v1621
      %v1638 = vmul.f32 %v1626, %v1626
      %v1639 = vmul.f32 %v1629, %v1629
      %v1640 = vmul.f32 %v1602, %v1632
      %v1641 = vmul.f32 %v1605, %v1633
      %v1642 = vmul.f32 %v1610, %v1634
      %v1643 = vmul.f32 %v1613, %v1635
      %v1644 = vmul.f32 %v1618, %v1636
      %v1645 = vmul.f32 %v1621, %v1637
      %v1646 = vmul.f32 %v1626, %v1638
      %v1647 = vmul.f32 %v1629, %v1639
      %v1648 = vmul.f32 %v1640, 0.044715
      %v1649 = vmul.f32 %v1641, 0.044715
      %v1650 = vmul.f32 %v1642, 0.044715
      %v1651 = vmul.f32 %v1643, 0.044715
      %v1652 = vmul.f32 %v1644, 0.044715
      %v1653 = vmul.f32 %v1645, 0.044715
      %v1654 = vmul.f32 %v1646, 0.044715
      %v1655 = vmul.f32 %v1647, 0.044715
      %v1656 = vadd.f32 %v1602, %v1648
      %v1657 = vadd.f32 %v1605, %v1649
      %v1658 = vadd.f32 %v1610, %v1650
      %v1659 = vadd.f32 %v1613, %v1651
      %v1660 = vadd.f32 %v1618, %v1652
      %v1661 = vadd.f32 %v1621, %v1653
      %v1662 = vadd.f32 %v1626, %v1654
      %v1663 = vadd.f32 %v1629, %v1655
      %v1664 = vmul.f32 %v1656, 0.7978846
      %v1665 = vmul.f32 %v1657, 0.7978846
      %v1666 = vmul.f32 %v1658, 0.7978846
      %v1667 = vmul.f32 %v1659, 0.7978846
      %v1668 = vmul.f32 %v1660, 0.7978846
      %v1669 = vmul.f32 %v1661, 0.7978846
      %v1670 = vmul.f32 %v1662, 0.7978846
      %v1671 = vmul.f32 %v1663, 0.7978846
      %v1672 = vtanh.pop %v1664
      %v1673 = vtanh.pop %v1665
      %v1674 = vtanh.pop %v1666
      %v1675 = vtanh.pop %v1667
      %v1676 = vtanh.pop %v1668
      %v1677 = vtanh.pop %v1669
      %v1678 = vtanh.pop %v1670
      %v1679 = vtanh.pop %v1671
      %v1680 = vadd.f32 %v1672, 1.0
      %v1681 = vadd.f32 %v1673, 1.0
      %v1682 = vadd.f32 %v1674, 1.0
      %v1683 = vadd.f32 %v1675, 1.0
      %v1684 = vadd.f32 %v1676, 1.0
      %v1685 = vadd.f32 %v1677, 1.0
      %v1686 = vadd.f32 %v1678, 1.0
      %v1687 = vadd.f32 %v1679, 1.0
      %v1688 = vmul.f32 %v1680, 0.5
      %v1689 = vmul.f32 %v1681, 0.5
      %v1690 = vmul.f32 %v1682, 0.5
      %v1691 = vmul.f32 %v1683, 0.5
      %v1692 = vmul.f32 %v1684, 0.5
      %v1693 = vmul.f32 %v1685, 0.5
      %v1694 = vmul.f32 %v1686, 0.5
      %v1695 = vmul.f32 %v1687, 0.5
      %v1696 = vmul.f32 %v1602, %v1688
      %v1697 = vmul.f32 %v1605, %v1689
      %v1698 = vmul.f32 %v1610, %v1690
      %v1699 = vmul.f32 %v1613, %v1691
      %v1700 = vmul.f32 %v1618, %v1692
      %v1701 = vmul.f32 %v1621, %v1693
      %v1702 = vmul.f32 %v1626, %v1694
      %v1703 = vmul.f32 %v1629, %v1695
      %v1704 = vld [vmem:[%s632] sm:$0xf]
      %v1705 = vld [vmem:[%s632 + $0x4] sm:$0xf]
      %v1706 = vpack.c.bf16 %v1697, %v1696
      %v1707 = vpack.c.bf16 %v1699, %v1698
      %v1708 = vpack.c.bf16 %v1701, %v1700
      %v1709 = vpack.c.bf16 %v1703, %v1702
      %v1712 = vunpack.c.l.b16 %v1704
      %v1713 = vunpack.c.l.b16 %v1705
      %v1714 = vpack.c.b16 %v1713, %v1712
      %v1716 = vsel %vm962, %v1714, 0
      %1718 = vmatprep.subr.bf16.mxu0 0
      %1719 = vmatpush1.bf16.msra.mxu0 0
      %1720 = vmatprep.subr.bf16.mxu0 0
      %1721 = vmatpush1.bf16.msra.mxu0 0
      %1722 = vmatprep.subr.bf16.mxu0 0
      %1723 = vmatpush1.bf16.msra.mxu0 0
      %1724 = vmatprep.subr.bf16.mxu0 0
      %1725 = vmatpush1.bf16.msra.mxu0 0
      %1726 = vmatprep.subr.bf16.mxu0 0
      %1727 = vmatpush1.bf16.msra.mxu0 %v1709
      %1728 = vmatprep.subr.bf16.mxu0 0
      %1729 = vmatpush1.bf16.msra.mxu0 %v1708
      %1730 = vmatprep.subr.bf16.mxu0 0
      %1731 = vmatpush1.bf16.msra.mxu0 %v1707
      %1732 = vmatprep.subr.bf16.mxu0 0
      %1733 = vmatpush1.bf16.msra.mxu0 %v1706
      %1734 = vmatprep.subr.bf16.mxu0 0
      %1735 = vmatpush2.bf16.msra.mxu0 0
      %1736 = vmatprep.subr.bf16.mxu0 0
      %1737 = vmatpush2.bf16.msra.mxu0 0
      %1738 = vmatprep.subr.bf16.mxu0 0
      %1739 = vmatpush2.bf16.msra.mxu0 0
      %1740 = vmatprep.subr.bf16.mxu0 0
      %1741 = vmatpush2.bf16.msra.mxu0 0
      %1742 = vmatprep.subr.bf16.mxu0 0
      %1743 = vmatpush2.bf16.msra.mxu0 0
      %1744 = vmatprep.subr.bf16.mxu0 0
      %1745 = vmatpush2.bf16.msra.mxu0 0
      %1746 = vmatprep.subr.bf16.mxu0 0
      %1747 = vmatpush2.bf16.msra.mxu0 0
      %1748 = vmatprep.subr.bf16.mxu0 0
      %1749 = vmatpush2.bf16.msra.mxu0 0
      %1750 = vmatprep.mubr.bf16.mxu0 0
      %1751 = vmatmul.mubr.bf16.gmra.mxu0 %v1716
      %v1752 = vpop.f32.mrf.mxu0
      %v1753 = vadd.f32 0.0, %v1752
      %v1754 = vpop.f32.mrf.mxu0
      %v1755 = vpop.f32.mrf.mxu0
      %v1756 = vadd.f32 0.0, %v1755
      %v1757 = vpop.f32.mrf.mxu0
      %1758 = vdwg.mxu0
      %v1759 = vadd.f32 %v1436, %v1753
      %v1760 = vadd.f32 %v1437, %v1756
      %v1761 = vld [vmem:[%s637] sm:$0xff]
      %v1762 = vld [vmem:[%s637 + $0x8] sm:$0xff]
      %1764 = vset.pattern.permute.xlu0 0
      %1765 = vperm.xlu0 %1764, %v1761
      %v1766 = vpop.permute.xlu0 %1765
      %1769 = vset.pattern.permute.xlu0 0
      %1770 = vperm.xlu0 %1769, %v1762
      %v1771 = vpop.permute.xlu0 %1770
      %v1773 = vadd.f32 %v1759, %v1766
      %v1774 = vadd.f32 %v1760, %v1771
      %v1775 = vld [vmem:[%s640] sm:$0x1]
      %v1776 = vld [vmem:[%s643] sm:$0x1]
      %1777 = vadd.xlane.f32.xlu0 %v1773
      %v1778 = vpop.xlane.xlu0 %1777
      %1779 = vadd.xlane.f32.xlu0 %v1774
      %v1780 = vpop.xlane.xlu0 %1779
      %v1781 = vmul.f32 %v1778, %v689
      %v1782 = vmul.f32 %v1780, %v689
      %v1783 = vsub.f32 %v1773, %v1781
      %v1784 = vsub.f32 %v1774, %v1782
      %v1785 = vmul.f32 %v1783, %v1783
      %v1786 = vmul.f32 %v1784, %v1784
      %1787 = vadd.xlane.f32.xlu0 %v1785
      %v1788 = vpop.xlane.xlu0 %1787
      %1789 = vadd.xlane.f32.xlu0 %v1786
      %v1790 = vpop.xlane.xlu0 %1789
      %v1791 = vmul.f32 %v1788, %v689
      %v1792 = vmul.f32 %v1790, %v689
      %v1793 = vadd.f32 %v1791, 1e-06
      %v1794 = vadd.f32 %v1792, 1e-06
      %v1795 = vrsqrt.pop %v1793
      %v1796 = vrsqrt.pop %v1794
      %v1797 = vmul.f32 %v1783, %v1795
      %v1798 = vmul.f32 %v1784, %v1796
      %v1800 = vlaneseq
      %v1801 = vshrl.u32 %v1800, 7
      %v1802 = vsub.s32 0, %v1801
      %v1803 = vrot.slane %v1775, %v1802
      %v1805 = vmul.f32 %v1797, %v1803
      %v1806 = vmul.f32 %v1798, %v1803
      %v1808 = vlaneseq
      %v1809 = vshrl.u32 %v1808, 7
      %v1810 = vsub.s32 0, %v1809
      %v1811 = vrot.slane %v1776, %v1810
      %v1813 = vadd.f32 %v1805, %v1811
      %v1814 = vadd.f32 %v1806, %v1811
      %v1815 = vpack.c.bf16 %v1814, %v1813
      %v1816 = vld [vmem:[%s648] sm:$0xff]
      %v1817 = vld [vmem:[%s648 + $0x8] sm:$0xff]
      %v1818 = vld [vmem:[%s648 + $0x10] sm:$0xff]
      %v1819 = vld [vmem:[%s648 + $0x18] sm:$0xff]
      %v1820 = vld [vmem:[%s648 + $0x20] sm:$0xff]
      %v1821 = vld [vmem:[%s648 + $0x28] sm:$0xff]
      %v1822 = vld [vmem:[%s648 + $0x30] sm:$0xff]
      %v1823 = vld [vmem:[%s648 + $0x38] sm:$0xff]
      %v1824 = vld [vmem:[%s648 + $0x40] sm:$0xff]
      %v1825 = vld [vmem:[%s648 + $0x48] sm:$0xff]
      %v1826 = vld [vmem:[%s648 + $0x50] sm:$0xff]
      %v1827 = vld [vmem:[%s648 + $0x58] sm:$0xff]
      %v1828 = vld [vmem:[%s648 + $0x60] sm:$0xff]
      %v1829 = vld [vmem:[%s648 + $0x68] sm:$0xff]
      %v1830 = vld [vmem:[%s648 + $0x70] sm:$0xff]
      %v1831 = vld [vmem:[%s648 + $0x78] sm:$0xff]
      %v1832 = vld [vmem:[%s657] sm:$0xf]
      %v1833 = vld [vmem:[%s657 + $0x4] sm:$0xf]
      %v1834 = vld [vmem:[%s657 + $0x8] sm:$0xf]
      %v1835 = vld [vmem:[%s657 + $0xc] sm:$0xf]
      %v1836 = vld [vmem:[%s657 + $0x10] sm:$0xf]
      %v1837 = vld [vmem:[%s657 + $0x14] sm:$0xf]
      %v1838 = vld [vmem:[%s657 + $0x18] sm:$0xf]
      %v1839 = vld [vmem:[%s657 + $0x1c] sm:$0xf]
      %v1840 = vld [vmem:[%s657 + $0x20] sm:$0xf]
      %v1841 = vld [vmem:[%s657 + $0x24] sm:$0xf]
      %v1842 = vld [vmem:[%s657 + $0x28] sm:$0xf]
      %v1843 = vld [vmem:[%s657 + $0x2c] sm:$0xf]
      %v1844 = vld [vmem:[%s657 + $0x30] sm:$0xf]
      %v1845 = vld [vmem:[%s657 + $0x34] sm:$0xf]
      %v1846 = vld [vmem:[%s657 + $0x38] sm:$0xf]
      %v1847 = vld [vmem:[%s657 + $0x3c] sm:$0xf]
      %v1848 = vld [vmem:[%s657 + $0x40] sm:$0xf]
      %v1849 = vld [vmem:[%s657 + $0x44] sm:$0xf]
      %v1850 = vld [vmem:[%s657 + $0x48] sm:$0xf]
      %v1851 = vld [vmem:[%s657 + $0x4c] sm:$0xf]
      %v1852 = vld [vmem:[%s657 + $0x50] sm:$0xf]
      %v1853 = vld [vmem:[%s657 + $0x54] sm:$0xf]
      %v1854 = vld [vmem:[%s657 + $0x58] sm:$0xf]
      %v1855 = vld [vmem:[%s657 + $0x5c] sm:$0xf]
      %v1856 = vld [vmem:[%s657 + $0x60] sm:$0xf]
      %v1857 = vld [vmem:[%s657 + $0x64] sm:$0xf]
      %v1858 = vld [vmem:[%s657 + $0x68] sm:$0xf]
      %v1859 = vld [vmem:[%s657 + $0x6c] sm:$0xf]
      %v1860 = vld [vmem:[%s657 + $0x70] sm:$0xf]
      %v1861 = vld [vmem:[%s657 + $0x74] sm:$0xf]
      %v1862 = vld [vmem:[%s657 + $0x78] sm:$0xf]
      %v1863 = vld [vmem:[%s657 + $0x7c] sm:$0xf]
      %v1864 = vld [vmem:[%s652] sm:$0x3]
      %v1866 = vlaneseq
      %v1867 = vshrl.u32 %v1866, 7
      %v1868 = vsub.s32 0, %v1867
      %v1869 = vrot.slane %v1864, %v1868
      %v1870 = vlaneseq
      %v1871 = vshrl.u32 %v1870, 7
      %v1872 = vsub.s32 1, %v1871
      %v1873 = vrot.slane %v1864, %v1872
      %v1892 = vunpack.c.l.b16 %v1816
      %v1893 = vunpack.c.h.b16 %v1816
      %v1894 = vunpack.c.l.b16 %v1817
      %v1895 = vunpack.c.h.b16 %v1817
      %v1896 = vunpack.c.l.b16 %v1818
      %v1897 = vunpack.c.h.b16 %v1818
      %v1898 = vunpack.c.l.b16 %v1819
      %v1899 = vunpack.c.h.b16 %v1819
      %v1900 = vunpack.c.l.b16 %v1820
      %v1901 = vunpack.c.h.b16 %v1820
      %v1902 = vunpack.c.l.b16 %v1821
      %v1903 = vunpack.c.h.b16 %v1821
      %v1904 = vunpack.c.l.b16 %v1822
      %v1905 = vunpack.c.h.b16 %v1822
      %v1906 = vunpack.c.l.b16 %v1823
      %v1907 = vunpack.c.h.b16 %v1823
      %v1908 = vunpack.c.l.b16 %v1824
      %v1909 = vunpack.c.h.b16 %v1824
      %v1910 = vunpack.c.l.b16 %v1825
      %v1911 = vunpack.c.h.b16 %v1825
      %v1912 = vunpack.c.l.b16 %v1826
      %v1913 = vunpack.c.h.b16 %v1826
      %v1914 = vunpack.c.l.b16 %v1827
      %v1915 = vunpack.c.h.b16 %v1827
      %v1916 = vunpack.c.l.b16 %v1828
      %v1917 = vunpack.c.h.b16 %v1828
      %v1918 = vunpack.c.l.b16 %v1829
      %v1919 = vunpack.c.h.b16 %v1829
      %v1920 = vunpack.c.l.b16 %v1830
      %v1921 = vunpack.c.h.b16 %v1830
      %v1922 = vunpack.c.l.b16 %v1831
      %v1923 = vunpack.c.h.b16 %v1831
      %v1924 = vpack.c.b16 %v1894, %v1892
      %v1925 = vpack.c.b16 %v1895, %v1893
      %v1926 = vpack.c.b16 %v1898, %v1896
      %v1927 = vpack.c.b16 %v1899, %v1897
      %v1928 = vpack.c.b16 %v1902, %v1900
      %v1929 = vpack.c.b16 %v1903, %v1901
      %v1930 = vpack.c.b16 %v1906, %v1904
      %v1931 = vpack.c.b16 %v1907, %v1905
      %v1932 = vpack.c.b16 %v1910, %v1908
      %v1933 = vpack.c.b16 %v1911, %v1909
      %v1934 = vpack.c.b16 %v1914, %v1912
      %v1935 = vpack.c.b16 %v1915, %v1913
      %v1936 = vpack.c.b16 %v1918, %v1916
      %v1937 = vpack.c.b16 %v1919, %v1917
      %v1938 = vpack.c.b16 %v1922, %v1920
      %v1939 = vpack.c.b16 %v1923, %v1921
      %1956 = vmatprep.subr.bf16.mxu0 %v1939
      %1957 = vmatpush1.bf16.msra.mxu0 %v1938
      %1958 = vmatprep.subr.bf16.mxu0 %v1937
      %1959 = vmatpush1.bf16.msra.mxu0 %v1936
      %1960 = vmatprep.subr.bf16.mxu0 %v1935
      %1961 = vmatpush1.bf16.msra.mxu0 %v1934
      %1962 = vmatprep.subr.bf16.mxu0 %v1933
      %1963 = vmatpush1.bf16.msra.mxu0 %v1932
      %1964 = vmatprep.subr.bf16.mxu0 %v1931
      %1965 = vmatpush1.bf16.msra.mxu0 %v1930
      %1966 = vmatprep.subr.bf16.mxu0 %v1929
      %1967 = vmatpush1.bf16.msra.mxu0 %v1928
      %1968 = vmatprep.subr.bf16.mxu0 %v1927
      %1969 = vmatpush1.bf16.msra.mxu0 %v1926
      %1970 = vmatprep.subr.bf16.mxu0 %v1925
      %1971 = vmatpush1.bf16.msra.mxu0 %v1924
      %1972 = vmatprep.subr.bf16.mxu0 0
      %1973 = vmatpush2.bf16.msra.mxu0 0
      %1974 = vmatprep.subr.bf16.mxu0 0
      %1975 = vmatpush2.bf16.msra.mxu0 0
      %1976 = vmatprep.subr.bf16.mxu0 0
      %1977 = vmatpush2.bf16.msra.mxu0 0
      %1978 = vmatprep.subr.bf16.mxu0 0
      %1979 = vmatpush2.bf16.msra.mxu0 0
      %1980 = vmatprep.subr.bf16.mxu0 0
      %1981 = vmatpush2.bf16.msra.mxu0 0
      %1982 = vmatprep.subr.bf16.mxu0 0
      %1983 = vmatpush2.bf16.msra.mxu0 0
      %1984 = vmatprep.subr.bf16.mxu0 0
      %1985 = vmatpush2.bf16.msra.mxu0 0
      %1986 = vmatprep.subr.bf16.mxu0 0
      %1987 = vmatpush2.bf16.msra.mxu0 0
      %1988 = vmatprep.mubr.bf16.mxu0 0
      %1989 = vmatmul.mubr.bf16.gmra.mxu0 %v1815
      %v1990 = vpop.f32.mrf.mxu0
      %v1991 = vadd.f32 %v1869, %v1990
      %v1992 = vpop.f32.mrf.mxu0
      %v1993 = vadd.f32 %v1873, %v1992
      %v1994 = vpop.f32.mrf.mxu0
      %v1995 = vadd.f32 %v1869, %v1994
      %v1996 = vpop.f32.mrf.mxu0
      %v1997 = vadd.f32 %v1873, %v1996
      %1998 = vdwg.mxu0
      %v1999 = vmul.f32 %v1991, %v1991
      %v2000 = vmul.f32 %v1993, %v1993
      %v2001 = vmul.f32 %v1995, %v1995
      %v2002 = vmul.f32 %v1997, %v1997
      %v2003 = vmul.f32 %v1991, %v1999
      %v2004 = vmul.f32 %v1993, %v2000
      %v2005 = vmul.f32 %v1995, %v2001
      %v2006 = vmul.f32 %v1997, %v2002
      %v2007 = vmul.f32 %v2003, 0.044715
      %v2008 = vmul.f32 %v2004, 0.044715
      %v2009 = vmul.f32 %v2005, 0.044715
      %v2010 = vmul.f32 %v2006, 0.044715
      %v2011 = vadd.f32 %v1991, %v2007
      %v2012 = vadd.f32 %v1993, %v2008
      %v2013 = vadd.f32 %v1995, %v2009
      %v2014 = vadd.f32 %v1997, %v2010
      %v2015 = vmul.f32 %v2011, 0.7978846
      %v2016 = vmul.f32 %v2012, 0.7978846
      %v2017 = vmul.f32 %v2013, 0.7978846
      %v2018 = vmul.f32 %v2014, 0.7978846
      %v2019 = vtanh.pop %v2015
      %v2020 = vtanh.pop %v2016
      %v2021 = vtanh.pop %v2017
      %v2022 = vtanh.pop %v2018
      %v2023 = vadd.f32 %v2019, 1.0
      %v2024 = vadd.f32 %v2020, 1.0
      %v2025 = vadd.f32 %v2021, 1.0
      %v2026 = vadd.f32 %v2022, 1.0
      %v2027 = vmul.f32 %v2023, 0.5
      %v2028 = vmul.f32 %v2024, 0.5
      %v2029 = vmul.f32 %v2025, 0.5
      %v2030 = vmul.f32 %v2026, 0.5
      %v2031 = vmul.f32 %v1991, %v2027
      %v2032 = vmul.f32 %v1993, %v2028
      %v2033 = vmul.f32 %v1995, %v2029
      %v2034 = vmul.f32 %v1997, %v2030
      %v2035 = vpack.c.bf16 %v2033, %v2031
      %v2036 = vpack.c.bf16 %v2034, %v2032
      %v2069 = vunpack.c.l.b16 %v1832
      %v2070 = vunpack.c.l.b16 %v1833
      %v2071 = vunpack.c.l.b16 %v1834
      %v2072 = vunpack.c.l.b16 %v1835
      %v2073 = vunpack.c.l.b16 %v1836
      %v2074 = vunpack.c.l.b16 %v1837
      %v2075 = vunpack.c.l.b16 %v1838
      %v2076 = vunpack.c.l.b16 %v1839
      %v2077 = vunpack.c.l.b16 %v1840
      %v2078 = vunpack.c.l.b16 %v1841
      %v2079 = vunpack.c.l.b16 %v1842
      %v2080 = vunpack.c.l.b16 %v1843
      %v2081 = vunpack.c.l.b16 %v1844
      %v2082 = vunpack.c.l.b16 %v1845
      %v2083 = vunpack.c.l.b16 %v1846
      %v2084 = vunpack.c.l.b16 %v1847
      %v2085 = vunpack.c.l.b16 %v1848
      %v2086 = vunpack.c.l.b16 %v1849
      %v2087 = vunpack.c.l.b16 %v1850
      %v2088 = vunpack.c.l.b16 %v1851
      %v2089 = vunpack.c.l.b16 %v1852
      %v2090 = vunpack.c.l.b16 %v1853
      %v2091 = vunpack.c.l.b16 %v1854
      %v2092 = vunpack.c.l.b16 %v1855
      %v2093 = vunpack.c.l.b16 %v1856
      %v2094 = vunpack.c.l.b16 %v1857
      %v2095 = vunpack.c.l.b16 %v1858
      %v2096 = vunpack.c.l.b16 %v1859
      %v2097 = vunpack.c.l.b16 %v1860
      %v2098 = vunpack.c.l.b16 %v1861
      %v2099 = vunpack.c.l.b16 %v1862
      %v2100 = vunpack.c.l.b16 %v1863
      %v2101 = vpack.c.b16 %v2070, %v2069
      %v2102 = vpack.c.b16 %v2072, %v2071
      %v2103 = vpack.c.b16 %v2074, %v2073
      %v2104 = vpack.c.b16 %v2076, %v2075
      %v2105 = vpack.c.b16 %v2078, %v2077
      %v2106 = vpack.c.b16 %v2080, %v2079
      %v2107 = vpack.c.b16 %v2082, %v2081
      %v2108 = vpack.c.b16 %v2084, %v2083
      %v2109 = vpack.c.b16 %v2086, %v2085
      %v2110 = vpack.c.b16 %v2088, %v2087
      %v2111 = vpack.c.b16 %v2090, %v2089
      %v2112 = vpack.c.b16 %v2092, %v2091
      %v2113 = vpack.c.b16 %v2094, %v2093
      %v2114 = vpack.c.b16 %v2096, %v2095
      %v2115 = vpack.c.b16 %v2098, %v2097
      %v2116 = vpack.c.b16 %v2100, %v2099
      %2133 = vmatprep.subr.bf16.mxu0 0
      %2134 = vmatpush1.bf16.msra.mxu0 %v2108
      %2135 = vmatprep.subr.bf16.mxu0 0
      %2136 = vmatpush1.bf16.msra.mxu0 %v2107
      %2137 = vmatprep.subr.bf16.mxu0 0
      %2138 = vmatpush1.bf16.msra.mxu0 %v2106
      %2139 = vmatprep.subr.bf16.mxu0 0
      %2140 = vmatpush1.bf16.msra.mxu0 %v2105
      %2141 = vmatprep.subr.bf16.mxu0 0
      %2142 = vmatpush1.bf16.msra.mxu0 %v2104
      %2143 = vmatprep.subr.bf16.mxu0 0
      %2144 = vmatpush1.bf16.msra.mxu0 %v2103
      %2145 = vmatprep.subr.bf16.mxu0 0
      %2146 = vmatpush1.bf16.msra.mxu0 %v2102
      %2147 = vmatprep.subr.bf16.mxu0 0
      %2148 = vmatpush1.bf16.msra.mxu0 %v2101
      %2149 = vmatprep.subr.bf16.mxu0 0
      %2150 = vmatpush2.bf16.msra.mxu0 %v2116
      %2151 = vmatprep.subr.bf16.mxu0 0
      %2152 = vmatpush2.bf16.msra.mxu0 %v2115
      %2153 = vmatprep.subr.bf16.mxu0 0
      %2154 = vmatpush2.bf16.msra.mxu0 %v2114
      %2155 = vmatprep.subr.bf16.mxu0 0
      %2156 = vmatpush2.bf16.msra.mxu0 %v2113
      %2157 = vmatprep.subr.bf16.mxu0 0
      %2158 = vmatpush2.bf16.msra.mxu0 %v2112
      %2159 = vmatprep.subr.bf16.mxu0 0
      %2160 = vmatpush2.bf16.msra.mxu0 %v2111
      %2161 = vmatprep.subr.bf16.mxu0 0
      %2162 = vmatpush2.bf16.msra.mxu0 %v2110
      %2163 = vmatprep.subr.bf16.mxu0 0
      %2164 = vmatpush2.bf16.msra.mxu0 %v2109
      %2165 = vmatprep.mubr.bf16.mxu0 %v2036
      %2166 = vmatmul.mubr.bf16.gmra.mxu0 %v2035
      %v2167 = vpop.f32.mrf.mxu0
      %v2168 = vadd.f32 0.0, %v2167
      %v2169 = vpop.f32.mrf.mxu0
      %v2170 = vpop.f32.mrf.mxu0
      %v2171 = vadd.f32 0.0, %v2170
      %v2172 = vpop.f32.mrf.mxu0
      %2173 = vdwg.mxu0
      %v2174 = vadd.f32 %v1773, %v2168
      %v2175 = vadd.f32 %v1774, %v2171
      %v2176 = vld [vmem:[%s660] sm:$0x1]
      %v2178 = vlaneseq
      %v2179 = vshrl.u32 %v2178, 7
      %v2180 = vsub.s32 0, %v2179
      %v2181 = vrot.slane %v2176, %v2180
      %v2183 = vadd.f32 %v2174, %v2181
      %v2184 = vadd.f32 %v2175, %v2181
      %2185 = vst [vmem:[%s1435] sm:$0xff] %v2183
      %2186 = vst [vmem:[%s1435 + $0x8] sm:$0xff] %v2184
      %s2187 = smul.u32 2, %s28
      %p2188 = scmp.lt.s32.totalorder %s2187, 3
      %s2189 = scalar_select %p2188, %s2187, 3
      %s2190 = smul.addr %s2189, 2
      %s2191 = smul.addr %s2190, 8
      %s2192 = scalar_lea.vmem %s13, %s2191
      // Predicated region
      $region77: #{mymlp_mixer_forward.4} parent=71 // pred_check
        %p2193 = pneg %p392
      $region78: #{mymlp_mixer_forward.4} parent=71 // pred_check_branch
        %2195 = sbr.rel (%p2193) target = $region80
      $region79: #{mymlp_mixer_forward.4} parent=71 // pred_region
        %s2196 = smul.u32 2, %s28
      $region80: #{mymlp_mixer_forward.4} parent=71 // pred_fallthru
        _
    $region72: #{mymlp_mixer_forward.4} parent=5 // pred_fallthru
      _
    %p2197 = scmp.le.s32.totalorder 2, %s19
    // Predicated region
    $region81: #{mymlp_mixer_forward.4} parent=5 // pred_check
      %p2198 = pneg %p2197
    $region82: #{mymlp_mixer_forward.4} parent=5 // pred_check_branch
      %2200 = sbr.rel (%p2198) target = $region84
    $region83: #{mymlp_mixer_forward.4} parent=5 // pred_region
      %s2201 = ssub.s32 %s19, 2
      // Predicated region
      $region85: #{mymlp_mixer_forward.4} parent=83 // pred_check
        %p2202 = pneg %p398
      $region86: #{mymlp_mixer_forward.4} parent=83 // pred_check_branch
        %2204 = sbr.rel (%p2202) target = $region88
      $region87: #{mymlp_mixer_forward.4} parent=83 // pred_region
        %s2205 = smul.u32 2, %s30
        %p2206 = scmp.lt.s32.totalorder %s2205, 3
        %s2207 = scalar_select %p2206, %s2205, 3
        %s2208 = smul.addr %s2207, 2
        %s2209 = smul.addr %s2208, 8
        %s2210 = scalar_lea.vmem %s13, %s2209
      $region88: #{mymlp_mixer_forward.4} parent=83 // pred_fallthru
        _
    $region84: #{mymlp_mixer_forward.4} parent=5 // pred_fallthru
      _
  $region6: #{mymlp_mixer_forward.4} parent=0 // loop_footer
    %s23 = sadd.s32 1, %s19
  $region7: #{mymlp_mixer_forward.4} parent=0 // loop_footer_branch
    %18 = sbr.rel target = $region3
  $region8: #{mymlp_mixer_forward.4} parent=0 // loop_exit
    _

</llo_original>
